<compile_context>
chip_gen: v5e
topology: v5e:2x2
jax: 0.10.0
libtpu: 0.0.40
codegen_flags: <defaults>
</compile_context>

<pallas_src>
import jax
import jax.numpy as jnp
from jax.experimental import pallas as pl
from jax.experimental.pallas import tpu as pltpu

L = 100                        # conv input length
LANE = 128                     # TPU lane width (conv length padded to this)
CONV_OUT = 6                   # conv output channels
T = L - 1                      # conv output length (99)
FC_IN = 2 * CONV_OUT * T       # 1188 (matches nn.Linear(1188, 512))
K1 = 2 * CONV_OUT * LANE       # 1536: lane-aligned FC1 reduction dim
ALIGN = 16                     # batch rounding (bf16 sublane pack = 16)


def _round_up(x, m):
    return (x + m - 1) // m * m


def _conv_dtype():
    """bf16 conv math on v6e/v7x (native bf16 VPU/EUP); f32 on v5 and older."""
    try:
        kind = jax.devices()[0].device_kind.lower()
    except Exception:
        return jnp.float32
    for old in ("v2", "v3", "v4", "v5"):
        if old in kind:
            return jnp.float32
    return jnp.bfloat16


# ------------------------------ Fused kernel ------------------------------
def _fused_kernel(x1a_ref, x1b_ref, x2a_ref, x2b_ref, y_ref,
                  cw0_ref, cw1_ref, cb_ref,              # SMEM conv taps/bias
                  w1_ref, b1_ref, w2_ref, b2_ref, w3_ref, b3_ref,
                  w4_ref, b4_ref, w5a_ref, w5b_ref, b5_ref,
                  out_ref, conv_scr):
    cdt = x1a_ref.dtype                       # conv compute dtype (bf16 or f32)

    # Conv taps / bias as SMEM scalars -> VPU broadcast FMAs; MXU stays free.
    wt0 = [[cw0_ref[c, i].astype(cdt) for i in range(3)] for c in range(CONV_OUT)]
    wt1 = [[cw1_ref[c, i].astype(cdt) for i in range(3)] for c in range(CONV_OUT)]
    bc = [cb_ref[c].astype(cdt) for c in range(CONV_OUT)]

    # Conv1d(k=2) + Tanh on the VPU/EUP.  Each channel's (tile_n, 128) result
    # lands lane-aligned in the bf16 scratch; cols 99..127 are garbage but the
    # matching rows of w1 are zero, so they never reach h1.
    for s, (xa_ref, xb_ref) in enumerate(((x1a_ref, x1b_ref),
                                          (x2a_ref, x2b_ref))):
        xa = [xa_ref[i] for i in range(3)]    # tap-0 window  (tile_n, 128)
        xb = [xb_ref[i] for i in range(3)]    # tap-1 window  (tile_n, 128)
        for c in range(CONV_OUT):
            acc = xa[0] * wt0[c][0] + xb[0] * wt1[c][0]
            for i in (1, 2):
                acc = acc + xa[i] * wt0[c][i] + xb[i] * wt1[c][i]
            conv_c = jnp.tanh(acc + bc[c])                      # (tile_n, 128)
            col = (s * CONV_OUT + c) * LANE
            conv_scr[:, col:col + LANE] = conv_c.astype(jnp.bfloat16)

    # TODO(synk): F.dropout(p=0.2) (training=True in the reference) is applied
    # as identity (inference semantics); PyTorch's RNG mask can't be reproduced.
    # FC1 as a single MXU matmul (flatten + column_stack folded into w1).
    h1 = jnp.dot(conv_scr[...], w1_ref[...], preferred_element_type=jnp.float32)
    h1 = jnp.maximum(h1 + b1_ref[...], 0.0)                          # (n, 512)
    h2 = jnp.maximum(
        jnp.dot(h1.astype(jnp.bfloat16), w2_ref[...],
                preferred_element_type=jnp.float32) + b2_ref[...], 0.0)  # (n,256)
    h3 = jnp.maximum(
        jnp.dot(h2.astype(jnp.bfloat16), w3_ref[...],
                preferred_element_type=jnp.float32) + b3_ref[...], 0.0)  # (n,64)
    h4 = jnp.maximum(
        jnp.dot(h3, w4_ref[...],
                preferred_element_type=jnp.float32) + b4_ref[...], 0.0)  # (n,2)
    # column_stack((h4, y)) @ W5.T == h4 @ W5a + y @ W5b   (tiny tail; the
    # 3-wide output is a polish item, negligible vs FC1/tile_n fixes)
    out = jnp.dot(h4, w5a_ref[...], preferred_element_type=jnp.float32)
    out = out + jnp.dot(y_ref[...], w5b_ref[...],
                        preferred_element_type=jnp.float32)
    out_ref[...] = out + b5_ref[...]                                  # (n, 3)


def _const_spec(shape):
    """Whole-array block with a constant index map: DMA'd once, stays resident."""
    zeros = (0,) * len(shape)
    return pl.BlockSpec(shape, lambda i: zeros)


# -------------------------------- Forward --------------------------------
def beamsnet_v1_forward(params, x1, x2, y, *, max_tile_n=256):
    n = x1.shape[0]
    cdt = _conv_dtype()

    n_al = _round_up(max(n, 1), ALIGN)
    tile_n = min(max_tile_n, n_al)
    # v7x has 2 TensorCores: for larger batches keep >= 2 grid steps so the
    # "parallel" batch axis can actually shard across both cores.
    if n_al >= 2 * 128 and n_al // tile_n < 2:
        tile_n = _round_up((n_al + 1) // 2, ALIGN)
    n_pad = _round_up(n_al, tile_n)

    def prep(x):
        # (N,3,L) -> channel-major (3,N_pad,128); tap-1 window pre-shifted on
        # the host so the kernel never does an offset-by-1 lane slice.
        xt = jnp.transpose(x, (1, 0, 2))                       # (3, N, L)
        xt = jnp.pad(xt, ((0, 0), (0, n_pad - n), (0, 0))).astype(cdt)
        xa = jnp.pad(xt, ((0, 0), (0, 0), (0, LANE - L)))      # taps at t
        xb = jnp.pad(xt[:, :, 1:], ((0, 0), (0, 0), (0, LANE - T)))  # taps t+1
        return xa, xb

    x1a, x1b = prep(x1)
    x2a, x2b = prep(x2)
    yp = jnp.pad(y, ((0, n_pad - n), (0, 0)))

    smem = pl.BlockSpec(memory_space=pltpu.MemorySpace.SMEM)
    p = params

    out = pl.pallas_call(
        _fused_kernel,
        out_shape=jax.ShapeDtypeStruct((n_pad, 3), jnp.float32),
        grid=(n_pad // tile_n,),
        in_specs=[
            pl.BlockSpec((3, tile_n, LANE), lambda i: (0, i, 0)),   # x1 tap-0
            pl.BlockSpec((3, tile_n, LANE), lambda i: (0, i, 0)),   # x1 tap-1
            pl.BlockSpec((3, tile_n, LANE), lambda i: (0, i, 0)),   # x2 tap-0
            pl.BlockSpec((3, tile_n, LANE), lambda i: (0, i, 0)),   # x2 tap-1
            pl.BlockSpec((tile_n, 4), lambda i: (i, 0)),            # y
            smem, smem, smem,                                       # conv taps/bias
            _const_spec(p["w1c"].shape), _const_spec(p["b1"].shape),
            _const_spec(p["w2t"].shape), _const_spec(p["b2"].shape),
            _const_spec(p["w3t"].shape), _const_spec(p["b3"].shape),
            _const_spec(p["w4t"].shape), _const_spec(p["b4"].shape),
            _const_spec(p["w5a"].shape), _const_spec(p["w5b"].shape),
            _const_spec(p["b5"].shape),
        ],
        out_specs=pl.BlockSpec((tile_n, 3), lambda i: (i, 0)),
        scratch_shapes=[pltpu.VMEM((tile_n, K1), jnp.bfloat16)],
        compiler_params=pltpu.CompilerParams(
            dimension_semantics=("parallel",)),
    )(
        x1a, x1b, x2a, x2b, yp,
        p["cw0"], p["cw1"], p["cb"],
        p["w1c"], p["b1"], p["w2t"], p["b2"], p["w3t"], p["b3"],
        p["w4t"], p["b4"], p["w5a"], p["w5b"], p["b5"],
    )
    return out[:n]


# --------------------------- Deterministic init ---------------------------
def kaiming_uniform(key, shape, fan_in):
    bound = (6.0 / fan_in) ** 0.5
    return jax.random.uniform(key, shape, jnp.float32, -bound, bound)


def bias_uniform(key, shape, fan_in):
    bound = 1.0 / (fan_in ** 0.5)
    return jax.random.uniform(key, shape, jnp.float32, -bound, bound)


def init_params(key):
    ks = jax.random.split(key, 12)
    conv_w = kaiming_uniform(ks[0], (6, 3, 2), fan_in=3 * 2)   # Conv1d(3,6,k=2)
    conv_b = bias_uniform(ks[1], (6,), fan_in=3 * 2)
    w1 = kaiming_uniform(ks[2], (512, FC_IN), fan_in=FC_IN)    # Linear(1188,512)
    b1 = bias_uniform(ks[3], (512,), fan_in=FC_IN)
    w2 = kaiming_uniform(ks[4], (256, 512), fan_in=512)        # Linear(512,256)
    b2 = bias_uniform(ks[5], (256,), fan_in=512)
    w3 = kaiming_uniform(ks[6], (64, 256), fan_in=256)         # Linear(256,64)
    b3 = bias_uniform(ks[7], (64,), fan_in=256)
    w4 = kaiming_uniform(ks[8], (2, 64), fan_in=64)            # Linear(64,2)
    b4 = bias_uniform(ks[9], (2,), fan_in=64)
    w5 = kaiming_uniform(ks[10], (3, 6), fan_in=6)             # Linear(4+2, 3)
    b5 = bias_uniform(ks[11], (3,), fan_in=6)

    # FC1 weight with flatten + column_stack + 99->128 lane padding folded in:
    # row index = stream*768 + chan*128 + t, rows t=99..127 are zero so the
    # lane-pad garbage in the conv scratch never contributes.
    w1t = w1.T.reshape(2, CONV_OUT, T, 512)                    # (s, c, t, 512)
    w1c = jnp.pad(w1t, ((0, 0), (0, 0), (0, LANE - T), (0, 0)))
    w1c = w1c.reshape(K1, 512).astype(jnp.bfloat16)

    return {
        "cw0": conv_w[:, :, 0], "cw1": conv_w[:, :, 1], "cb": conv_b,
        "w1c": w1c, "b1": b1.reshape(1, 512),
        "w2t": w2.T.astype(jnp.bfloat16), "b2": b2.reshape(1, 256),
        "w3t": w3.T.astype(jnp.bfloat16), "b3": b3.reshape(1, 64),
        "w4t": w4.T, "b4": b4.reshape(1, 2),
        "w5a": w5[:, :2].T, "w5b": w5[:, 2:].T, "b5": b5.reshape(1, 3),
    }


if __name__ == "__main__":
    key = jax.random.PRNGKey(0)
    k_p, k1, k2, k3 = jax.random.split(key, 4)
    params = init_params(k_p)

    N = 2
    x1 = jax.random.normal(k1, (N, 3, L), jnp.float32)   # DVL beams stream 1
    x2 = jax.random.normal(k2, (N, 3, L), jnp.float32)   # DVL beams stream 2
    y = jax.random.normal(k3, (N, 4), jnp.float32)       # extra 4 features

    fwd = jax.jit(beamsnet_v1_forward)
    out = fwd(params, x1, x2, y)
    jax.block_until_ready(out)
    assert out.shape == (N, 3) and out.dtype == jnp.float32
    print("KERNEL_OK")
</pallas_src>

<mosaic_0001>
module attributes {stable_mosaic.version = 11 : i64} {
  func.func @_fused_kernel(%arg0: i32, %arg1: memref<3x16x128xbf16, #tpu.memory_space<vmem>>, %arg2: memref<3x16x128xbf16, #tpu.memory_space<vmem>>, %arg3: memref<3x16x128xbf16, #tpu.memory_space<vmem>>, %arg4: memref<3x16x128xbf16, #tpu.memory_space<vmem>>, %arg5: memref<16x4xf32, #tpu.memory_space<vmem>>, %arg6: memref<6x3xf32, #tpu.memory_space<smem>>, %arg7: memref<6x3xf32, #tpu.memory_space<smem>>, %arg8: memref<6xf32, #tpu.memory_space<smem>>, %arg9: memref<1536x512xbf16, #tpu.memory_space<vmem>>, %arg10: memref<1x512xf32, #tpu.memory_space<vmem>>, %arg11: memref<512x256xbf16, #tpu.memory_space<vmem>>, %arg12: memref<1x256xf32, #tpu.memory_space<vmem>>, %arg13: memref<256x64xbf16, #tpu.memory_space<vmem>>, %arg14: memref<1x64xf32, #tpu.memory_space<vmem>>, %arg15: memref<64x2xf32, #tpu.memory_space<vmem>>, %arg16: memref<1x2xf32, #tpu.memory_space<vmem>>, %arg17: memref<2x3xf32, #tpu.memory_space<vmem>>, %arg18: memref<4x3xf32, #tpu.memory_space<vmem>>, %arg19: memref<1x3xf32, #tpu.memory_space<vmem>>, %arg20: memref<16x3xf32, #tpu.memory_space<vmem>>, %arg21: memref<16x1536xbf16, #tpu.memory_space<vmem>>) attributes {dimension_semantics = [#tpu.dimension_semantics<parallel>], iteration_bounds = array<i64: 1>, scalar_prefetch = 0 : i64, scratch_operands = 1 : i64, tpu.core_type = #tpu.core_type<tc>, window_params = [{transform_indices = @transform_0, window_bounds = array<i64: 3, 16, 128>}, {transform_indices = @transform_1, window_bounds = array<i64: 3, 16, 128>}, {transform_indices = @transform_2, window_bounds = array<i64: 3, 16, 128>}, {transform_indices = @transform_3, window_bounds = array<i64: 3, 16, 128>}, {transform_indices = @transform_4, window_bounds = array<i64: 16, 4>}, {transform_indices = @transform_5, window_bounds = array<i64: 6, 3>}, {transform_indices = @transform_6, window_bounds = array<i64: 6, 3>}, {transform_indices = @transform_7, window_bounds = array<i64: 6>}, {pipeline_mode = #tpu.pipeline_mode<synchronous>, transform_indices = @transform_8, window_bounds = array<i64: 1536, 512>}, {pipeline_mode = #tpu.pipeline_mode<synchronous>, transform_indices = @transform_9, window_bounds = array<i64: 1, 512>}, {pipeline_mode = #tpu.pipeline_mode<synchronous>, transform_indices = @transform_10, window_bounds = array<i64: 512, 256>}, {pipeline_mode = #tpu.pipeline_mode<synchronous>, transform_indices = @transform_11, window_bounds = array<i64: 1, 256>}, {pipeline_mode = #tpu.pipeline_mode<synchronous>, transform_indices = @transform_12, window_bounds = array<i64: 256, 64>}, {pipeline_mode = #tpu.pipeline_mode<synchronous>, transform_indices = @transform_13, window_bounds = array<i64: 1, 64>}, {pipeline_mode = #tpu.pipeline_mode<synchronous>, transform_indices = @transform_14, window_bounds = array<i64: 64, 2>}, {pipeline_mode = #tpu.pipeline_mode<synchronous>, transform_indices = @transform_15, window_bounds = array<i64: 1, 2>}, {pipeline_mode = #tpu.pipeline_mode<synchronous>, transform_indices = @transform_16, window_bounds = array<i64: 2, 3>}, {pipeline_mode = #tpu.pipeline_mode<synchronous>, transform_indices = @transform_17, window_bounds = array<i64: 4, 3>}, {pipeline_mode = #tpu.pipeline_mode<synchronous>, transform_indices = @transform_18, window_bounds = array<i64: 1, 3>}, {transform_indices = @transform_19, window_bounds = array<i64: 16, 3>}]} {
    %c0 = arith.constant 0 : index
    %c0_0 = arith.constant 0 : index
    %0 = memref.load %arg6[%c0, %c0_0] : memref<6x3xf32, #tpu.memory_space<smem>>
    %1 = arith.truncf %0 : f32 to bf16
    %c0_1 = arith.constant 0 : index
    %c1 = arith.constant 1 : index
    %2 = memref.load %arg6[%c0_1, %c1] : memref<6x3xf32, #tpu.memory_space<smem>>
    %3 = arith.truncf %2 : f32 to bf16
    %c0_2 = arith.constant 0 : index
    %c2 = arith.constant 2 : index
    %4 = memref.load %arg6[%c0_2, %c2] : memref<6x3xf32, #tpu.memory_space<smem>>
    %5 = arith.truncf %4 : f32 to bf16
    %c1_3 = arith.constant 1 : index
    %c0_4 = arith.constant 0 : index
    %6 = memref.load %arg6[%c1_3, %c0_4] : memref<6x3xf32, #tpu.memory_space<smem>>
    %7 = arith.truncf %6 : f32 to bf16
    %c1_5 = arith.constant 1 : index
    %c1_6 = arith.constant 1 : index
    %8 = memref.load %arg6[%c1_5, %c1_6] : memref<6x3xf32, #tpu.memory_space<smem>>
    %9 = arith.truncf %8 : f32 to bf16
    %c1_7 = arith.constant 1 : index
    %c2_8 = arith.constant 2 : index
    %10 = memref.load %arg6[%c1_7, %c2_8] : memref<6x3xf32, #tpu.memory_space<smem>>
    %11 = arith.truncf %10 : f32 to bf16
    %c2_9 = arith.constant 2 : index
    %c0_10 = arith.constant 0 : index
    %12 = memref.load %arg6[%c2_9, %c0_10] : memref<6x3xf32, #tpu.memory_space<smem>>
    %13 = arith.truncf %12 : f32 to bf16
    %c2_11 = arith.constant 2 : index
    %c1_12 = arith.constant 1 : index
    %14 = memref.load %arg6[%c2_11, %c1_12] : memref<6x3xf32, #tpu.memory_space<smem>>
    %15 = arith.truncf %14 : f32 to bf16
    %c2_13 = arith.constant 2 : index
    %c2_14 = arith.constant 2 : index
    %16 = memref.load %arg6[%c2_13, %c2_14] : memref<6x3xf32, #tpu.memory_space<smem>>
    %17 = arith.truncf %16 : f32 to bf16
    %c3 = arith.constant 3 : index
    %c0_15 = arith.constant 0 : index
    %18 = memref.load %arg6[%c3, %c0_15] : memref<6x3xf32, #tpu.memory_space<smem>>
    %19 = arith.truncf %18 : f32 to bf16
    %c3_16 = arith.constant 3 : index
    %c1_17 = arith.constant 1 : index
    %20 = memref.load %arg6[%c3_16, %c1_17] : memref<6x3xf32, #tpu.memory_space<smem>>
    %21 = arith.truncf %20 : f32 to bf16
    %c3_18 = arith.constant 3 : index
    %c2_19 = arith.constant 2 : index
    %22 = memref.load %arg6[%c3_18, %c2_19] : memref<6x3xf32, #tpu.memory_space<smem>>
    %23 = arith.truncf %22 : f32 to bf16
    %c4 = arith.constant 4 : index
    %c0_20 = arith.constant 0 : index
    %24 = memref.load %arg6[%c4, %c0_20] : memref<6x3xf32, #tpu.memory_space<smem>>
    %25 = arith.truncf %24 : f32 to bf16
    %c4_21 = arith.constant 4 : index
    %c1_22 = arith.constant 1 : index
    %26 = memref.load %arg6[%c4_21, %c1_22] : memref<6x3xf32, #tpu.memory_space<smem>>
    %27 = arith.truncf %26 : f32 to bf16
    %c4_23 = arith.constant 4 : index
    %c2_24 = arith.constant 2 : index
    %28 = memref.load %arg6[%c4_23, %c2_24] : memref<6x3xf32, #tpu.memory_space<smem>>
    %29 = arith.truncf %28 : f32 to bf16
    %c5 = arith.constant 5 : index
    %c0_25 = arith.constant 0 : index
    %30 = memref.load %arg6[%c5, %c0_25] : memref<6x3xf32, #tpu.memory_space<smem>>
    %31 = arith.truncf %30 : f32 to bf16
    %c5_26 = arith.constant 5 : index
    %c1_27 = arith.constant 1 : index
    %32 = memref.load %arg6[%c5_26, %c1_27] : memref<6x3xf32, #tpu.memory_space<smem>>
    %33 = arith.truncf %32 : f32 to bf16
    %c5_28 = arith.constant 5 : index
    %c2_29 = arith.constant 2 : index
    %34 = memref.load %arg6[%c5_28, %c2_29] : memref<6x3xf32, #tpu.memory_space<smem>>
    %35 = arith.truncf %34 : f32 to bf16
    %c0_30 = arith.constant 0 : index
    %c0_31 = arith.constant 0 : index
    %36 = memref.load %arg7[%c0_30, %c0_31] : memref<6x3xf32, #tpu.memory_space<smem>>
    %37 = arith.truncf %36 : f32 to bf16
    %c0_32 = arith.constant 0 : index
    %c1_33 = arith.constant 1 : index
    %38 = memref.load %arg7[%c0_32, %c1_33] : memref<6x3xf32, #tpu.memory_space<smem>>
    %39 = arith.truncf %38 : f32 to bf16
    %c0_34 = arith.constant 0 : index
    %c2_35 = arith.constant 2 : index
    %40 = memref.load %arg7[%c0_34, %c2_35] : memref<6x3xf32, #tpu.memory_space<smem>>
    %41 = arith.truncf %40 : f32 to bf16
    %c1_36 = arith.constant 1 : index
    %c0_37 = arith.constant 0 : index
    %42 = memref.load %arg7[%c1_36, %c0_37] : memref<6x3xf32, #tpu.memory_space<smem>>
    %43 = arith.truncf %42 : f32 to bf16
    %c1_38 = arith.constant 1 : index
    %c1_39 = arith.constant 1 : index
    %44 = memref.load %arg7[%c1_38, %c1_39] : memref<6x3xf32, #tpu.memory_space<smem>>
    %45 = arith.truncf %44 : f32 to bf16
    %c1_40 = arith.constant 1 : index
    %c2_41 = arith.constant 2 : index
    %46 = memref.load %arg7[%c1_40, %c2_41] : memref<6x3xf32, #tpu.memory_space<smem>>
    %47 = arith.truncf %46 : f32 to bf16
    %c2_42 = arith.constant 2 : index
    %c0_43 = arith.constant 0 : index
    %48 = memref.load %arg7[%c2_42, %c0_43] : memref<6x3xf32, #tpu.memory_space<smem>>
    %49 = arith.truncf %48 : f32 to bf16
    %c2_44 = arith.constant 2 : index
    %c1_45 = arith.constant 1 : index
    %50 = memref.load %arg7[%c2_44, %c1_45] : memref<6x3xf32, #tpu.memory_space<smem>>
    %51 = arith.truncf %50 : f32 to bf16
    %c2_46 = arith.constant 2 : index
    %c2_47 = arith.constant 2 : index
    %52 = memref.load %arg7[%c2_46, %c2_47] : memref<6x3xf32, #tpu.memory_space<smem>>
    %53 = arith.truncf %52 : f32 to bf16
    %c3_48 = arith.constant 3 : index
    %c0_49 = arith.constant 0 : index
    %54 = memref.load %arg7[%c3_48, %c0_49] : memref<6x3xf32, #tpu.memory_space<smem>>
    %55 = arith.truncf %54 : f32 to bf16
    %c3_50 = arith.constant 3 : index
    %c1_51 = arith.constant 1 : index
    %56 = memref.load %arg7[%c3_50, %c1_51] : memref<6x3xf32, #tpu.memory_space<smem>>
    %57 = arith.truncf %56 : f32 to bf16
    %c3_52 = arith.constant 3 : index
    %c2_53 = arith.constant 2 : index
    %58 = memref.load %arg7[%c3_52, %c2_53] : memref<6x3xf32, #tpu.memory_space<smem>>
    %59 = arith.truncf %58 : f32 to bf16
    %c4_54 = arith.constant 4 : index
    %c0_55 = arith.constant 0 : index
    %60 = memref.load %arg7[%c4_54, %c0_55] : memref<6x3xf32, #tpu.memory_space<smem>>
    %61 = arith.truncf %60 : f32 to bf16
    %c4_56 = arith.constant 4 : index
    %c1_57 = arith.constant 1 : index
    %62 = memref.load %arg7[%c4_56, %c1_57] : memref<6x3xf32, #tpu.memory_space<smem>>
    %63 = arith.truncf %62 : f32 to bf16
    %c4_58 = arith.constant 4 : index
    %c2_59 = arith.constant 2 : index
    %64 = memref.load %arg7[%c4_58, %c2_59] : memref<6x3xf32, #tpu.memory_space<smem>>
    %65 = arith.truncf %64 : f32 to bf16
    %c5_60 = arith.constant 5 : index
    %c0_61 = arith.constant 0 : index
    %66 = memref.load %arg7[%c5_60, %c0_61] : memref<6x3xf32, #tpu.memory_space<smem>>
    %67 = arith.truncf %66 : f32 to bf16
    %c5_62 = arith.constant 5 : index
    %c1_63 = arith.constant 1 : index
    %68 = memref.load %arg7[%c5_62, %c1_63] : memref<6x3xf32, #tpu.memory_space<smem>>
    %69 = arith.truncf %68 : f32 to bf16
    %c5_64 = arith.constant 5 : index
    %c2_65 = arith.constant 2 : index
    %70 = memref.load %arg7[%c5_64, %c2_65] : memref<6x3xf32, #tpu.memory_space<smem>>
    %71 = arith.truncf %70 : f32 to bf16
    %c0_66 = arith.constant 0 : index
    %72 = memref.load %arg8[%c0_66] : memref<6xf32, #tpu.memory_space<smem>>
    %73 = arith.truncf %72 : f32 to bf16
    %c1_67 = arith.constant 1 : index
    %74 = memref.load %arg8[%c1_67] : memref<6xf32, #tpu.memory_space<smem>>
    %75 = arith.truncf %74 : f32 to bf16
    %c2_68 = arith.constant 2 : index
    %76 = memref.load %arg8[%c2_68] : memref<6xf32, #tpu.memory_space<smem>>
    %77 = arith.truncf %76 : f32 to bf16
    %c3_69 = arith.constant 3 : index
    %78 = memref.load %arg8[%c3_69] : memref<6xf32, #tpu.memory_space<smem>>
    %79 = arith.truncf %78 : f32 to bf16
    %c4_70 = arith.constant 4 : index
    %80 = memref.load %arg8[%c4_70] : memref<6xf32, #tpu.memory_space<smem>>
    %81 = arith.truncf %80 : f32 to bf16
    %c5_71 = arith.constant 5 : index
    %82 = memref.load %arg8[%c5_71] : memref<6xf32, #tpu.memory_space<smem>>
    %83 = arith.truncf %82 : f32 to bf16
    %c0_72 = arith.constant 0 : index
    %c0_73 = arith.constant 0 : index
    %c0_74 = arith.constant 0 : index
    %84 = vector.load %arg1[%c0_72, %c0_73, %c0_74] : memref<3x16x128xbf16, #tpu.memory_space<vmem>>, vector<1x16x128xbf16>
    %85 = vector.shape_cast %84 : vector<1x16x128xbf16> to vector<16x128xbf16>
    %c1_75 = arith.constant 1 : index
    %c0_76 = arith.constant 0 : index
    %c0_77 = arith.constant 0 : index
    %86 = vector.load %arg1[%c1_75, %c0_76, %c0_77] : memref<3x16x128xbf16, #tpu.memory_space<vmem>>, vector<1x16x128xbf16>
    %87 = vector.shape_cast %86 : vector<1x16x128xbf16> to vector<16x128xbf16>
    %c2_78 = arith.constant 2 : index
    %c0_79 = arith.constant 0 : index
    %c0_80 = arith.constant 0 : index
    %88 = vector.load %arg1[%c2_78, %c0_79, %c0_80] : memref<3x16x128xbf16, #tpu.memory_space<vmem>>, vector<1x16x128xbf16>
    %89 = vector.shape_cast %88 : vector<1x16x128xbf16> to vector<16x128xbf16>
    %c0_81 = arith.constant 0 : index
    %c0_82 = arith.constant 0 : index
    %c0_83 = arith.constant 0 : index
    %90 = vector.load %arg2[%c0_81, %c0_82, %c0_83] : memref<3x16x128xbf16, #tpu.memory_space<vmem>>, vector<1x16x128xbf16>
    %91 = vector.shape_cast %90 : vector<1x16x128xbf16> to vector<16x128xbf16>
    %c1_84 = arith.constant 1 : index
    %c0_85 = arith.constant 0 : index
    %c0_86 = arith.constant 0 : index
    %92 = vector.load %arg2[%c1_84, %c0_85, %c0_86] : memref<3x16x128xbf16, #tpu.memory_space<vmem>>, vector<1x16x128xbf16>
    %93 = vector.shape_cast %92 : vector<1x16x128xbf16> to vector<16x128xbf16>
    %c2_87 = arith.constant 2 : index
    %c0_88 = arith.constant 0 : index
    %c0_89 = arith.constant 0 : index
    %94 = vector.load %arg2[%c2_87, %c0_88, %c0_89] : memref<3x16x128xbf16, #tpu.memory_space<vmem>>, vector<1x16x128xbf16>
    %95 = vector.shape_cast %94 : vector<1x16x128xbf16> to vector<16x128xbf16>
    %96 = vector.broadcast %1 : bf16 to vector<16x128xbf16>
    %97 = arith.mulf %85, %96 : vector<16x128xbf16>
    %98 = vector.broadcast %37 : bf16 to vector<16x128xbf16>
    %99 = arith.mulf %91, %98 : vector<16x128xbf16>
    %100 = arith.addf %97, %99 : vector<16x128xbf16>
    %101 = vector.broadcast %3 : bf16 to vector<16x128xbf16>
    %102 = arith.mulf %87, %101 : vector<16x128xbf16>
    %103 = arith.addf %100, %102 : vector<16x128xbf16>
    %104 = vector.broadcast %39 : bf16 to vector<16x128xbf16>
    %105 = arith.mulf %93, %104 : vector<16x128xbf16>
    %106 = arith.addf %103, %105 : vector<16x128xbf16>
    %107 = vector.broadcast %5 : bf16 to vector<16x128xbf16>
    %108 = arith.mulf %89, %107 : vector<16x128xbf16>
    %109 = arith.addf %106, %108 : vector<16x128xbf16>
    %110 = vector.broadcast %41 : bf16 to vector<16x128xbf16>
    %111 = arith.mulf %95, %110 : vector<16x128xbf16>
    %112 = arith.addf %109, %111 : vector<16x128xbf16>
    %113 = vector.broadcast %73 : bf16 to vector<16x128xbf16>
    %114 = arith.addf %112, %113 : vector<16x128xbf16>
    %115 = math.tanh %114 : vector<16x128xbf16>
    %c0_90 = arith.constant 0 : index
    %c0_91 = arith.constant 0 : index
    %116 = vector.load %arg21[%c0_90, %c0_91] : memref<16x1536xbf16, #tpu.memory_space<vmem>>, vector<16x128xbf16>
    tpu.vector_store %arg21[%c0_90, %c0_91], %115 {strides = array<i32>} : memref<16x1536xbf16, #tpu.memory_space<vmem>>, vector<16x128xbf16>,
    %117 = vector.broadcast %7 : bf16 to vector<16x128xbf16>
    %118 = arith.mulf %85, %117 : vector<16x128xbf16>
    %119 = vector.broadcast %43 : bf16 to vector<16x128xbf16>
    %120 = arith.mulf %91, %119 : vector<16x128xbf16>
    %121 = arith.addf %118, %120 : vector<16x128xbf16>
    %122 = vector.broadcast %9 : bf16 to vector<16x128xbf16>
    %123 = arith.mulf %87, %122 : vector<16x128xbf16>
    %124 = arith.addf %121, %123 : vector<16x128xbf16>
    %125 = vector.broadcast %45 : bf16 to vector<16x128xbf16>
    %126 = arith.mulf %93, %125 : vector<16x128xbf16>
    %127 = arith.addf %124, %126 : vector<16x128xbf16>
    %128 = vector.broadcast %11 : bf16 to vector<16x128xbf16>
    %129 = arith.mulf %89, %128 : vector<16x128xbf16>
    %130 = arith.addf %127, %129 : vector<16x128xbf16>
    %131 = vector.broadcast %47 : bf16 to vector<16x128xbf16>
    %132 = arith.mulf %95, %131 : vector<16x128xbf16>
    %133 = arith.addf %130, %132 : vector<16x128xbf16>
    %134 = vector.broadcast %75 : bf16 to vector<16x128xbf16>
    %135 = arith.addf %133, %134 : vector<16x128xbf16>
    %136 = math.tanh %135 : vector<16x128xbf16>
    %c0_92 = arith.constant 0 : index
    %c128 = arith.constant 128 : index
    %137 = vector.load %arg21[%c0_92, %c128] : memref<16x1536xbf16, #tpu.memory_space<vmem>>, vector<16x128xbf16>
    tpu.vector_store %arg21[%c0_92, %c128], %136 {strides = array<i32>} : memref<16x1536xbf16, #tpu.memory_space<vmem>>, vector<16x128xbf16>,
    %138 = vector.broadcast %13 : bf16 to vector<16x128xbf16>
    %139 = arith.mulf %85, %138 : vector<16x128xbf16>
    %140 = vector.broadcast %49 : bf16 to vector<16x128xbf16>
    %141 = arith.mulf %91, %140 : vector<16x128xbf16>
    %142 = arith.addf %139, %141 : vector<16x128xbf16>
    %143 = vector.broadcast %15 : bf16 to vector<16x128xbf16>
    %144 = arith.mulf %87, %143 : vector<16x128xbf16>
    %145 = arith.addf %142, %144 : vector<16x128xbf16>
    %146 = vector.broadcast %51 : bf16 to vector<16x128xbf16>
    %147 = arith.mulf %93, %146 : vector<16x128xbf16>
    %148 = arith.addf %145, %147 : vector<16x128xbf16>
    %149 = vector.broadcast %17 : bf16 to vector<16x128xbf16>
    %150 = arith.mulf %89, %149 : vector<16x128xbf16>
    %151 = arith.addf %148, %150 : vector<16x128xbf16>
    %152 = vector.broadcast %53 : bf16 to vector<16x128xbf16>
    %153 = arith.mulf %95, %152 : vector<16x128xbf16>
    %154 = arith.addf %151, %153 : vector<16x128xbf16>
    %155 = vector.broadcast %77 : bf16 to vector<16x128xbf16>
    %156 = arith.addf %154, %155 : vector<16x128xbf16>
    %157 = math.tanh %156 : vector<16x128xbf16>
    %c0_93 = arith.constant 0 : index
    %c256 = arith.constant 256 : index
    %158 = vector.load %arg21[%c0_93, %c256] : memref<16x1536xbf16, #tpu.memory_space<vmem>>, vector<16x128xbf16>
    tpu.vector_store %arg21[%c0_93, %c256], %157 {strides = array<i32>} : memref<16x1536xbf16, #tpu.memory_space<vmem>>, vector<16x128xbf16>,
    %159 = vector.broadcast %19 : bf16 to vector<16x128xbf16>
    %160 = arith.mulf %85, %159 : vector<16x128xbf16>
    %161 = vector.broadcast %55 : bf16 to vector<16x128xbf16>
    %162 = arith.mulf %91, %161 : vector<16x128xbf16>
    %163 = arith.addf %160, %162 : vector<16x128xbf16>
    %164 = vector.broadcast %21 : bf16 to vector<16x128xbf16>
    %165 = arith.mulf %87, %164 : vector<16x128xbf16>
    %166 = arith.addf %163, %165 : vector<16x128xbf16>
    %167 = vector.broadcast %57 : bf16 to vector<16x128xbf16>
    %168 = arith.mulf %93, %167 : vector<16x128xbf16>
    %169 = arith.addf %166, %168 : vector<16x128xbf16>
    %170 = vector.broadcast %23 : bf16 to vector<16x128xbf16>
    %171 = arith.mulf %89, %170 : vector<16x128xbf16>
    %172 = arith.addf %169, %171 : vector<16x128xbf16>
    %173 = vector.broadcast %59 : bf16 to vector<16x128xbf16>
    %174 = arith.mulf %95, %173 : vector<16x128xbf16>
    %175 = arith.addf %172, %174 : vector<16x128xbf16>
    %176 = vector.broadcast %79 : bf16 to vector<16x128xbf16>
    %177 = arith.addf %175, %176 : vector<16x128xbf16>
    %178 = math.tanh %177 : vector<16x128xbf16>
    %c0_94 = arith.constant 0 : index
    %c384 = arith.constant 384 : index
    %179 = vector.load %arg21[%c0_94, %c384] : memref<16x1536xbf16, #tpu.memory_space<vmem>>, vector<16x128xbf16>
    tpu.vector_store %arg21[%c0_94, %c384], %178 {strides = array<i32>} : memref<16x1536xbf16, #tpu.memory_space<vmem>>, vector<16x128xbf16>,
    %180 = vector.broadcast %25 : bf16 to vector<16x128xbf16>
    %181 = arith.mulf %85, %180 : vector<16x128xbf16>
    %182 = vector.broadcast %61 : bf16 to vector<16x128xbf16>
    %183 = arith.mulf %91, %182 : vector<16x128xbf16>
    %184 = arith.addf %181, %183 : vector<16x128xbf16>
    %185 = vector.broadcast %27 : bf16 to vector<16x128xbf16>
    %186 = arith.mulf %87, %185 : vector<16x128xbf16>
    %187 = arith.addf %184, %186 : vector<16x128xbf16>
    %188 = vector.broadcast %63 : bf16 to vector<16x128xbf16>
    %189 = arith.mulf %93, %188 : vector<16x128xbf16>
    %190 = arith.addf %187, %189 : vector<16x128xbf16>
    %191 = vector.broadcast %29 : bf16 to vector<16x128xbf16>
    %192 = arith.mulf %89, %191 : vector<16x128xbf16>
    %193 = arith.addf %190, %192 : vector<16x128xbf16>
    %194 = vector.broadcast %65 : bf16 to vector<16x128xbf16>
    %195 = arith.mulf %95, %194 : vector<16x128xbf16>
    %196 = arith.addf %193, %195 : vector<16x128xbf16>
    %197 = vector.broadcast %81 : bf16 to vector<16x128xbf16>
    %198 = arith.addf %196, %197 : vector<16x128xbf16>
    %199 = math.tanh %198 : vector<16x128xbf16>
    %c0_95 = arith.constant 0 : index
    %c512 = arith.constant 512 : index
    %200 = vector.load %arg21[%c0_95, %c512] : memref<16x1536xbf16, #tpu.memory_space<vmem>>, vector<16x128xbf16>
    tpu.vector_store %arg21[%c0_95, %c512], %199 {strides = array<i32>} : memref<16x1536xbf16, #tpu.memory_space<vmem>>, vector<16x128xbf16>,
    %201 = vector.broadcast %31 : bf16 to vector<16x128xbf16>
    %202 = arith.mulf %85, %201 : vector<16x128xbf16>
    %203 = vector.broadcast %67 : bf16 to vector<16x128xbf16>
    %204 = arith.mulf %91, %203 : vector<16x128xbf16>
    %205 = arith.addf %202, %204 : vector<16x128xbf16>
    %206 = vector.broadcast %33 : bf16 to vector<16x128xbf16>
    %207 = arith.mulf %87, %206 : vector<16x128xbf16>
    %208 = arith.addf %205, %207 : vector<16x128xbf16>
    %209 = vector.broadcast %69 : bf16 to vector<16x128xbf16>
    %210 = arith.mulf %93, %209 : vector<16x128xbf16>
    %211 = arith.addf %208, %210 : vector<16x128xbf16>
    %212 = vector.broadcast %35 : bf16 to vector<16x128xbf16>
    %213 = arith.mulf %89, %212 : vector<16x128xbf16>
    %214 = arith.addf %211, %213 : vector<16x128xbf16>
    %215 = vector.broadcast %71 : bf16 to vector<16x128xbf16>
    %216 = arith.mulf %95, %215 : vector<16x128xbf16>
    %217 = arith.addf %214, %216 : vector<16x128xbf16>
    %218 = vector.broadcast %83 : bf16 to vector<16x128xbf16>
    %219 = arith.addf %217, %218 : vector<16x128xbf16>
    %220 = math.tanh %219 : vector<16x128xbf16>
    %c0_96 = arith.constant 0 : index
    %c640 = arith.constant 640 : index
    %221 = vector.load %arg21[%c0_96, %c640] : memref<16x1536xbf16, #tpu.memory_space<vmem>>, vector<16x128xbf16>
    tpu.vector_store %arg21[%c0_96, %c640], %220 {strides = array<i32>} : memref<16x1536xbf16, #tpu.memory_space<vmem>>, vector<16x128xbf16>,
    %c0_97 = arith.constant 0 : index
    %c0_98 = arith.constant 0 : index
    %c0_99 = arith.constant 0 : index
    %222 = vector.load %arg3[%c0_97, %c0_98, %c0_99] : memref<3x16x128xbf16, #tpu.memory_space<vmem>>, vector<1x16x128xbf16>
    %223 = vector.shape_cast %222 : vector<1x16x128xbf16> to vector<16x128xbf16>
    %c1_100 = arith.constant 1 : index
    %c0_101 = arith.constant 0 : index
    %c0_102 = arith.constant 0 : index
    %224 = vector.load %arg3[%c1_100, %c0_101, %c0_102] : memref<3x16x128xbf16, #tpu.memory_space<vmem>>, vector<1x16x128xbf16>
    %225 = vector.shape_cast %224 : vector<1x16x128xbf16> to vector<16x128xbf16>
    %c2_103 = arith.constant 2 : index
    %c0_104 = arith.constant 0 : index
    %c0_105 = arith.constant 0 : index
    %226 = vector.load %arg3[%c2_103, %c0_104, %c0_105] : memref<3x16x128xbf16, #tpu.memory_space<vmem>>, vector<1x16x128xbf16>
    %227 = vector.shape_cast %226 : vector<1x16x128xbf16> to vector<16x128xbf16>
    %c0_106 = arith.constant 0 : index
    %c0_107 = arith.constant 0 : index
    %c0_108 = arith.constant 0 : index
    %228 = vector.load %arg4[%c0_106, %c0_107, %c0_108] : memref<3x16x128xbf16, #tpu.memory_space<vmem>>, vector<1x16x128xbf16>
    %229 = vector.shape_cast %228 : vector<1x16x128xbf16> to vector<16x128xbf16>
    %c1_109 = arith.constant 1 : index
    %c0_110 = arith.constant 0 : index
    %c0_111 = arith.constant 0 : index
    %230 = vector.load %arg4[%c1_109, %c0_110, %c0_111] : memref<3x16x128xbf16, #tpu.memory_space<vmem>>, vector<1x16x128xbf16>
    %231 = vector.shape_cast %230 : vector<1x16x128xbf16> to vector<16x128xbf16>
    %c2_112 = arith.constant 2 : index
    %c0_113 = arith.constant 0 : index
    %c0_114 = arith.constant 0 : index
    %232 = vector.load %arg4[%c2_112, %c0_113, %c0_114] : memref<3x16x128xbf16, #tpu.memory_space<vmem>>, vector<1x16x128xbf16>
    %233 = vector.shape_cast %232 : vector<1x16x128xbf16> to vector<16x128xbf16>
    %234 = vector.broadcast %1 : bf16 to vector<16x128xbf16>
    %235 = arith.mulf %223, %234 : vector<16x128xbf16>
    %236 = vector.broadcast %37 : bf16 to vector<16x128xbf16>
    %237 = arith.mulf %229, %236 : vector<16x128xbf16>
    %238 = arith.addf %235, %237 : vector<16x128xbf16>
    %239 = vector.broadcast %3 : bf16 to vector<16x128xbf16>
    %240 = arith.mulf %225, %239 : vector<16x128xbf16>
    %241 = arith.addf %238, %240 : vector<16x128xbf16>
    %242 = vector.broadcast %39 : bf16 to vector<16x128xbf16>
    %243 = arith.mulf %231, %242 : vector<16x128xbf16>
    %244 = arith.addf %241, %243 : vector<16x128xbf16>
    %245 = vector.broadcast %5 : bf16 to vector<16x128xbf16>
    %246 = arith.mulf %227, %245 : vector<16x128xbf16>
    %247 = arith.addf %244, %246 : vector<16x128xbf16>
    %248 = vector.broadcast %41 : bf16 to vector<16x128xbf16>
    %249 = arith.mulf %233, %248 : vector<16x128xbf16>
    %250 = arith.addf %247, %249 : vector<16x128xbf16>
    %251 = vector.broadcast %73 : bf16 to vector<16x128xbf16>
    %252 = arith.addf %250, %251 : vector<16x128xbf16>
    %253 = math.tanh %252 : vector<16x128xbf16>
    %c0_115 = arith.constant 0 : index
    %c768 = arith.constant 768 : index
    %254 = vector.load %arg21[%c0_115, %c768] : memref<16x1536xbf16, #tpu.memory_space<vmem>>, vector<16x128xbf16>
    tpu.vector_store %arg21[%c0_115, %c768], %253 {strides = array<i32>} : memref<16x1536xbf16, #tpu.memory_space<vmem>>, vector<16x128xbf16>,
    %255 = vector.broadcast %7 : bf16 to vector<16x128xbf16>
    %256 = arith.mulf %223, %255 : vector<16x128xbf16>
    %257 = vector.broadcast %43 : bf16 to vector<16x128xbf16>
    %258 = arith.mulf %229, %257 : vector<16x128xbf16>
    %259 = arith.addf %256, %258 : vector<16x128xbf16>
    %260 = vector.broadcast %9 : bf16 to vector<16x128xbf16>
    %261 = arith.mulf %225, %260 : vector<16x128xbf16>
    %262 = arith.addf %259, %261 : vector<16x128xbf16>
    %263 = vector.broadcast %45 : bf16 to vector<16x128xbf16>
    %264 = arith.mulf %231, %263 : vector<16x128xbf16>
    %265 = arith.addf %262, %264 : vector<16x128xbf16>
    %266 = vector.broadcast %11 : bf16 to vector<16x128xbf16>
    %267 = arith.mulf %227, %266 : vector<16x128xbf16>
    %268 = arith.addf %265, %267 : vector<16x128xbf16>
    %269 = vector.broadcast %47 : bf16 to vector<16x128xbf16>
    %270 = arith.mulf %233, %269 : vector<16x128xbf16>
    %271 = arith.addf %268, %270 : vector<16x128xbf16>
    %272 = vector.broadcast %75 : bf16 to vector<16x128xbf16>
    %273 = arith.addf %271, %272 : vector<16x128xbf16>
    %274 = math.tanh %273 : vector<16x128xbf16>
    %c0_116 = arith.constant 0 : index
    %c896 = arith.constant 896 : index
    %275 = vector.load %arg21[%c0_116, %c896] : memref<16x1536xbf16, #tpu.memory_space<vmem>>, vector<16x128xbf16>
    tpu.vector_store %arg21[%c0_116, %c896], %274 {strides = array<i32>} : memref<16x1536xbf16, #tpu.memory_space<vmem>>, vector<16x128xbf16>,
    %276 = vector.broadcast %13 : bf16 to vector<16x128xbf16>
    %277 = arith.mulf %223, %276 : vector<16x128xbf16>
    %278 = vector.broadcast %49 : bf16 to vector<16x128xbf16>
    %279 = arith.mulf %229, %278 : vector<16x128xbf16>
    %280 = arith.addf %277, %279 : vector<16x128xbf16>
    %281 = vector.broadcast %15 : bf16 to vector<16x128xbf16>
    %282 = arith.mulf %225, %281 : vector<16x128xbf16>
    %283 = arith.addf %280, %282 : vector<16x128xbf16>
    %284 = vector.broadcast %51 : bf16 to vector<16x128xbf16>
    %285 = arith.mulf %231, %284 : vector<16x128xbf16>
    %286 = arith.addf %283, %285 : vector<16x128xbf16>
    %287 = vector.broadcast %17 : bf16 to vector<16x128xbf16>
    %288 = arith.mulf %227, %287 : vector<16x128xbf16>
    %289 = arith.addf %286, %288 : vector<16x128xbf16>
    %290 = vector.broadcast %53 : bf16 to vector<16x128xbf16>
    %291 = arith.mulf %233, %290 : vector<16x128xbf16>
    %292 = arith.addf %289, %291 : vector<16x128xbf16>
    %293 = vector.broadcast %77 : bf16 to vector<16x128xbf16>
    %294 = arith.addf %292, %293 : vector<16x128xbf16>
    %295 = math.tanh %294 : vector<16x128xbf16>
    %c0_117 = arith.constant 0 : index
    %c1024 = arith.constant 1024 : index
    %296 = vector.load %arg21[%c0_117, %c1024] : memref<16x1536xbf16, #tpu.memory_space<vmem>>, vector<16x128xbf16>
    tpu.vector_store %arg21[%c0_117, %c1024], %295 {strides = array<i32>} : memref<16x1536xbf16, #tpu.memory_space<vmem>>, vector<16x128xbf16>,
    %297 = vector.broadcast %19 : bf16 to vector<16x128xbf16>
    %298 = arith.mulf %223, %297 : vector<16x128xbf16>
    %299 = vector.broadcast %55 : bf16 to vector<16x128xbf16>
    %300 = arith.mulf %229, %299 : vector<16x128xbf16>
    %301 = arith.addf %298, %300 : vector<16x128xbf16>
    %302 = vector.broadcast %21 : bf16 to vector<16x128xbf16>
    %303 = arith.mulf %225, %302 : vector<16x128xbf16>
    %304 = arith.addf %301, %303 : vector<16x128xbf16>
    %305 = vector.broadcast %57 : bf16 to vector<16x128xbf16>
    %306 = arith.mulf %231, %305 : vector<16x128xbf16>
    %307 = arith.addf %304, %306 : vector<16x128xbf16>
    %308 = vector.broadcast %23 : bf16 to vector<16x128xbf16>
    %309 = arith.mulf %227, %308 : vector<16x128xbf16>
    %310 = arith.addf %307, %309 : vector<16x128xbf16>
    %311 = vector.broadcast %59 : bf16 to vector<16x128xbf16>
    %312 = arith.mulf %233, %311 : vector<16x128xbf16>
    %313 = arith.addf %310, %312 : vector<16x128xbf16>
    %314 = vector.broadcast %79 : bf16 to vector<16x128xbf16>
    %315 = arith.addf %313, %314 : vector<16x128xbf16>
    %316 = math.tanh %315 : vector<16x128xbf16>
    %c0_118 = arith.constant 0 : index
    %c1152 = arith.constant 1152 : index
    %317 = vector.load %arg21[%c0_118, %c1152] : memref<16x1536xbf16, #tpu.memory_space<vmem>>, vector<16x128xbf16>
    tpu.vector_store %arg21[%c0_118, %c1152], %316 {strides = array<i32>} : memref<16x1536xbf16, #tpu.memory_space<vmem>>, vector<16x128xbf16>,
    %318 = vector.broadcast %25 : bf16 to vector<16x128xbf16>
    %319 = arith.mulf %223, %318 : vector<16x128xbf16>
    %320 = vector.broadcast %61 : bf16 to vector<16x128xbf16>
    %321 = arith.mulf %229, %320 : vector<16x128xbf16>
    %322 = arith.addf %319, %321 : vector<16x128xbf16>
    %323 = vector.broadcast %27 : bf16 to vector<16x128xbf16>
    %324 = arith.mulf %225, %323 : vector<16x128xbf16>
    %325 = arith.addf %322, %324 : vector<16x128xbf16>
    %326 = vector.broadcast %63 : bf16 to vector<16x128xbf16>
    %327 = arith.mulf %231, %326 : vector<16x128xbf16>
    %328 = arith.addf %325, %327 : vector<16x128xbf16>
    %329 = vector.broadcast %29 : bf16 to vector<16x128xbf16>
    %330 = arith.mulf %227, %329 : vector<16x128xbf16>
    %331 = arith.addf %328, %330 : vector<16x128xbf16>
    %332 = vector.broadcast %65 : bf16 to vector<16x128xbf16>
    %333 = arith.mulf %233, %332 : vector<16x128xbf16>
    %334 = arith.addf %331, %333 : vector<16x128xbf16>
    %335 = vector.broadcast %81 : bf16 to vector<16x128xbf16>
    %336 = arith.addf %334, %335 : vector<16x128xbf16>
    %337 = math.tanh %336 : vector<16x128xbf16>
    %c0_119 = arith.constant 0 : index
    %c1280 = arith.constant 1280 : index
    %338 = vector.load %arg21[%c0_119, %c1280] : memref<16x1536xbf16, #tpu.memory_space<vmem>>, vector<16x128xbf16>
    tpu.vector_store %arg21[%c0_119, %c1280], %337 {strides = array<i32>} : memref<16x1536xbf16, #tpu.memory_space<vmem>>, vector<16x128xbf16>,
    %339 = vector.broadcast %31 : bf16 to vector<16x128xbf16>
    %340 = arith.mulf %223, %339 : vector<16x128xbf16>
    %341 = vector.broadcast %67 : bf16 to vector<16x128xbf16>
    %342 = arith.mulf %229, %341 : vector<16x128xbf16>
    %343 = arith.addf %340, %342 : vector<16x128xbf16>
    %344 = vector.broadcast %33 : bf16 to vector<16x128xbf16>
    %345 = arith.mulf %225, %344 : vector<16x128xbf16>
    %346 = arith.addf %343, %345 : vector<16x128xbf16>
    %347 = vector.broadcast %69 : bf16 to vector<16x128xbf16>
    %348 = arith.mulf %231, %347 : vector<16x128xbf16>
    %349 = arith.addf %346, %348 : vector<16x128xbf16>
    %350 = vector.broadcast %35 : bf16 to vector<16x128xbf16>
    %351 = arith.mulf %227, %350 : vector<16x128xbf16>
    %352 = arith.addf %349, %351 : vector<16x128xbf16>
    %353 = vector.broadcast %71 : bf16 to vector<16x128xbf16>
    %354 = arith.mulf %233, %353 : vector<16x128xbf16>
    %355 = arith.addf %352, %354 : vector<16x128xbf16>
    %356 = vector.broadcast %83 : bf16 to vector<16x128xbf16>
    %357 = arith.addf %355, %356 : vector<16x128xbf16>
    %358 = math.tanh %357 : vector<16x128xbf16>
    %c0_120 = arith.constant 0 : index
    %c1408 = arith.constant 1408 : index
    %359 = vector.load %arg21[%c0_120, %c1408] : memref<16x1536xbf16, #tpu.memory_space<vmem>>, vector<16x128xbf16>
    tpu.vector_store %arg21[%c0_120, %c1408], %358 {strides = array<i32>} : memref<16x1536xbf16, #tpu.memory_space<vmem>>, vector<16x128xbf16>,
    %c0_121 = arith.constant 0 : index
    %c0_122 = arith.constant 0 : index
    %360 = vector.load %arg21[%c0_121, %c0_122] : memref<16x1536xbf16, #tpu.memory_space<vmem>>, vector<16x1536xbf16>
    %c0_123 = arith.constant 0 : index
    %c0_124 = arith.constant 0 : index
    %361 = vector.load %arg9[%c0_123, %c0_124] : memref<1536x512xbf16, #tpu.memory_space<vmem>>, vector<1536x512xbf16>
    %cst = arith.constant dense<0.000000e+00> : vector<16x512xf32>
    %362 = tpu.matmul %360, %361, %cst {dimension_numbers = #tpu.dot_dimension_numbers<[1], [0], [0], [1], [0, 0, 1, 1], [], []>} : vector<16x1536xbf16>, vector<1536x512xbf16>, vector<16x512xf32> -> vector<16x512xf32>
    %c0_125 = arith.constant 0 : index
    %c0_126 = arith.constant 0 : index
    %363 = vector.load %arg10[%c0_125, %c0_126] : memref<1x512xf32, #tpu.memory_space<vmem>>, vector<1x512xf32>
    %364 = vector.broadcast %363 : vector<1x512xf32> to vector<16x512xf32>
    %365 = arith.addf %362, %364 : vector<16x512xf32>
    %cst_127 = arith.constant 0.000000e+00 : f32
    %366 = vector.broadcast %cst_127 : f32 to vector<16x512xf32>
    %367 = arith.maximumf %365, %366 : vector<16x512xf32>
    %368 = arith.truncf %367 : vector<16x512xf32> to vector<16x512xbf16>
    %c0_128 = arith.constant 0 : index
    %c0_129 = arith.constant 0 : index
    %369 = vector.load %arg11[%c0_128, %c0_129] : memref<512x256xbf16, #tpu.memory_space<vmem>>, vector<512x256xbf16>
    %cst_130 = arith.constant dense<0.000000e+00> : vector<16x256xf32>
    %370 = tpu.matmul %368, %369, %cst_130 {dimension_numbers = #tpu.dot_dimension_numbers<[1], [0], [0], [1], [0, 0, 1, 1], [], []>} : vector<16x512xbf16>, vector<512x256xbf16>, vector<16x256xf32> -> vector<16x256xf32>
    %c0_131 = arith.constant 0 : index
    %c0_132 = arith.constant 0 : index
    %371 = vector.load %arg12[%c0_131, %c0_132] : memref<1x256xf32, #tpu.memory_space<vmem>>, vector<1x256xf32>
    %372 = vector.broadcast %371 : vector<1x256xf32> to vector<16x256xf32>
    %373 = arith.addf %370, %372 : vector<16x256xf32>
    %cst_133 = arith.constant 0.000000e+00 : f32
    %374 = vector.broadcast %cst_133 : f32 to vector<16x256xf32>
    %375 = arith.maximumf %373, %374 : vector<16x256xf32>
    %376 = arith.truncf %375 : vector<16x256xf32> to vector<16x256xbf16>
    %c0_134 = arith.constant 0 : index
    %c0_135 = arith.constant 0 : index
    %377 = vector.load %arg13[%c0_134, %c0_135] : memref<256x64xbf16, #tpu.memory_space<vmem>>, vector<256x64xbf16>
    %cst_136 = arith.constant dense<0.000000e+00> : vector<16x64xf32>
    %378 = tpu.matmul %376, %377, %cst_136 {dimension_numbers = #tpu.dot_dimension_numbers<[1], [0], [0], [1], [0, 0, 1, 1], [], []>} : vector<16x256xbf16>, vector<256x64xbf16>, vector<16x64xf32> -> vector<16x64xf32>
    %c0_137 = arith.constant 0 : index
    %c0_138 = arith.constant 0 : index
    %379 = vector.load %arg14[%c0_137, %c0_138] : memref<1x64xf32, #tpu.memory_space<vmem>>, vector<1x64xf32>
    %380 = vector.broadcast %379 : vector<1x64xf32> to vector<16x64xf32>
    %381 = arith.addf %378, %380 : vector<16x64xf32>
    %cst_139 = arith.constant 0.000000e+00 : f32
    %382 = vector.broadcast %cst_139 : f32 to vector<16x64xf32>
    %383 = arith.maximumf %381, %382 : vector<16x64xf32>
    %c0_140 = arith.constant 0 : index
    %c0_141 = arith.constant 0 : index
    %384 = vector.load %arg15[%c0_140, %c0_141] : memref<64x2xf32, #tpu.memory_space<vmem>>, vector<64x2xf32>
    %cst_142 = arith.constant dense<0.000000e+00> : vector<16x2xf32>
    %385 = tpu.matmul %383, %384, %cst_142 {dimension_numbers = #tpu.dot_dimension_numbers<[1], [0], [0], [1], [0, 0, 1, 1], [], []>} : vector<16x64xf32>, vector<64x2xf32>, vector<16x2xf32> -> vector<16x2xf32>
    %c0_143 = arith.constant 0 : index
    %c0_144 = arith.constant 0 : index
    %386 = vector.load %arg16[%c0_143, %c0_144] : memref<1x2xf32, #tpu.memory_space<vmem>>, vector<1x2xf32>
    %387 = vector.broadcast %386 : vector<1x2xf32> to vector<16x2xf32>
    %388 = arith.addf %385, %387 : vector<16x2xf32>
    %cst_145 = arith.constant 0.000000e+00 : f32
    %389 = vector.broadcast %cst_145 : f32 to vector<16x2xf32>
    %390 = arith.maximumf %388, %389 : vector<16x2xf32>
    %c0_146 = arith.constant 0 : index
    %c0_147 = arith.constant 0 : index
    %391 = vector.load %arg17[%c0_146, %c0_147] : memref<2x3xf32, #tpu.memory_space<vmem>>, vector<2x3xf32>
    %cst_148 = arith.constant dense<0.000000e+00> : vector<16x3xf32>
    %392 = tpu.matmul %390, %391, %cst_148 {dimension_numbers = #tpu.dot_dimension_numbers<[1], [0], [0], [1], [0, 0, 1, 1], [], []>} : vector<16x2xf32>, vector<2x3xf32>, vector<16x3xf32> -> vector<16x3xf32>
    %c0_149 = arith.constant 0 : index
    %c0_150 = arith.constant 0 : index
    %393 = vector.load %arg5[%c0_149, %c0_150] : memref<16x4xf32, #tpu.memory_space<vmem>>, vector<16x4xf32>
    %c0_151 = arith.constant 0 : index
    %c0_152 = arith.constant 0 : index
    %394 = vector.load %arg18[%c0_151, %c0_152] : memref<4x3xf32, #tpu.memory_space<vmem>>, vector<4x3xf32>
    %cst_153 = arith.constant dense<0.000000e+00> : vector<16x3xf32>
    %395 = tpu.matmul %393, %394, %cst_153 {dimension_numbers = #tpu.dot_dimension_numbers<[1], [0], [0], [1], [0, 0, 1, 1], [], []>} : vector<16x4xf32>, vector<4x3xf32>, vector<16x3xf32> -> vector<16x3xf32>
    %396 = arith.addf %392, %395 : vector<16x3xf32>
    %c0_154 = arith.constant 0 : index
    %c0_155 = arith.constant 0 : index
    %397 = vector.load %arg19[%c0_154, %c0_155] : memref<1x3xf32, #tpu.memory_space<vmem>>, vector<1x3xf32>
    %398 = vector.broadcast %397 : vector<1x3xf32> to vector<16x3xf32>
    %399 = arith.addf %396, %398 : vector<16x3xf32>
    %c0_156 = arith.constant 0 : index
    %c0_157 = arith.constant 0 : index
    %400 = vector.load %arg20[%c0_156, %c0_157] : memref<16x3xf32, #tpu.memory_space<vmem>>, vector<16x3xf32>
    tpu.vector_store %arg20[%c0_156, %c0_157], %399 {strides = array<i32>} : memref<16x3xf32, #tpu.memory_space<vmem>>, vector<16x3xf32>,
    return
  }
  func.func @transform_0(%arg0: i32) -> (i32, i32, i32) {
    %c0_i32 = arith.constant 0 : i32
    %c0_i32_0 = arith.constant 0 : i32
    %c0_i32_1 = arith.constant 0 : i32
    return %c0_i32, %arg0, %c0_i32_0 : i32, i32, i32
  }
  func.func @transform_1(%arg0: i32) -> (i32, i32, i32) {
    %c0_i32 = arith.constant 0 : i32
    %c0_i32_0 = arith.constant 0 : i32
    %c0_i32_1 = arith.constant 0 : i32
    return %c0_i32, %arg0, %c0_i32_0 : i32, i32, i32
  }
  func.func @transform_2(%arg0: i32) -> (i32, i32, i32) {
    %c0_i32 = arith.constant 0 : i32
    %c0_i32_0 = arith.constant 0 : i32
    %c0_i32_1 = arith.constant 0 : i32
    return %c0_i32, %arg0, %c0_i32_0 : i32, i32, i32
  }
  func.func @transform_3(%arg0: i32) -> (i32, i32, i32) {
    %c0_i32 = arith.constant 0 : i32
    %c0_i32_0 = arith.constant 0 : i32
    %c0_i32_1 = arith.constant 0 : i32
    return %c0_i32, %arg0, %c0_i32_0 : i32, i32, i32
  }
  func.func @transform_4(%arg0: i32) -> (i32, i32) {
    %c0_i32 = arith.constant 0 : i32
    %c0_i32_0 = arith.constant 0 : i32
    return %arg0, %c0_i32 : i32, i32
  }
  func.func @transform_5(%arg0: i32) -> (i32, i32) {
    %c0_i32 = arith.constant 0 : i32
    %c0_i32_0 = arith.constant 0 : i32
    %c0_i32_1 = arith.constant 0 : i32
    return %c0_i32, %c0_i32_0 : i32, i32
  }
  func.func @transform_6(%arg0: i32) -> (i32, i32) {
    %c0_i32 = arith.constant 0 : i32
    %c0_i32_0 = arith.constant 0 : i32
    %c0_i32_1 = arith.constant 0 : i32
    return %c0_i32, %c0_i32_0 : i32, i32
  }
  func.func @transform_7(%arg0: i32) -> i32 {
    %c0_i32 = arith.constant 0 : i32
    %c0_i32_0 = arith.constant 0 : i32
    return %c0_i32 : i32
  }
  func.func @transform_8(%arg0: i32) -> (i32, i32) {
    %c0_i32 = arith.constant 0 : i32
    %c0_i32_0 = arith.constant 0 : i32
    %c0_i32_1 = arith.constant 0 : i32
    return %c0_i32, %c0_i32_0 : i32, i32
  }
  func.func @transform_9(%arg0: i32) -> (i32, i32) {
    %c0_i32 = arith.constant 0 : i32
    %c0_i32_0 = arith.constant 0 : i32
    %c0_i32_1 = arith.constant 0 : i32
    return %c0_i32, %c0_i32_0 : i32, i32
  }
  func.func @transform_10(%arg0: i32) -> (i32, i32) {
    %c0_i32 = arith.constant 0 : i32
    %c0_i32_0 = arith.constant 0 : i32
    %c0_i32_1 = arith.constant 0 : i32
    return %c0_i32, %c0_i32_0 : i32, i32
  }
  func.func @transform_11(%arg0: i32) -> (i32, i32) {
    %c0_i32 = arith.constant 0 : i32
    %c0_i32_0 = arith.constant 0 : i32
    %c0_i32_1 = arith.constant 0 : i32
    return %c0_i32, %c0_i32_0 : i32, i32
  }
  func.func @transform_12(%arg0: i32) -> (i32, i32) {
    %c0_i32 = arith.constant 0 : i32
    %c0_i32_0 = arith.constant 0 : i32
    %c0_i32_1 = arith.constant 0 : i32
    return %c0_i32, %c0_i32_0 : i32, i32
  }
  func.func @transform_13(%arg0: i32) -> (i32, i32) {
    %c0_i32 = arith.constant 0 : i32
    %c0_i32_0 = arith.constant 0 : i32
    %c0_i32_1 = arith.constant 0 : i32
    return %c0_i32, %c0_i32_0 : i32, i32
  }
  func.func @transform_14(%arg0: i32) -> (i32, i32) {
    %c0_i32 = arith.constant 0 : i32
    %c0_i32_0 = arith.constant 0 : i32
    %c0_i32_1 = arith.constant 0 : i32
    return %c0_i32, %c0_i32_0 : i32, i32
  }
  func.func @transform_15(%arg0: i32) -> (i32, i32) {
    %c0_i32 = arith.constant 0 : i32
    %c0_i32_0 = arith.constant 0 : i32
    %c0_i32_1 = arith.constant 0 : i32
    return %c0_i32, %c0_i32_0 : i32, i32
  }
  func.func @transform_16(%arg0: i32) -> (i32, i32) {
    %c0_i32 = arith.constant 0 : i32
    %c0_i32_0 = arith.constant 0 : i32
    %c0_i32_1 = arith.constant 0 : i32
    return %c0_i32, %c0_i32_0 : i32, i32
  }
  func.func @transform_17(%arg0: i32) -> (i32, i32) {
    %c0_i32 = arith.constant 0 : i32
    %c0_i32_0 = arith.constant 0 : i32
    %c0_i32_1 = arith.constant 0 : i32
    return %c0_i32, %c0_i32_0 : i32, i32
  }
  func.func @transform_18(%arg0: i32) -> (i32, i32) {
    %c0_i32 = arith.constant 0 : i32
    %c0_i32_0 = arith.constant 0 : i32
    %c0_i32_1 = arith.constant 0 : i32
    return %c0_i32, %c0_i32_0 : i32, i32
  }
  func.func @transform_19(%arg0: i32) -> (i32, i32) {
    %c0_i32 = arith.constant 0 : i32
    %c0_i32_0 = arith.constant 0 : i32
    return %arg0, %c0_i32 : i32, i32
  }
}

</mosaic_0001>

<llo_original>
// kernel: beamsnet_v1_forward.1
$region0: #{beamsnet_v1_forward.1}
  #allocation0 [shape = 'u32[]', space=smem, size = 0x4, offset = 0x4, fixed_abs, tag = 'smem constant byte address 0x4 - core index']
  #allocation1 [shape = 'u32[72,128]{1,0:T(1,128)}', space=vmem, size = 0x9000, scoped, tag = 'internal scratch']
  #allocation2 [shape = 'bf16[16,1536]{1,0:T(8,128)(2,1)}', space=vmem, size = 0xc000, scoped, tag = 'scratch operand']
  %s0 = inlined_call_operand.vmem [shape: bf16[3,16,128], index: 0, kind: input, shape index: {}]
  %s1 = inlined_call_operand.vmem [shape: bf16[3,16,128], index: 1, kind: input, shape index: {}]
  %s2 = inlined_call_operand.vmem [shape: bf16[3,16,128], index: 2, kind: input, shape index: {}]
  %s3 = inlined_call_operand.vmem [shape: bf16[3,16,128], index: 3, kind: input, shape index: {}]
  %s4 = inlined_call_operand.vmem [shape: f32[16,4], index: 4, kind: input, shape index: {}]
  %s5 = inlined_call_operand.vmem [shape: f32[6,3], index: 5, kind: input, shape index: {}]
  %s6 = inlined_call_operand.vmem [shape: f32[6,3], index: 6, kind: input, shape index: {}]
  %s7 = inlined_call_operand.hbm [shape: f32[6], index: 7, kind: input, shape index: {}]
  %s8 = inlined_call_operand.hbm [shape: bf16[1536,512], index: 8, kind: input, shape index: {}]
  %s9 = inlined_call_operand.hbm [shape: f32[1,512], index: 9, kind: input, shape index: {}]
  %s10 = inlined_call_operand.hbm [shape: bf16[512,256], index: 10, kind: input, shape index: {}]
  %s11 = inlined_call_operand.hbm [shape: f32[1,256], index: 11, kind: input, shape index: {}]
  %s12 = inlined_call_operand.vmem [shape: bf16[256,64], index: 12, kind: input, shape index: {}]
  %s13 = inlined_call_operand.hbm [shape: f32[1,64], index: 13, kind: input, shape index: {}]
  %s14 = inlined_call_operand.vmem [shape: f32[64,2], index: 14, kind: input, shape index: {}]
  %s15 = inlined_call_operand.hbm [shape: f32[1,2], index: 15, kind: input, shape index: {}]
  %s16 = inlined_call_operand.hbm [shape: f32[2,3], index: 16, kind: input, shape index: {}]
  %s17 = inlined_call_operand.hbm [shape: f32[4,3], index: 17, kind: input, shape index: {}]
  %s18 = inlined_call_operand.hbm [shape: f32[1,3], index: 18, kind: input, shape index: {}]
  %s19 = inlined_call_operand.vmem [shape: f32[16,3], index: 19, kind: output, shape index: {}]
  %s20 = sld [smem:[#allocation0]]
  $region134: #{beamsnet_v1_forward.1} parent=0
    _
  %s22 = ssub.s32 1, %s20
  %s23 = scalar_select 0, %s22, %s20
  $region1: #{beamsnet_v1_forward.1} parent=0
    #allocation3 [shape = 'u8[4096]{0}', space=smem, size = 0x1000, scoped, tag = 'input window, operand 5, single buffered']
    #allocation4 [shape = 's32[1]{0}', space=sflag, size = 0x4, scoped, tag = 'scoped memory for beamsnet_v1_forward.1']
    #allocation5 [shape = 's32[1]{0}', space=sflag, size = 0x4, scoped, tag = 'scoped memory for beamsnet_v1_forward.1']
    #allocation6 [shape = 's32[1]{0}', space=sflag, size = 0x4, scoped, tag = 'scoped memory for beamsnet_v1_forward.1']
    #allocation7 [shape = 'u8[4096]{0}', space=smem, size = 0x1000, scoped, tag = 'input window, operand 6, single buffered']
    #allocation8 [shape = 's32[1]{0}', space=sflag, size = 0x4, scoped, tag = 'scoped memory for beamsnet_v1_forward.1']
    #allocation9 [shape = 'u8[512]{0}', space=smem, size = 0x200, scoped, tag = 'input window, operand 7, single buffered']
    #allocation10 [shape = 'u8[1572864]{0}', space=vmem, size = 0x180000, scoped, tag = 'input window, operand 8, single buffered']
    #allocation11 [shape = 'u8[2048]{0}', space=vmem, size = 0x800, scoped, tag = 'input window, operand 9, single buffered']
    #allocation12 [shape = 's32[1]{0}', space=sflag, size = 0x4, scoped, tag = 'scoped memory for beamsnet_v1_forward.1']
    #allocation13 [shape = 'u8[262144]{0}', space=vmem, size = 0x40000, scoped, tag = 'input window, operand 10, single buffered']
    #allocation14 [shape = 'u8[1024]{0}', space=vmem, size = 0x400, scoped, tag = 'input window, operand 11, single buffered']
    #allocation15 [shape = 's32[1]{0}', space=sflag, size = 0x4, scoped, tag = 'scoped memory for beamsnet_v1_forward.1']
    #allocation16 [shape = 'u8[512]{0}', space=vmem, size = 0x400, scoped, tag = 'input window, operand 13, single buffered']
    #allocation17 [shape = 'u8[512]{0}', space=vmem, size = 0x400, scoped, tag = 'input window, operand 15, single buffered']
    #allocation18 [shape = 's32[1]{0}', space=sflag, size = 0x4, scoped, tag = 'scoped memory for beamsnet_v1_forward.1']
    #allocation19 [shape = 'u8[1024]{0}', space=vmem, size = 0x400, scoped, tag = 'input window, operand 16, single buffered']
    #allocation20 [shape = 'u8[2048]{0}', space=vmem, size = 0x800, scoped, tag = 'input window, operand 17, single buffered']
    #allocation21 [shape = 's32[1]{0}', space=sflag, size = 0x4, scoped, tag = 'scoped memory for beamsnet_v1_forward.1']
    #allocation22 [shape = 'u8[512]{0}', space=vmem, size = 0x400, scoped, tag = 'input window, operand 18, single buffered']
    %24 = vsyncpa [#allocation6], 0
    %25 = vsyncpa [#allocation8], 0
    %26 = vsyncpa [#allocation5], 0
    %27 = vsyncpa [#allocation4], 0
    %28 = vsyncpa [#allocation12], 0
    %29 = vsyncpa [#allocation15], 0
    %30 = vsyncpa [#allocation18], 0
    %31 = vsyncpa [#allocation21], 0
    // Predicated region
    $region2: #{beamsnet_v1_forward.1} parent=1 // pred_check
      _
    $region3: #{beamsnet_v1_forward.1} parent=1 // pred_check_branch
      %33 = sbr.rel (0) target = $region5
    $region4: #{beamsnet_v1_forward.1} parent=1 // pred_region
      _
    $region5: #{beamsnet_v1_forward.1} parent=1 // pred_fallthru
      _
    // Predicated region
    $region6: #{beamsnet_v1_forward.1} parent=1 // pred_check
      _
    $region7: #{beamsnet_v1_forward.1} parent=1 // pred_check_branch
      %35 = sbr.rel (0) target = $region9
    $region8: #{beamsnet_v1_forward.1} parent=1 // pred_region
      _
    $region9: #{beamsnet_v1_forward.1} parent=1 // pred_fallthru
      _
    // Predicated region
    $region10: #{beamsnet_v1_forward.1} parent=1 // pred_check
      _
    $region11: #{beamsnet_v1_forward.1} parent=1 // pred_check_branch
      %37 = sbr.rel (0) target = $region13
    $region12: #{beamsnet_v1_forward.1} parent=1 // pred_region
      _
    $region13: #{beamsnet_v1_forward.1} parent=1 // pred_fallthru
      _
    // Predicated region
    $region14: #{beamsnet_v1_forward.1} parent=1 // pred_check
      _
    $region15: #{beamsnet_v1_forward.1} parent=1 // pred_check_branch
      %39 = sbr.rel (0) target = $region17
    $region16: #{beamsnet_v1_forward.1} parent=1 // pred_region
      _
    $region17: #{beamsnet_v1_forward.1} parent=1 // pred_fallthru
      _
    // Predicated region
    $region18: #{beamsnet_v1_forward.1} parent=1 // pred_check
      _
    $region19: #{beamsnet_v1_forward.1} parent=1 // pred_check_branch
      %41 = sbr.rel (0) target = $region21
    $region20: #{beamsnet_v1_forward.1} parent=1 // pred_region
      _
    $region21: #{beamsnet_v1_forward.1} parent=1 // pred_fallthru
      _
    // Predicated region
    $region22: #{beamsnet_v1_forward.1} parent=1 // pred_check
      _
    $region23: #{beamsnet_v1_forward.1} parent=1 // pred_check_branch
      %43 = sbr.rel (0) target = $region25
    $region24: #{beamsnet_v1_forward.1} parent=1 // pred_region
      %45 = vsyncadd [#allocation6], 0
      %s47 = sshll.u32 %s5, 4
      %s48 = int_to_ptr.vmem [resolvable:$true] %s47
      %50 = dma.vmem_to_smem %s48, 128, [#allocation3], [#allocation6]
    $region25: #{beamsnet_v1_forward.1} parent=1 // pred_fallthru
      _
    // Predicated region
    $region26: #{beamsnet_v1_forward.1} parent=1 // pred_check
      _
    $region27: #{beamsnet_v1_forward.1} parent=1 // pred_check_branch
      %52 = sbr.rel (0) target = $region29
    $region28: #{beamsnet_v1_forward.1} parent=1 // pred_region
      %54 = vsyncadd [#allocation8], 0
      %s56 = sshll.u32 %s6, 4
      %s57 = int_to_ptr.vmem [resolvable:$true] %s56
      %59 = dma.vmem_to_smem %s57, 128, [#allocation7], [#allocation8]
    $region29: #{beamsnet_v1_forward.1} parent=1 // pred_fallthru
      _
    // Predicated region
    $region30: #{beamsnet_v1_forward.1} parent=1 // pred_check
      _
    $region31: #{beamsnet_v1_forward.1} parent=1 // pred_check_branch
      %61 = sbr.rel (0) target = $region33
    $region32: #{beamsnet_v1_forward.1} parent=1 // pred_region
      %63 = vsyncadd [#allocation5], 0
      %s65 = sshll.u32 %s7, 4
      %s66 = int_to_ptr.hbm [resolvable:$true] %s65
      %68 = dma.hbm_to_smem %s66, 16, [#allocation9], [#allocation5]
    $region33: #{beamsnet_v1_forward.1} parent=1 // pred_fallthru
      _
    // Predicated region
    $region34: #{beamsnet_v1_forward.1} parent=1 // pred_check
      _
    $region35: #{beamsnet_v1_forward.1} parent=1 // pred_check_branch
      %70 = sbr.rel (0) target = $region37
    $region36: #{beamsnet_v1_forward.1} parent=1 // pred_region
      %72 = vsyncadd [#allocation4], 0
      %s73 = sshll.u32 %s8, 4
      %s74 = int_to_ptr.hbm [resolvable:$true] %s73
      %s75 = sshll.u32 [#allocation10], 4
      %s76 = int_to_ptr.vmem [resolvable:$true] %s75
      %81 = dma.hbm_to_vmem [thread:$0]  %s74, 49152, %s76, [#allocation4], 256, 256, 16
    $region37: #{beamsnet_v1_forward.1} parent=1 // pred_fallthru
      _
    // Predicated region
    $region38: #{beamsnet_v1_forward.1} parent=1 // pred_check
      _
    $region39: #{beamsnet_v1_forward.1} parent=1 // pred_check_branch
      %83 = sbr.rel (0) target = $region41
    $region40: #{beamsnet_v1_forward.1} parent=1 // pred_region
      %85 = vsyncadd [#allocation12], 0
      %s87 = sshll.u32 %s9, 4
      %s88 = int_to_ptr.hbm [resolvable:$true] %s87
      %s89 = sshll.u32 [#allocation11], 4
      %s90 = int_to_ptr.vmem [resolvable:$true] %s89
      %92 = dma.hbm_to_vmem [thread:$0]  %s88, 64, %s90, [#allocation12]
    $region41: #{beamsnet_v1_forward.1} parent=1 // pred_fallthru
      _
    // Predicated region
    $region42: #{beamsnet_v1_forward.1} parent=1 // pred_check
      _
    $region43: #{beamsnet_v1_forward.1} parent=1 // pred_check_branch
      %94 = sbr.rel (0) target = $region45
    $region44: #{beamsnet_v1_forward.1} parent=1 // pred_region
      %96 = vsyncadd [#allocation12], 0
      %s97 = sshll.u32 %s10, 4
      %s98 = int_to_ptr.hbm [resolvable:$true] %s97
      %s99 = sshll.u32 [#allocation13], 4
      %s100 = int_to_ptr.vmem [resolvable:$true] %s99
      %105 = dma.hbm_to_vmem [thread:$0]  %s98, 8192, %s100, [#allocation12], 128, 128, 8
    $region45: #{beamsnet_v1_forward.1} parent=1 // pred_fallthru
      _
    // Predicated region
    $region46: #{beamsnet_v1_forward.1} parent=1 // pred_check
      _
    $region47: #{beamsnet_v1_forward.1} parent=1 // pred_check_branch
      %107 = sbr.rel (0) target = $region49
    $region48: #{beamsnet_v1_forward.1} parent=1 // pred_region
      %109 = vsyncadd [#allocation15], 0
      %s111 = sshll.u32 %s11, 4
      %s112 = int_to_ptr.hbm [resolvable:$true] %s111
      %s113 = sshll.u32 [#allocation14], 4
      %s114 = int_to_ptr.vmem [resolvable:$true] %s113
      %116 = dma.hbm_to_vmem [thread:$0]  %s112, 32, %s114, [#allocation15]
    $region49: #{beamsnet_v1_forward.1} parent=1 // pred_fallthru
      _
    // Predicated region
    $region50: #{beamsnet_v1_forward.1} parent=1 // pred_check
      _
    $region51: #{beamsnet_v1_forward.1} parent=1 // pred_check_branch
      %118 = sbr.rel (0) target = $region53
    $region52: #{beamsnet_v1_forward.1} parent=1 // pred_region
      _
    $region53: #{beamsnet_v1_forward.1} parent=1 // pred_fallthru
      _
    // Predicated region
    $region54: #{beamsnet_v1_forward.1} parent=1 // pred_check
      _
    $region55: #{beamsnet_v1_forward.1} parent=1 // pred_check_branch
      %120 = sbr.rel (0) target = $region57
    $region56: #{beamsnet_v1_forward.1} parent=1 // pred_region
      %122 = vsyncadd [#allocation15], 0
      %s124 = sshll.u32 %s13, 4
      %s125 = int_to_ptr.hbm [resolvable:$true] %s124
      %s126 = sshll.u32 [#allocation16], 4
      %s127 = int_to_ptr.vmem [resolvable:$true] %s126
      %129 = dma.hbm_to_vmem [thread:$0]  %s125, 16, %s127, [#allocation15]
    $region57: #{beamsnet_v1_forward.1} parent=1 // pred_fallthru
      _
    // Predicated region
    $region58: #{beamsnet_v1_forward.1} parent=1 // pred_check
      _
    $region59: #{beamsnet_v1_forward.1} parent=1 // pred_check_branch
      %131 = sbr.rel (0) target = $region61
    $region60: #{beamsnet_v1_forward.1} parent=1 // pred_region
      _
    $region61: #{beamsnet_v1_forward.1} parent=1 // pred_fallthru
      _
    // Predicated region
    $region62: #{beamsnet_v1_forward.1} parent=1 // pred_check
      _
    $region63: #{beamsnet_v1_forward.1} parent=1 // pred_check_branch
      %133 = sbr.rel (0) target = $region65
    $region64: #{beamsnet_v1_forward.1} parent=1 // pred_region
      %135 = vsyncadd [#allocation18], 0
      %s137 = sshll.u32 %s15, 4
      %s138 = int_to_ptr.hbm [resolvable:$true] %s137
      %s139 = sshll.u32 [#allocation17], 4
      %s140 = int_to_ptr.vmem [resolvable:$true] %s139
      %142 = dma.hbm_to_vmem [thread:$0]  %s138, 16, %s140, [#allocation18]
    $region65: #{beamsnet_v1_forward.1} parent=1 // pred_fallthru
      _
    // Predicated region
    $region66: #{beamsnet_v1_forward.1} parent=1 // pred_check
      _
    $region67: #{beamsnet_v1_forward.1} parent=1 // pred_check_branch
      %144 = sbr.rel (0) target = $region69
    $region68: #{beamsnet_v1_forward.1} parent=1 // pred_region
      %146 = vsyncadd [#allocation18], 0
      %s148 = sshll.u32 %s16, 4
      %s149 = int_to_ptr.hbm [resolvable:$true] %s148
      %s150 = sshll.u32 [#allocation19], 4
      %s151 = int_to_ptr.vmem [resolvable:$true] %s150
      %153 = dma.hbm_to_vmem [thread:$0]  %s149, 32, %s151, [#allocation18]
    $region69: #{beamsnet_v1_forward.1} parent=1 // pred_fallthru
      _
    // Predicated region
    $region70: #{beamsnet_v1_forward.1} parent=1 // pred_check
      _
    $region71: #{beamsnet_v1_forward.1} parent=1 // pred_check_branch
      %155 = sbr.rel (0) target = $region73
    $region72: #{beamsnet_v1_forward.1} parent=1 // pred_region
      %157 = vsyncadd [#allocation21], 0
      %s159 = sshll.u32 %s17, 4
      %s160 = int_to_ptr.hbm [resolvable:$true] %s159
      %s161 = sshll.u32 [#allocation20], 4
      %s162 = int_to_ptr.vmem [resolvable:$true] %s161
      %164 = dma.hbm_to_vmem [thread:$0]  %s160, 64, %s162, [#allocation21]
    $region73: #{beamsnet_v1_forward.1} parent=1 // pred_fallthru
      _
    // Predicated region
    $region74: #{beamsnet_v1_forward.1} parent=1 // pred_check
      _
    $region75: #{beamsnet_v1_forward.1} parent=1 // pred_check_branch
      %166 = sbr.rel (0) target = $region77
    $region76: #{beamsnet_v1_forward.1} parent=1 // pred_region
      %168 = vsyncadd [#allocation21], 0
      %s170 = sshll.u32 %s18, 4
      %s171 = int_to_ptr.hbm [resolvable:$true] %s170
      %s172 = sshll.u32 [#allocation22], 4
      %s173 = int_to_ptr.vmem [resolvable:$true] %s172
      %175 = dma.hbm_to_vmem [thread:$0]  %s171, 16, %s173, [#allocation21]
    $region77: #{beamsnet_v1_forward.1} parent=1 // pred_fallthru
      _
    // Predicated region
    $region78: #{beamsnet_v1_forward.1} parent=1 // pred_check
      _
    $region79: #{beamsnet_v1_forward.1} parent=1 // pred_check_branch
      %177 = sbr.rel (0) target = $region81
    $region80: #{beamsnet_v1_forward.1} parent=1 // pred_region
      %179 = dma.done [#allocation6], 128
    $region81: #{beamsnet_v1_forward.1} parent=1 // pred_fallthru
      _
    // Predicated region
    $region82: #{beamsnet_v1_forward.1} parent=1 // pred_check
      _
    $region83: #{beamsnet_v1_forward.1} parent=1 // pred_check_branch
      %181 = sbr.rel (0) target = $region85
    $region84: #{beamsnet_v1_forward.1} parent=1 // pred_region
      %183 = dma.done [#allocation8], 128
    $region85: #{beamsnet_v1_forward.1} parent=1 // pred_fallthru
      _
    // Predicated region
    $region86: #{beamsnet_v1_forward.1} parent=1 // pred_check
      _
    $region87: #{beamsnet_v1_forward.1} parent=1 // pred_check_branch
      %185 = sbr.rel (0) target = $region89
    $region88: #{beamsnet_v1_forward.1} parent=1 // pred_region
      %187 = dma.done [#allocation5], 16
    $region89: #{beamsnet_v1_forward.1} parent=1 // pred_fallthru
      _
    // Predicated region
    $region90: #{beamsnet_v1_forward.1} parent=1 // pred_check
      _
    $region91: #{beamsnet_v1_forward.1} parent=1 // pred_check_branch
      %189 = sbr.rel (0) target = $region93
    $region92: #{beamsnet_v1_forward.1} parent=1 // pred_region
      %191 = dma.done [#allocation4], 49152
    $region93: #{beamsnet_v1_forward.1} parent=1 // pred_fallthru
      _
    // Predicated region
    $region94: #{beamsnet_v1_forward.1} parent=1 // pred_check
      _
    $region95: #{beamsnet_v1_forward.1} parent=1 // pred_check_branch
      %193 = sbr.rel (0) target = $region97
    $region96: #{beamsnet_v1_forward.1} parent=1 // pred_region
      %195 = dma.done [#allocation12], 64
    $region97: #{beamsnet_v1_forward.1} parent=1 // pred_fallthru
      _
    // Predicated region
    $region98: #{beamsnet_v1_forward.1} parent=1 // pred_check
      _
    $region99: #{beamsnet_v1_forward.1} parent=1 // pred_check_branch
      %197 = sbr.rel (0) target = $region101
    $region100: #{beamsnet_v1_forward.1} parent=1 // pred_region
      %199 = dma.done [#allocation12], 8192
    $region101: #{beamsnet_v1_forward.1} parent=1 // pred_fallthru
      _
    // Predicated region
    $region102: #{beamsnet_v1_forward.1} parent=1 // pred_check
      _
    $region103: #{beamsnet_v1_forward.1} parent=1 // pred_check_branch
      %201 = sbr.rel (0) target = $region105
    $region104: #{beamsnet_v1_forward.1} parent=1 // pred_region
      %203 = dma.done [#allocation15], 32
    $region105: #{beamsnet_v1_forward.1} parent=1 // pred_fallthru
      _
    // Predicated region
    $region106: #{beamsnet_v1_forward.1} parent=1 // pred_check
      _
    $region107: #{beamsnet_v1_forward.1} parent=1 // pred_check_branch
      %205 = sbr.rel (0) target = $region109
    $region108: #{beamsnet_v1_forward.1} parent=1 // pred_region
      %207 = dma.done [#allocation15], 16
    $region109: #{beamsnet_v1_forward.1} parent=1 // pred_fallthru
      _
    // Predicated region
    $region110: #{beamsnet_v1_forward.1} parent=1 // pred_check
      _
    $region111: #{beamsnet_v1_forward.1} parent=1 // pred_check_branch
      %209 = sbr.rel (0) target = $region113
    $region112: #{beamsnet_v1_forward.1} parent=1 // pred_region
      %211 = dma.done [#allocation18], 16
    $region113: #{beamsnet_v1_forward.1} parent=1 // pred_fallthru
      _
    // Predicated region
    $region114: #{beamsnet_v1_forward.1} parent=1 // pred_check
      _
    $region115: #{beamsnet_v1_forward.1} parent=1 // pred_check_branch
      %213 = sbr.rel (0) target = $region117
    $region116: #{beamsnet_v1_forward.1} parent=1 // pred_region
      %215 = dma.done [#allocation18], 32
    $region117: #{beamsnet_v1_forward.1} parent=1 // pred_fallthru
      _
    // Predicated region
    $region118: #{beamsnet_v1_forward.1} parent=1 // pred_check
      _
    $region119: #{beamsnet_v1_forward.1} parent=1 // pred_check_branch
      %217 = sbr.rel (0) target = $region121
    $region120: #{beamsnet_v1_forward.1} parent=1 // pred_region
      %219 = dma.done [#allocation21], 64
    $region121: #{beamsnet_v1_forward.1} parent=1 // pred_fallthru
      _
    // Predicated region
    $region122: #{beamsnet_v1_forward.1} parent=1 // pred_check
      _
    $region123: #{beamsnet_v1_forward.1} parent=1 // pred_check_branch
      %221 = sbr.rel (0) target = $region125
    $region124: #{beamsnet_v1_forward.1} parent=1 // pred_region
      %223 = dma.done [#allocation21], 16
    $region125: #{beamsnet_v1_forward.1} parent=1 // pred_fallthru
      _
    %224 = sfence
    %s225 = sld [smem:[#allocation3]]
    %p227 = scmp.ne.f32.partialorder %s225, %s225
    %s228 = sshrl.u32 %s225, 16
    %s229 = sand.u32 %s228, 1
    %s230 = sadd.s32 32767, %s229
    %s231 = sadd.s32 %s225, %s230
    %s232 = sand.u32 %s231, 4294901760
    %s233 = scalar_select %p227, 2143289344, %s232
    %s235 = sshrl.u32 %s233, 16
    %s236 = sld [smem:[#allocation3 + $0x1]]
    %p238 = scmp.ne.f32.partialorder %s236, %s236
    %s239 = sshrl.u32 %s236, 16
    %s240 = sand.u32 %s239, 1
    %s241 = sadd.s32 32767, %s240
    %s242 = sadd.s32 %s236, %s241
    %s243 = sand.u32 %s242, 4294901760
    %s244 = scalar_select %p238, 2143289344, %s243
    %s246 = sshrl.u32 %s244, 16
    %s247 = sld [smem:[#allocation3 + $0x2]]
    %p249 = scmp.ne.f32.partialorder %s247, %s247
    %s250 = sshrl.u32 %s247, 16
    %s251 = sand.u32 %s250, 1
    %s252 = sadd.s32 32767, %s251
    %s253 = sadd.s32 %s247, %s252
    %s254 = sand.u32 %s253, 4294901760
    %s255 = scalar_select %p249, 2143289344, %s254
    %s257 = sshrl.u32 %s255, 16
    %s258 = sld [smem:[#allocation3 + $0x80]]
    %p260 = scmp.ne.f32.partialorder %s258, %s258
    %s261 = sshrl.u32 %s258, 16
    %s262 = sand.u32 %s261, 1
    %s263 = sadd.s32 32767, %s262
    %s264 = sadd.s32 %s258, %s263
    %s265 = sand.u32 %s264, 4294901760
    %s266 = scalar_select %p260, 2143289344, %s265
    %s268 = sshrl.u32 %s266, 16
    %s269 = sld [smem:[#allocation3 + $0x81]]
    %p271 = scmp.ne.f32.partialorder %s269, %s269
    %s272 = sshrl.u32 %s269, 16
    %s273 = sand.u32 %s272, 1
    %s274 = sadd.s32 32767, %s273
    %s275 = sadd.s32 %s269, %s274
    %s276 = sand.u32 %s275, 4294901760
    %s277 = scalar_select %p271, 2143289344, %s276
    %s279 = sshrl.u32 %s277, 16
    %s280 = sld [smem:[#allocation3 + $0x82]]
    %p282 = scmp.ne.f32.partialorder %s280, %s280
    %s283 = sshrl.u32 %s280, 16
    %s284 = sand.u32 %s283, 1
    %s285 = sadd.s32 32767, %s284
    %s286 = sadd.s32 %s280, %s285
    %s287 = sand.u32 %s286, 4294901760
    %s288 = scalar_select %p282, 2143289344, %s287
    %s290 = sshrl.u32 %s288, 16
    %s291 = sld [smem:[#allocation3 + $0x100]]
    %p293 = scmp.ne.f32.partialorder %s291, %s291
    %s294 = sshrl.u32 %s291, 16
    %s295 = sand.u32 %s294, 1
    %s296 = sadd.s32 32767, %s295
    %s297 = sadd.s32 %s291, %s296
    %s298 = sand.u32 %s297, 4294901760
    %s299 = scalar_select %p293, 2143289344, %s298
    %s301 = sshrl.u32 %s299, 16
    %s302 = sld [smem:[#allocation3 + $0x101]]
    %p304 = scmp.ne.f32.partialorder %s302, %s302
    %s305 = sshrl.u32 %s302, 16
    %s306 = sand.u32 %s305, 1
    %s307 = sadd.s32 32767, %s306
    %s308 = sadd.s32 %s302, %s307
    %s309 = sand.u32 %s308, 4294901760
    %s310 = scalar_select %p304, 2143289344, %s309
    %s312 = sshrl.u32 %s310, 16
    %s313 = sld [smem:[#allocation3 + $0x102]]
    %p315 = scmp.ne.f32.partialorder %s313, %s313
    %s316 = sshrl.u32 %s313, 16
    %s317 = sand.u32 %s316, 1
    %s318 = sadd.s32 32767, %s317
    %s319 = sadd.s32 %s313, %s318
    %s320 = sand.u32 %s319, 4294901760
    %s321 = scalar_select %p315, 2143289344, %s320
    %s323 = sshrl.u32 %s321, 16
    %s324 = sld [smem:[#allocation3 + $0x180]]
    %p326 = scmp.ne.f32.partialorder %s324, %s324
    %s327 = sshrl.u32 %s324, 16
    %s328 = sand.u32 %s327, 1
    %s329 = sadd.s32 32767, %s328
    %s330 = sadd.s32 %s324, %s329
    %s331 = sand.u32 %s330, 4294901760
    %s332 = scalar_select %p326, 2143289344, %s331
    %s334 = sshrl.u32 %s332, 16
    %s335 = sld [smem:[#allocation3 + $0x181]]
    %p337 = scmp.ne.f32.partialorder %s335, %s335
    %s338 = sshrl.u32 %s335, 16
    %s339 = sand.u32 %s338, 1
    %s340 = sadd.s32 32767, %s339
    %s341 = sadd.s32 %s335, %s340
    %s342 = sand.u32 %s341, 4294901760
    %s343 = scalar_select %p337, 2143289344, %s342
    %s345 = sshrl.u32 %s343, 16
    %s346 = sld [smem:[#allocation3 + $0x182]]
    %p348 = scmp.ne.f32.partialorder %s346, %s346
    %s349 = sshrl.u32 %s346, 16
    %s350 = sand.u32 %s349, 1
    %s351 = sadd.s32 32767, %s350
    %s352 = sadd.s32 %s346, %s351
    %s353 = sand.u32 %s352, 4294901760
    %s354 = scalar_select %p348, 2143289344, %s353
    %s356 = sshrl.u32 %s354, 16
    %s357 = sld [smem:[#allocation3 + $0x200]]
    %p359 = scmp.ne.f32.partialorder %s357, %s357
    %s360 = sshrl.u32 %s357, 16
    %s361 = sand.u32 %s360, 1
    %s362 = sadd.s32 32767, %s361
    %s363 = sadd.s32 %s357, %s362
    %s364 = sand.u32 %s363, 4294901760
    %s365 = scalar_select %p359, 2143289344, %s364
    %s367 = sshrl.u32 %s365, 16
    %s368 = sld [smem:[#allocation3 + $0x201]]
    %p370 = scmp.ne.f32.partialorder %s368, %s368
    %s371 = sshrl.u32 %s368, 16
    %s372 = sand.u32 %s371, 1
    %s373 = sadd.s32 32767, %s372
    %s374 = sadd.s32 %s368, %s373
    %s375 = sand.u32 %s374, 4294901760
    %s376 = scalar_select %p370, 2143289344, %s375
    %s378 = sshrl.u32 %s376, 16
    %s379 = sld [smem:[#allocation3 + $0x202]]
    %p381 = scmp.ne.f32.partialorder %s379, %s379
    %s382 = sshrl.u32 %s379, 16
    %s383 = sand.u32 %s382, 1
    %s384 = sadd.s32 32767, %s383
    %s385 = sadd.s32 %s379, %s384
    %s386 = sand.u32 %s385, 4294901760
    %s387 = scalar_select %p381, 2143289344, %s386
    %s389 = sshrl.u32 %s387, 16
    %s390 = sld [smem:[#allocation3 + $0x280]]
    %p392 = scmp.ne.f32.partialorder %s390, %s390
    %s393 = sshrl.u32 %s390, 16
    %s394 = sand.u32 %s393, 1
    %s395 = sadd.s32 32767, %s394
    %s396 = sadd.s32 %s390, %s395
    %s397 = sand.u32 %s396, 4294901760
    %s398 = scalar_select %p392, 2143289344, %s397
    %s400 = sshrl.u32 %s398, 16
    %s401 = sld [smem:[#allocation3 + $0x281]]
    %p403 = scmp.ne.f32.partialorder %s401, %s401
    %s404 = sshrl.u32 %s401, 16
    %s405 = sand.u32 %s404, 1
    %s406 = sadd.s32 32767, %s405
    %s407 = sadd.s32 %s401, %s406
    %s408 = sand.u32 %s407, 4294901760
    %s409 = scalar_select %p403, 2143289344, %s408
    %s411 = sshrl.u32 %s409, 16
    %s412 = sld [smem:[#allocation3 + $0x282]]
    %p414 = scmp.ne.f32.partialorder %s412, %s412
    %s415 = sshrl.u32 %s412, 16
    %s416 = sand.u32 %s415, 1
    %s417 = sadd.s32 32767, %s416
    %s418 = sadd.s32 %s412, %s417
    %s419 = sand.u32 %s418, 4294901760
    %s420 = scalar_select %p414, 2143289344, %s419
    %s422 = sshrl.u32 %s420, 16
    %s423 = sld [smem:[#allocation7]]
    %p425 = scmp.ne.f32.partialorder %s423, %s423
    %s426 = sshrl.u32 %s423, 16
    %s427 = sand.u32 %s426, 1
    %s428 = sadd.s32 32767, %s427
    %s429 = sadd.s32 %s423, %s428
    %s430 = sand.u32 %s429, 4294901760
    %s431 = scalar_select %p425, 2143289344, %s430
    %s433 = sshrl.u32 %s431, 16
    %s434 = sld [smem:[#allocation7 + $0x1]]
    %p436 = scmp.ne.f32.partialorder %s434, %s434
    %s437 = sshrl.u32 %s434, 16
    %s438 = sand.u32 %s437, 1
    %s439 = sadd.s32 32767, %s438
    %s440 = sadd.s32 %s434, %s439
    %s441 = sand.u32 %s440, 4294901760
    %s442 = scalar_select %p436, 2143289344, %s441
    %s444 = sshrl.u32 %s442, 16
    %s445 = sld [smem:[#allocation7 + $0x2]]
    %p447 = scmp.ne.f32.partialorder %s445, %s445
    %s448 = sshrl.u32 %s445, 16
    %s449 = sand.u32 %s448, 1
    %s450 = sadd.s32 32767, %s449
    %s451 = sadd.s32 %s445, %s450
    %s452 = sand.u32 %s451, 4294901760
    %s453 = scalar_select %p447, 2143289344, %s452
    %s455 = sshrl.u32 %s453, 16
    %s456 = sld [smem:[#allocation7 + $0x80]]
    %p458 = scmp.ne.f32.partialorder %s456, %s456
    %s459 = sshrl.u32 %s456, 16
    %s460 = sand.u32 %s459, 1
    %s461 = sadd.s32 32767, %s460
    %s462 = sadd.s32 %s456, %s461
    %s463 = sand.u32 %s462, 4294901760
    %s464 = scalar_select %p458, 2143289344, %s463
    %s466 = sshrl.u32 %s464, 16
    %s467 = sld [smem:[#allocation7 + $0x81]]
    %p469 = scmp.ne.f32.partialorder %s467, %s467
    %s470 = sshrl.u32 %s467, 16
    %s471 = sand.u32 %s470, 1
    %s472 = sadd.s32 32767, %s471
    %s473 = sadd.s32 %s467, %s472
    %s474 = sand.u32 %s473, 4294901760
    %s475 = scalar_select %p469, 2143289344, %s474
    %s477 = sshrl.u32 %s475, 16
    %s478 = sld [smem:[#allocation7 + $0x82]]
    %p480 = scmp.ne.f32.partialorder %s478, %s478
    %s481 = sshrl.u32 %s478, 16
    %s482 = sand.u32 %s481, 1
    %s483 = sadd.s32 32767, %s482
    %s484 = sadd.s32 %s478, %s483
    %s485 = sand.u32 %s484, 4294901760
    %s486 = scalar_select %p480, 2143289344, %s485
    %s488 = sshrl.u32 %s486, 16
    %s489 = sld [smem:[#allocation7 + $0x100]]
    %p491 = scmp.ne.f32.partialorder %s489, %s489
    %s492 = sshrl.u32 %s489, 16
    %s493 = sand.u32 %s492, 1
    %s494 = sadd.s32 32767, %s493
    %s495 = sadd.s32 %s489, %s494
    %s496 = sand.u32 %s495, 4294901760
    %s497 = scalar_select %p491, 2143289344, %s496
    %s499 = sshrl.u32 %s497, 16
    %s500 = sld [smem:[#allocation7 + $0x101]]
    %p502 = scmp.ne.f32.partialorder %s500, %s500
    %s503 = sshrl.u32 %s500, 16
    %s504 = sand.u32 %s503, 1
    %s505 = sadd.s32 32767, %s504
    %s506 = sadd.s32 %s500, %s505
    %s507 = sand.u32 %s506, 4294901760
    %s508 = scalar_select %p502, 2143289344, %s507
    %s510 = sshrl.u32 %s508, 16
    %s511 = sld [smem:[#allocation7 + $0x102]]
    %p513 = scmp.ne.f32.partialorder %s511, %s511
    %s514 = sshrl.u32 %s511, 16
    %s515 = sand.u32 %s514, 1
    %s516 = sadd.s32 32767, %s515
    %s517 = sadd.s32 %s511, %s516
    %s518 = sand.u32 %s517, 4294901760
    %s519 = scalar_select %p513, 2143289344, %s518
    %s521 = sshrl.u32 %s519, 16
    %s522 = sld [smem:[#allocation7 + $0x180]]
    %p524 = scmp.ne.f32.partialorder %s522, %s522
    %s525 = sshrl.u32 %s522, 16
    %s526 = sand.u32 %s525, 1
    %s527 = sadd.s32 32767, %s526
    %s528 = sadd.s32 %s522, %s527
    %s529 = sand.u32 %s528, 4294901760
    %s530 = scalar_select %p524, 2143289344, %s529
    %s532 = sshrl.u32 %s530, 16
    %s533 = sld [smem:[#allocation7 + $0x181]]
    %p535 = scmp.ne.f32.partialorder %s533, %s533
    %s536 = sshrl.u32 %s533, 16
    %s537 = sand.u32 %s536, 1
    %s538 = sadd.s32 32767, %s537
    %s539 = sadd.s32 %s533, %s538
    %s540 = sand.u32 %s539, 4294901760
    %s541 = scalar_select %p535, 2143289344, %s540
    %s543 = sshrl.u32 %s541, 16
    %s544 = sld [smem:[#allocation7 + $0x182]]
    %p546 = scmp.ne.f32.partialorder %s544, %s544
    %s547 = sshrl.u32 %s544, 16
    %s548 = sand.u32 %s547, 1
    %s549 = sadd.s32 32767, %s548
    %s550 = sadd.s32 %s544, %s549
    %s551 = sand.u32 %s550, 4294901760
    %s552 = scalar_select %p546, 2143289344, %s551
    %s554 = sshrl.u32 %s552, 16
    %s555 = sld [smem:[#allocation7 + $0x200]]
    %p557 = scmp.ne.f32.partialorder %s555, %s555
    %s558 = sshrl.u32 %s555, 16
    %s559 = sand.u32 %s558, 1
    %s560 = sadd.s32 32767, %s559
    %s561 = sadd.s32 %s555, %s560
    %s562 = sand.u32 %s561, 4294901760
    %s563 = scalar_select %p557, 2143289344, %s562
    %s565 = sshrl.u32 %s563, 16
    %s566 = sld [smem:[#allocation7 + $0x201]]
    %p568 = scmp.ne.f32.partialorder %s566, %s566
    %s569 = sshrl.u32 %s566, 16
    %s570 = sand.u32 %s569, 1
    %s571 = sadd.s32 32767, %s570
    %s572 = sadd.s32 %s566, %s571
    %s573 = sand.u32 %s572, 4294901760
    %s574 = scalar_select %p568, 2143289344, %s573
    %s576 = sshrl.u32 %s574, 16
    %s577 = sld [smem:[#allocation7 + $0x202]]
    %p579 = scmp.ne.f32.partialorder %s577, %s577
    %s580 = sshrl.u32 %s577, 16
    %s581 = sand.u32 %s580, 1
    %s582 = sadd.s32 32767, %s581
    %s583 = sadd.s32 %s577, %s582
    %s584 = sand.u32 %s583, 4294901760
    %s585 = scalar_select %p579, 2143289344, %s584
    %s587 = sshrl.u32 %s585, 16
    %s588 = sld [smem:[#allocation7 + $0x280]]
    %p590 = scmp.ne.f32.partialorder %s588, %s588
    %s591 = sshrl.u32 %s588, 16
    %s592 = sand.u32 %s591, 1
    %s593 = sadd.s32 32767, %s592
    %s594 = sadd.s32 %s588, %s593
    %s595 = sand.u32 %s594, 4294901760
    %s596 = scalar_select %p590, 2143289344, %s595
    %s598 = sshrl.u32 %s596, 16
    %s599 = sld [smem:[#allocation7 + $0x281]]
    %p601 = scmp.ne.f32.partialorder %s599, %s599
    %s602 = sshrl.u32 %s599, 16
    %s603 = sand.u32 %s602, 1
    %s604 = sadd.s32 32767, %s603
    %s605 = sadd.s32 %s599, %s604
    %s606 = sand.u32 %s605, 4294901760
    %s607 = scalar_select %p601, 2143289344, %s606
    %s609 = sshrl.u32 %s607, 16
    %s610 = sld [smem:[#allocation7 + $0x282]]
    %p612 = scmp.ne.f32.partialorder %s610, %s610
    %s613 = sshrl.u32 %s610, 16
    %s614 = sand.u32 %s613, 1
    %s615 = sadd.s32 32767, %s614
    %s616 = sadd.s32 %s610, %s615
    %s617 = sand.u32 %s616, 4294901760
    %s618 = scalar_select %p612, 2143289344, %s617
    %s620 = sshrl.u32 %s618, 16
    %s621 = sld [smem:[#allocation9]]
    %p623 = scmp.ne.f32.partialorder %s621, %s621
    %s624 = sshrl.u32 %s621, 16
    %s625 = sand.u32 %s624, 1
    %s626 = sadd.s32 32767, %s625
    %s627 = sadd.s32 %s621, %s626
    %s628 = sand.u32 %s627, 4294901760
    %s629 = scalar_select %p623, 2143289344, %s628
    %s631 = sshrl.u32 %s629, 16
    %s632 = sld [smem:[#allocation9 + $0x1]]
    %p634 = scmp.ne.f32.partialorder %s632, %s632
    %s635 = sshrl.u32 %s632, 16
    %s636 = sand.u32 %s635, 1
    %s637 = sadd.s32 32767, %s636
    %s638 = sadd.s32 %s632, %s637
    %s639 = sand.u32 %s638, 4294901760
    %s640 = scalar_select %p634, 2143289344, %s639
    %s642 = sshrl.u32 %s640, 16
    %s643 = sld [smem:[#allocation9 + $0x2]]
    %p645 = scmp.ne.f32.partialorder %s643, %s643
    %s646 = sshrl.u32 %s643, 16
    %s647 = sand.u32 %s646, 1
    %s648 = sadd.s32 32767, %s647
    %s649 = sadd.s32 %s643, %s648
    %s650 = sand.u32 %s649, 4294901760
    %s651 = scalar_select %p645, 2143289344, %s650
    %s653 = sshrl.u32 %s651, 16
    %s654 = sld [smem:[#allocation9 + $0x3]]
    %p656 = scmp.ne.f32.partialorder %s654, %s654
    %s657 = sshrl.u32 %s654, 16
    %s658 = sand.u32 %s657, 1
    %s659 = sadd.s32 32767, %s658
    %s660 = sadd.s32 %s654, %s659
    %s661 = sand.u32 %s660, 4294901760
    %s662 = scalar_select %p656, 2143289344, %s661
    %s664 = sshrl.u32 %s662, 16
    %s665 = sld [smem:[#allocation9 + $0x4]]
    %p667 = scmp.ne.f32.partialorder %s665, %s665
    %s668 = sshrl.u32 %s665, 16
    %s669 = sand.u32 %s668, 1
    %s670 = sadd.s32 32767, %s669
    %s671 = sadd.s32 %s665, %s670
    %s672 = sand.u32 %s671, 4294901760
    %s673 = scalar_select %p667, 2143289344, %s672
    %s675 = sshrl.u32 %s673, 16
    %s676 = sld [smem:[#allocation9 + $0x5]]
    %p678 = scmp.ne.f32.partialorder %s676, %s676
    %s679 = sshrl.u32 %s676, 16
    %s680 = sand.u32 %s679, 1
    %s681 = sadd.s32 32767, %s680
    %s682 = sadd.s32 %s676, %s681
    %s683 = sand.u32 %s682, 4294901760
    %s684 = scalar_select %p678, 2143289344, %s683
    %s686 = sshrl.u32 %s684, 16
    %v687 = vld [vmem:[%s0] sm:$0xf]
    %v688 = vld [vmem:[%s0 + $0x4] sm:$0xf]
    %s689 = scalar_lea.vmem %s0, 8
    %v690 = vld [vmem:[%s689] sm:$0xf]
    %v691 = vld [vmem:[%s689 + $0x4] sm:$0xf]
    %s692 = scalar_lea.vmem %s0, 16
    %v693 = vld [vmem:[%s692] sm:$0xf]
    %v694 = vld [vmem:[%s692 + $0x4] sm:$0xf]
    %v695 = vld [vmem:[%s1] sm:$0xf]
    %v696 = vld [vmem:[%s1 + $0x4] sm:$0xf]
    %s697 = scalar_lea.vmem %s1, 8
    %v698 = vld [vmem:[%s697] sm:$0xf]
    %v699 = vld [vmem:[%s697 + $0x4] sm:$0xf]
    %s700 = scalar_lea.vmem %s1, 16
    %v701 = vld [vmem:[%s700] sm:$0xf]
    %v702 = vld [vmem:[%s700 + $0x4] sm:$0xf]
    %s703 = sshll.u32 %s235, 16
    %s704 = sor.u32 %s235, %s703
    %v705 = vstv %s704
    %v707 = vunpack.c.l.bf16 %v687
    %v708 = vunpack.c.l.bf16 %v688
    %v709 = vunpack.c.l.bf16 %v705
    %v710 = vmul.f32 %v707, %v709
    %v711 = vmul.f32 %v708, %v709
    %v712 = vpack.c.bf16 %v710, %v710
    %v713 = vpack.c.bf16 %v711, %v711
    %s714 = sshll.u32 %s433, 16
    %s715 = sor.u32 %s433, %s714
    %v716 = vstv %s715
    %v718 = vunpack.c.l.bf16 %v695
    %v719 = vunpack.c.l.bf16 %v696
    %v720 = vunpack.c.l.bf16 %v716
    %v721 = vmul.f32 %v718, %v720
    %v722 = vmul.f32 %v719, %v720
    %v723 = vpack.c.bf16 %v721, %v721
    %v724 = vpack.c.bf16 %v722, %v722
    %v725 = vunpack.c.l.bf16 %v712
    %v726 = vunpack.c.l.bf16 %v713
    %v727 = vunpack.c.l.bf16 %v723
    %v728 = vunpack.c.l.bf16 %v724
    %v729 = vadd.f32 %v725, %v727
    %v730 = vadd.f32 %v726, %v728
    %v731 = vpack.c.bf16 %v729, %v729
    %v732 = vpack.c.bf16 %v730, %v730
    %s733 = sshll.u32 %s246, 16
    %s734 = sor.u32 %s246, %s733
    %v735 = vstv %s734
    %v737 = vunpack.c.l.bf16 %v690
    %v738 = vunpack.c.l.bf16 %v691
    %v739 = vunpack.c.l.bf16 %v735
    %v740 = vmul.f32 %v737, %v739
    %v741 = vmul.f32 %v738, %v739
    %v742 = vpack.c.bf16 %v740, %v740
    %v743 = vpack.c.bf16 %v741, %v741
    %v744 = vunpack.c.l.bf16 %v731
    %v745 = vunpack.c.l.bf16 %v732
    %v746 = vunpack.c.l.bf16 %v742
    %v747 = vunpack.c.l.bf16 %v743
    %v748 = vadd.f32 %v744, %v746
    %v749 = vadd.f32 %v745, %v747
    %v750 = vpack.c.bf16 %v748, %v748
    %v751 = vpack.c.bf16 %v749, %v749
    %s752 = sshll.u32 %s444, 16
    %s753 = sor.u32 %s444, %s752
    %v754 = vstv %s753
    %v756 = vunpack.c.l.bf16 %v698
    %v757 = vunpack.c.l.bf16 %v699
    %v758 = vunpack.c.l.bf16 %v754
    %v759 = vmul.f32 %v756, %v758
    %v760 = vmul.f32 %v757, %v758
    %v761 = vpack.c.bf16 %v759, %v759
    %v762 = vpack.c.bf16 %v760, %v760
    %v763 = vunpack.c.l.bf16 %v750
    %v764 = vunpack.c.l.bf16 %v751
    %v765 = vunpack.c.l.bf16 %v761
    %v766 = vunpack.c.l.bf16 %v762
    %v767 = vadd.f32 %v763, %v765
    %v768 = vadd.f32 %v764, %v766
    %v769 = vpack.c.bf16 %v767, %v767
    %v770 = vpack.c.bf16 %v768, %v768
    %s771 = sshll.u32 %s257, 16
    %s772 = sor.u32 %s257, %s771
    %v773 = vstv %s772
    %v775 = vunpack.c.l.bf16 %v693
    %v776 = vunpack.c.l.bf16 %v694
    %v777 = vunpack.c.l.bf16 %v773
    %v778 = vmul.f32 %v775, %v777
    %v779 = vmul.f32 %v776, %v777
    %v780 = vpack.c.bf16 %v778, %v778
    %v781 = vpack.c.bf16 %v779, %v779
    %v782 = vunpack.c.l.bf16 %v769
    %v783 = vunpack.c.l.bf16 %v770
    %v784 = vunpack.c.l.bf16 %v780
    %v785 = vunpack.c.l.bf16 %v781
    %v786 = vadd.f32 %v782, %v784
    %v787 = vadd.f32 %v783, %v785
    %v788 = vpack.c.bf16 %v786, %v786
    %v789 = vpack.c.bf16 %v787, %v787
    %s790 = sshll.u32 %s455, 16
    %s791 = sor.u32 %s455, %s790
    %v792 = vstv %s791
    %v794 = vunpack.c.l.bf16 %v701
    %v795 = vunpack.c.l.bf16 %v702
    %v796 = vunpack.c.l.bf16 %v792
    %v797 = vmul.f32 %v794, %v796
    %v798 = vmul.f32 %v795, %v796
    %v799 = vpack.c.bf16 %v797, %v797
    %v800 = vpack.c.bf16 %v798, %v798
    %v801 = vunpack.c.l.bf16 %v788
    %v802 = vunpack.c.l.bf16 %v789
    %v803 = vunpack.c.l.bf16 %v799
    %v804 = vunpack.c.l.bf16 %v800
    %v805 = vadd.f32 %v801, %v803
    %v806 = vadd.f32 %v802, %v804
    %v807 = vpack.c.bf16 %v805, %v805
    %v808 = vpack.c.bf16 %v806, %v806
    %s809 = sshll.u32 %s631, 16
    %s810 = sor.u32 %s631, %s809
    %v811 = vstv %s810
    %v813 = vunpack.c.l.bf16 %v807
    %v814 = vunpack.c.l.bf16 %v808
    %v815 = vunpack.c.l.bf16 %v811
    %v816 = vadd.f32 %v813, %v815
    %v817 = vadd.f32 %v814, %v815
    %v818 = vpack.c.bf16 %v816, %v816
    %v819 = vpack.c.bf16 %v817, %v817
    %v820 = vunpack.c.l.bf16 %v818
    %v821 = vunpack.c.l.bf16 %v819
    %v822 = vtanh.pop %v820
    %v823 = vtanh.pop %v821
    %v824 = vpack.c.bf16 %v822, %v822
    %v825 = vpack.c.bf16 %v823, %v823
    %826 = vst [vmem:[#allocation2] sm:$0xf] %v824
    %827 = vst [vmem:[#allocation2 + $0x30] sm:$0xf] %v825
    %s828 = sshll.u32 %s268, 16
    %s829 = sor.u32 %s268, %s828
    %v830 = vstv %s829
    %v832 = vunpack.c.l.bf16 %v830
    %v833 = vmul.f32 %v707, %v832
    %v834 = vmul.f32 %v708, %v832
    %v835 = vpack.c.bf16 %v833, %v833
    %v836 = vpack.c.bf16 %v834, %v834
    %s837 = sshll.u32 %s466, 16
    %s838 = sor.u32 %s466, %s837
    %v839 = vstv %s838
    %v841 = vunpack.c.l.bf16 %v839
    %v842 = vmul.f32 %v718, %v841
    %v843 = vmul.f32 %v719, %v841
    %v844 = vpack.c.bf16 %v842, %v842
    %v845 = vpack.c.bf16 %v843, %v843
    %v846 = vunpack.c.l.bf16 %v835
    %v847 = vunpack.c.l.bf16 %v836
    %v848 = vunpack.c.l.bf16 %v844
    %v849 = vunpack.c.l.bf16 %v845
    %v850 = vadd.f32 %v846, %v848
    %v851 = vadd.f32 %v847, %v849
    %v852 = vpack.c.bf16 %v850, %v850
    %v853 = vpack.c.bf16 %v851, %v851
    %s854 = sshll.u32 %s279, 16
    %s855 = sor.u32 %s279, %s854
    %v856 = vstv %s855
    %v858 = vunpack.c.l.bf16 %v856
    %v859 = vmul.f32 %v737, %v858
    %v860 = vmul.f32 %v738, %v858
    %v861 = vpack.c.bf16 %v859, %v859
    %v862 = vpack.c.bf16 %v860, %v860
    %v863 = vunpack.c.l.bf16 %v852
    %v864 = vunpack.c.l.bf16 %v853
    %v865 = vunpack.c.l.bf16 %v861
    %v866 = vunpack.c.l.bf16 %v862
    %v867 = vadd.f32 %v863, %v865
    %v868 = vadd.f32 %v864, %v866
    %v869 = vpack.c.bf16 %v867, %v867
    %v870 = vpack.c.bf16 %v868, %v868
    %s871 = sshll.u32 %s477, 16
    %s872 = sor.u32 %s477, %s871
    %v873 = vstv %s872
    %v875 = vunpack.c.l.bf16 %v873
    %v876 = vmul.f32 %v756, %v875
    %v877 = vmul.f32 %v757, %v875
    %v878 = vpack.c.bf16 %v876, %v876
    %v879 = vpack.c.bf16 %v877, %v877
    %v880 = vunpack.c.l.bf16 %v869
    %v881 = vunpack.c.l.bf16 %v870
    %v882 = vunpack.c.l.bf16 %v878
    %v883 = vunpack.c.l.bf16 %v879
    %v884 = vadd.f32 %v880, %v882
    %v885 = vadd.f32 %v881, %v883
    %v886 = vpack.c.bf16 %v884, %v884
    %v887 = vpack.c.bf16 %v885, %v885
    %s888 = sshll.u32 %s290, 16
    %s889 = sor.u32 %s290, %s888
    %v890 = vstv %s889
    %v892 = vunpack.c.l.bf16 %v890
    %v893 = vmul.f32 %v775, %v892
    %v894 = vmul.f32 %v776, %v892
    %v895 = vpack.c.bf16 %v893, %v893
    %v896 = vpack.c.bf16 %v894, %v894
    %v897 = vunpack.c.l.bf16 %v886
    %v898 = vunpack.c.l.bf16 %v887
    %v899 = vunpack.c.l.bf16 %v895
    %v900 = vunpack.c.l.bf16 %v896
    %v901 = vadd.f32 %v897, %v899
    %v902 = vadd.f32 %v898, %v900
    %v903 = vpack.c.bf16 %v901, %v901
    %v904 = vpack.c.bf16 %v902, %v902
    %s905 = sshll.u32 %s488, 16
    %s906 = sor.u32 %s488, %s905
    %v907 = vstv %s906
    %v909 = vunpack.c.l.bf16 %v907
    %v910 = vmul.f32 %v794, %v909
    %v911 = vmul.f32 %v795, %v909
    %v912 = vpack.c.bf16 %v910, %v910
    %v913 = vpack.c.bf16 %v911, %v911
    %v914 = vunpack.c.l.bf16 %v903
    %v915 = vunpack.c.l.bf16 %v904
    %v916 = vunpack.c.l.bf16 %v912
    %v917 = vunpack.c.l.bf16 %v913
    %v918 = vadd.f32 %v914, %v916
    %v919 = vadd.f32 %v915, %v917
    %v920 = vpack.c.bf16 %v918, %v918
    %v921 = vpack.c.bf16 %v919, %v919
    %s922 = sshll.u32 %s642, 16
    %s923 = sor.u32 %s642, %s922
    %v924 = vstv %s923
    %v926 = vunpack.c.l.bf16 %v920
    %v927 = vunpack.c.l.bf16 %v921
    %v928 = vunpack.c.l.bf16 %v924
    %v929 = vadd.f32 %v926, %v928
    %v930 = vadd.f32 %v927, %v928
    %v931 = vpack.c.bf16 %v929, %v929
    %v932 = vpack.c.bf16 %v930, %v930
    %v933 = vunpack.c.l.bf16 %v931
    %v934 = vunpack.c.l.bf16 %v932
    %v935 = vtanh.pop %v933
    %v936 = vtanh.pop %v934
    %v937 = vpack.c.bf16 %v935, %v935
    %v938 = vpack.c.bf16 %v936, %v936
    %939 = vst [vmem:[#allocation2 + $0x4] sm:$0xf] %v937
    %940 = vst [vmem:[#allocation2 + $0x34] sm:$0xf] %v938
    %s941 = sshll.u32 %s301, 16
    %s942 = sor.u32 %s301, %s941
    %v943 = vstv %s942
    %v945 = vunpack.c.l.bf16 %v943
    %v946 = vmul.f32 %v707, %v945
    %v947 = vmul.f32 %v708, %v945
    %v948 = vpack.c.bf16 %v946, %v946
    %v949 = vpack.c.bf16 %v947, %v947
    %s950 = sshll.u32 %s499, 16
    %s951 = sor.u32 %s499, %s950
    %v952 = vstv %s951
    %v954 = vunpack.c.l.bf16 %v952
    %v955 = vmul.f32 %v718, %v954
    %v956 = vmul.f32 %v719, %v954
    %v957 = vpack.c.bf16 %v955, %v955
    %v958 = vpack.c.bf16 %v956, %v956
    %v959 = vunpack.c.l.bf16 %v948
    %v960 = vunpack.c.l.bf16 %v949
    %v961 = vunpack.c.l.bf16 %v957
    %v962 = vunpack.c.l.bf16 %v958
    %v963 = vadd.f32 %v959, %v961
    %v964 = vadd.f32 %v960, %v962
    %v965 = vpack.c.bf16 %v963, %v963
    %v966 = vpack.c.bf16 %v964, %v964
    %s967 = sshll.u32 %s312, 16
    %s968 = sor.u32 %s312, %s967
    %v969 = vstv %s968
    %v971 = vunpack.c.l.bf16 %v969
    %v972 = vmul.f32 %v737, %v971
    %v973 = vmul.f32 %v738, %v971
    %v974 = vpack.c.bf16 %v972, %v972
    %v975 = vpack.c.bf16 %v973, %v973
    %v976 = vunpack.c.l.bf16 %v965
    %v977 = vunpack.c.l.bf16 %v966
    %v978 = vunpack.c.l.bf16 %v974
    %v979 = vunpack.c.l.bf16 %v975
    %v980 = vadd.f32 %v976, %v978
    %v981 = vadd.f32 %v977, %v979
    %v982 = vpack.c.bf16 %v980, %v980
    %v983 = vpack.c.bf16 %v981, %v981
    %s984 = sshll.u32 %s510, 16
    %s985 = sor.u32 %s510, %s984
    %v986 = vstv %s985
    %v988 = vunpack.c.l.bf16 %v986
    %v989 = vmul.f32 %v756, %v988
    %v990 = vmul.f32 %v757, %v988
    %v991 = vpack.c.bf16 %v989, %v989
    %v992 = vpack.c.bf16 %v990, %v990
    %v993 = vunpack.c.l.bf16 %v982
    %v994 = vunpack.c.l.bf16 %v983
    %v995 = vunpack.c.l.bf16 %v991
    %v996 = vunpack.c.l.bf16 %v992
    %v997 = vadd.f32 %v993, %v995
    %v998 = vadd.f32 %v994, %v996
    %v999 = vpack.c.bf16 %v997, %v997
    %v1000 = vpack.c.bf16 %v998, %v998
    %s1001 = sshll.u32 %s323, 16
    %s1002 = sor.u32 %s323, %s1001
    %v1003 = vstv %s1002
    %v1005 = vunpack.c.l.bf16 %v1003
    %v1006 = vmul.f32 %v775, %v1005
    %v1007 = vmul.f32 %v776, %v1005
    %v1008 = vpack.c.bf16 %v1006, %v1006
    %v1009 = vpack.c.bf16 %v1007, %v1007
    %v1010 = vunpack.c.l.bf16 %v999
    %v1011 = vunpack.c.l.bf16 %v1000
    %v1012 = vunpack.c.l.bf16 %v1008
    %v1013 = vunpack.c.l.bf16 %v1009
    %v1014 = vadd.f32 %v1010, %v1012
    %v1015 = vadd.f32 %v1011, %v1013
    %v1016 = vpack.c.bf16 %v1014, %v1014
    %v1017 = vpack.c.bf16 %v1015, %v1015
    %s1018 = sshll.u32 %s521, 16
    %s1019 = sor.u32 %s521, %s1018
    %v1020 = vstv %s1019
    %v1022 = vunpack.c.l.bf16 %v1020
    %v1023 = vmul.f32 %v794, %v1022
    %v1024 = vmul.f32 %v795, %v1022
    %v1025 = vpack.c.bf16 %v1023, %v1023
    %v1026 = vpack.c.bf16 %v1024, %v1024
    %v1027 = vunpack.c.l.bf16 %v1016
    %v1028 = vunpack.c.l.bf16 %v1017
    %v1029 = vunpack.c.l.bf16 %v1025
    %v1030 = vunpack.c.l.bf16 %v1026
    %v1031 = vadd.f32 %v1027, %v1029
    %v1032 = vadd.f32 %v1028, %v1030
    %v1033 = vpack.c.bf16 %v1031, %v1031
    %v1034 = vpack.c.bf16 %v1032, %v1032
    %s1035 = sshll.u32 %s653, 16
    %s1036 = sor.u32 %s653, %s1035
    %v1037 = vstv %s1036
    %v1039 = vunpack.c.l.bf16 %v1033
    %v1040 = vunpack.c.l.bf16 %v1034
    %v1041 = vunpack.c.l.bf16 %v1037
    %v1042 = vadd.f32 %v1039, %v1041
    %v1043 = vadd.f32 %v1040, %v1041
    %v1044 = vpack.c.bf16 %v1042, %v1042
    %v1045 = vpack.c.bf16 %v1043, %v1043
    %v1046 = vunpack.c.l.bf16 %v1044
    %v1047 = vunpack.c.l.bf16 %v1045
    %v1048 = vtanh.pop %v1046
    %v1049 = vtanh.pop %v1047
    %v1050 = vpack.c.bf16 %v1048, %v1048
    %v1051 = vpack.c.bf16 %v1049, %v1049
    %1052 = vst [vmem:[#allocation2 + $0x8] sm:$0xf] %v1050
    %1053 = vst [vmem:[#allocation2 + $0x38] sm:$0xf] %v1051
    %s1054 = sshll.u32 %s334, 16
    %s1055 = sor.u32 %s334, %s1054
    %v1056 = vstv %s1055
    %v1058 = vunpack.c.l.bf16 %v1056
    %v1059 = vmul.f32 %v707, %v1058
    %v1060 = vmul.f32 %v708, %v1058
    %v1061 = vpack.c.bf16 %v1059, %v1059
    %v1062 = vpack.c.bf16 %v1060, %v1060
    %s1063 = sshll.u32 %s532, 16
    %s1064 = sor.u32 %s532, %s1063
    %v1065 = vstv %s1064
    %v1067 = vunpack.c.l.bf16 %v1065
    %v1068 = vmul.f32 %v718, %v1067
    %v1069 = vmul.f32 %v719, %v1067
    %v1070 = vpack.c.bf16 %v1068, %v1068
    %v1071 = vpack.c.bf16 %v1069, %v1069
    %v1072 = vunpack.c.l.bf16 %v1061
    %v1073 = vunpack.c.l.bf16 %v1062
    %v1074 = vunpack.c.l.bf16 %v1070
    %v1075 = vunpack.c.l.bf16 %v1071
    %v1076 = vadd.f32 %v1072, %v1074
    %v1077 = vadd.f32 %v1073, %v1075
    %v1078 = vpack.c.bf16 %v1076, %v1076
    %v1079 = vpack.c.bf16 %v1077, %v1077
    %s1080 = sshll.u32 %s345, 16
    %s1081 = sor.u32 %s345, %s1080
    %v1082 = vstv %s1081
    %v1084 = vunpack.c.l.bf16 %v1082
    %v1085 = vmul.f32 %v737, %v1084
    %v1086 = vmul.f32 %v738, %v1084
    %v1087 = vpack.c.bf16 %v1085, %v1085
    %v1088 = vpack.c.bf16 %v1086, %v1086
    %v1089 = vunpack.c.l.bf16 %v1078
    %v1090 = vunpack.c.l.bf16 %v1079
    %v1091 = vunpack.c.l.bf16 %v1087
    %v1092 = vunpack.c.l.bf16 %v1088
    %v1093 = vadd.f32 %v1089, %v1091
    %v1094 = vadd.f32 %v1090, %v1092
    %v1095 = vpack.c.bf16 %v1093, %v1093
    %v1096 = vpack.c.bf16 %v1094, %v1094
    %s1097 = sshll.u32 %s543, 16
    %s1098 = sor.u32 %s543, %s1097
    %v1099 = vstv %s1098
    %v1101 = vunpack.c.l.bf16 %v1099
    %v1102 = vmul.f32 %v756, %v1101
    %v1103 = vmul.f32 %v757, %v1101
    %v1104 = vpack.c.bf16 %v1102, %v1102
    %v1105 = vpack.c.bf16 %v1103, %v1103
    %v1106 = vunpack.c.l.bf16 %v1095
    %v1107 = vunpack.c.l.bf16 %v1096
    %v1108 = vunpack.c.l.bf16 %v1104
    %v1109 = vunpack.c.l.bf16 %v1105
    %v1110 = vadd.f32 %v1106, %v1108
    %v1111 = vadd.f32 %v1107, %v1109
    %v1112 = vpack.c.bf16 %v1110, %v1110
    %v1113 = vpack.c.bf16 %v1111, %v1111
    %s1114 = sshll.u32 %s356, 16
    %s1115 = sor.u32 %s356, %s1114
    %v1116 = vstv %s1115
    %v1118 = vunpack.c.l.bf16 %v1116
    %v1119 = vmul.f32 %v775, %v1118
    %v1120 = vmul.f32 %v776, %v1118
    %v1121 = vpack.c.bf16 %v1119, %v1119
    %v1122 = vpack.c.bf16 %v1120, %v1120
    %v1123 = vunpack.c.l.bf16 %v1112
    %v1124 = vunpack.c.l.bf16 %v1113
    %v1125 = vunpack.c.l.bf16 %v1121
    %v1126 = vunpack.c.l.bf16 %v1122
    %v1127 = vadd.f32 %v1123, %v1125
    %v1128 = vadd.f32 %v1124, %v1126
    %v1129 = vpack.c.bf16 %v1127, %v1127
    %v1130 = vpack.c.bf16 %v1128, %v1128
    %s1131 = sshll.u32 %s554, 16
    %s1132 = sor.u32 %s554, %s1131
    %v1133 = vstv %s1132
    %v1135 = vunpack.c.l.bf16 %v1133
    %v1136 = vmul.f32 %v794, %v1135
    %v1137 = vmul.f32 %v795, %v1135
    %v1138 = vpack.c.bf16 %v1136, %v1136
    %v1139 = vpack.c.bf16 %v1137, %v1137
    %v1140 = vunpack.c.l.bf16 %v1129
    %v1141 = vunpack.c.l.bf16 %v1130
    %v1142 = vunpack.c.l.bf16 %v1138
    %v1143 = vunpack.c.l.bf16 %v1139
    %v1144 = vadd.f32 %v1140, %v1142
    %v1145 = vadd.f32 %v1141, %v1143
    %v1146 = vpack.c.bf16 %v1144, %v1144
    %v1147 = vpack.c.bf16 %v1145, %v1145
    %s1148 = sshll.u32 %s664, 16
    %s1149 = sor.u32 %s664, %s1148
    %v1150 = vstv %s1149
    %v1152 = vunpack.c.l.bf16 %v1146
    %v1153 = vunpack.c.l.bf16 %v1147
    %v1154 = vunpack.c.l.bf16 %v1150
    %v1155 = vadd.f32 %v1152, %v1154
    %v1156 = vadd.f32 %v1153, %v1154
    %v1157 = vpack.c.bf16 %v1155, %v1155
    %v1158 = vpack.c.bf16 %v1156, %v1156
    %v1159 = vunpack.c.l.bf16 %v1157
    %v1160 = vunpack.c.l.bf16 %v1158
    %v1161 = vtanh.pop %v1159
    %v1162 = vtanh.pop %v1160
    %v1163 = vpack.c.bf16 %v1161, %v1161
    %v1164 = vpack.c.bf16 %v1162, %v1162
    %1165 = vst [vmem:[#allocation2 + $0xc] sm:$0xf] %v1163
    %1166 = vst [vmem:[#allocation2 + $0x3c] sm:$0xf] %v1164
    %s1167 = sshll.u32 %s367, 16
    %s1168 = sor.u32 %s367, %s1167
    %v1169 = vstv %s1168
    %v1171 = vunpack.c.l.bf16 %v1169
    %v1172 = vmul.f32 %v707, %v1171
    %v1173 = vmul.f32 %v708, %v1171
    %v1174 = vpack.c.bf16 %v1172, %v1172
    %v1175 = vpack.c.bf16 %v1173, %v1173
    %s1176 = sshll.u32 %s565, 16
    %s1177 = sor.u32 %s565, %s1176
    %v1178 = vstv %s1177
    %v1180 = vunpack.c.l.bf16 %v1178
    %v1181 = vmul.f32 %v718, %v1180
    %v1182 = vmul.f32 %v719, %v1180
    %v1183 = vpack.c.bf16 %v1181, %v1181
    %v1184 = vpack.c.bf16 %v1182, %v1182
    %v1185 = vunpack.c.l.bf16 %v1174
    %v1186 = vunpack.c.l.bf16 %v1175
    %v1187 = vunpack.c.l.bf16 %v1183
    %v1188 = vunpack.c.l.bf16 %v1184
    %v1189 = vadd.f32 %v1185, %v1187
    %v1190 = vadd.f32 %v1186, %v1188
    %v1191 = vpack.c.bf16 %v1189, %v1189
    %v1192 = vpack.c.bf16 %v1190, %v1190
    %s1193 = sshll.u32 %s378, 16
    %s1194 = sor.u32 %s378, %s1193
    %v1195 = vstv %s1194
    %v1197 = vunpack.c.l.bf16 %v1195
    %v1198 = vmul.f32 %v737, %v1197
    %v1199 = vmul.f32 %v738, %v1197
    %v1200 = vpack.c.bf16 %v1198, %v1198
    %v1201 = vpack.c.bf16 %v1199, %v1199
    %v1202 = vunpack.c.l.bf16 %v1191
    %v1203 = vunpack.c.l.bf16 %v1192
    %v1204 = vunpack.c.l.bf16 %v1200
    %v1205 = vunpack.c.l.bf16 %v1201
    %v1206 = vadd.f32 %v1202, %v1204
    %v1207 = vadd.f32 %v1203, %v1205
    %v1208 = vpack.c.bf16 %v1206, %v1206
    %v1209 = vpack.c.bf16 %v1207, %v1207
    %s1210 = sshll.u32 %s576, 16
    %s1211 = sor.u32 %s576, %s1210
    %v1212 = vstv %s1211
    %v1214 = vunpack.c.l.bf16 %v1212
    %v1215 = vmul.f32 %v756, %v1214
    %v1216 = vmul.f32 %v757, %v1214
    %v1217 = vpack.c.bf16 %v1215, %v1215
    %v1218 = vpack.c.bf16 %v1216, %v1216
    %v1219 = vunpack.c.l.bf16 %v1208
    %v1220 = vunpack.c.l.bf16 %v1209
    %v1221 = vunpack.c.l.bf16 %v1217
    %v1222 = vunpack.c.l.bf16 %v1218
    %v1223 = vadd.f32 %v1219, %v1221
    %v1224 = vadd.f32 %v1220, %v1222
    %v1225 = vpack.c.bf16 %v1223, %v1223
    %v1226 = vpack.c.bf16 %v1224, %v1224
    %s1227 = sshll.u32 %s389, 16
    %s1228 = sor.u32 %s389, %s1227
    %v1229 = vstv %s1228
    %v1231 = vunpack.c.l.bf16 %v1229
    %v1232 = vmul.f32 %v775, %v1231
    %v1233 = vmul.f32 %v776, %v1231
    %v1234 = vpack.c.bf16 %v1232, %v1232
    %v1235 = vpack.c.bf16 %v1233, %v1233
    %v1236 = vunpack.c.l.bf16 %v1225
    %v1237 = vunpack.c.l.bf16 %v1226
    %v1238 = vunpack.c.l.bf16 %v1234
    %v1239 = vunpack.c.l.bf16 %v1235
    %v1240 = vadd.f32 %v1236, %v1238
    %v1241 = vadd.f32 %v1237, %v1239
    %v1242 = vpack.c.bf16 %v1240, %v1240
    %v1243 = vpack.c.bf16 %v1241, %v1241
    %s1244 = sshll.u32 %s587, 16
    %s1245 = sor.u32 %s587, %s1244
    %v1246 = vstv %s1245
    %v1248 = vunpack.c.l.bf16 %v1246
    %v1249 = vmul.f32 %v794, %v1248
    %v1250 = vmul.f32 %v795, %v1248
    %v1251 = vpack.c.bf16 %v1249, %v1249
    %v1252 = vpack.c.bf16 %v1250, %v1250
    %v1253 = vunpack.c.l.bf16 %v1242
    %v1254 = vunpack.c.l.bf16 %v1243
    %v1255 = vunpack.c.l.bf16 %v1251
    %v1256 = vunpack.c.l.bf16 %v1252
    %v1257 = vadd.f32 %v1253, %v1255
    %v1258 = vadd.f32 %v1254, %v1256
    %v1259 = vpack.c.bf16 %v1257, %v1257
    %v1260 = vpack.c.bf16 %v1258, %v1258
    %s1261 = sshll.u32 %s675, 16
    %s1262 = sor.u32 %s675, %s1261
    %v1263 = vstv %s1262
    %v1265 = vunpack.c.l.bf16 %v1259
    %v1266 = vunpack.c.l.bf16 %v1260
    %v1267 = vunpack.c.l.bf16 %v1263
    %v1268 = vadd.f32 %v1265, %v1267
    %v1269 = vadd.f32 %v1266, %v1267
    %v1270 = vpack.c.bf16 %v1268, %v1268
    %v1271 = vpack.c.bf16 %v1269, %v1269
    %v1272 = vunpack.c.l.bf16 %v1270
    %v1273 = vunpack.c.l.bf16 %v1271
    %v1274 = vtanh.pop %v1272
    %v1275 = vtanh.pop %v1273
    %v1276 = vpack.c.bf16 %v1274, %v1274
    %v1277 = vpack.c.bf16 %v1275, %v1275
    %1278 = vst [vmem:[#allocation2 + $0x10] sm:$0xf] %v1276
    %1279 = vst [vmem:[#allocation2 + $0x40] sm:$0xf] %v1277
    %s1280 = sshll.u32 %s400, 16
    %s1281 = sor.u32 %s400, %s1280
    %v1282 = vstv %s1281
    %v1284 = vunpack.c.l.bf16 %v1282
    %v1285 = vmul.f32 %v707, %v1284
    %v1286 = vmul.f32 %v708, %v1284
    %v1287 = vpack.c.bf16 %v1285, %v1285
    %v1288 = vpack.c.bf16 %v1286, %v1286
    %s1289 = sshll.u32 %s598, 16
    %s1290 = sor.u32 %s598, %s1289
    %v1291 = vstv %s1290
    %v1293 = vunpack.c.l.bf16 %v1291
    %v1294 = vmul.f32 %v718, %v1293
    %v1295 = vmul.f32 %v719, %v1293
    %v1296 = vpack.c.bf16 %v1294, %v1294
    %v1297 = vpack.c.bf16 %v1295, %v1295
    %v1298 = vunpack.c.l.bf16 %v1287
    %v1299 = vunpack.c.l.bf16 %v1288
    %v1300 = vunpack.c.l.bf16 %v1296
    %v1301 = vunpack.c.l.bf16 %v1297
    %v1302 = vadd.f32 %v1298, %v1300
    %v1303 = vadd.f32 %v1299, %v1301
    %v1304 = vpack.c.bf16 %v1302, %v1302
    %v1305 = vpack.c.bf16 %v1303, %v1303
    %s1306 = sshll.u32 %s411, 16
    %s1307 = sor.u32 %s411, %s1306
    %v1308 = vstv %s1307
    %v1310 = vunpack.c.l.bf16 %v1308
    %v1311 = vmul.f32 %v737, %v1310
    %v1312 = vmul.f32 %v738, %v1310
    %v1313 = vpack.c.bf16 %v1311, %v1311
    %v1314 = vpack.c.bf16 %v1312, %v1312
    %v1315 = vunpack.c.l.bf16 %v1304
    %v1316 = vunpack.c.l.bf16 %v1305
    %v1317 = vunpack.c.l.bf16 %v1313
    %v1318 = vunpack.c.l.bf16 %v1314
    %v1319 = vadd.f32 %v1315, %v1317
    %v1320 = vadd.f32 %v1316, %v1318
    %v1321 = vpack.c.bf16 %v1319, %v1319
    %v1322 = vpack.c.bf16 %v1320, %v1320
    %s1323 = sshll.u32 %s609, 16
    %s1324 = sor.u32 %s609, %s1323
    %v1325 = vstv %s1324
    %v1327 = vunpack.c.l.bf16 %v1325
    %v1328 = vmul.f32 %v756, %v1327
    %v1329 = vmul.f32 %v757, %v1327
    %v1330 = vpack.c.bf16 %v1328, %v1328
    %v1331 = vpack.c.bf16 %v1329, %v1329
    %v1332 = vunpack.c.l.bf16 %v1321
    %v1333 = vunpack.c.l.bf16 %v1322
    %v1334 = vunpack.c.l.bf16 %v1330
    %v1335 = vunpack.c.l.bf16 %v1331
    %v1336 = vadd.f32 %v1332, %v1334
    %v1337 = vadd.f32 %v1333, %v1335
    %v1338 = vpack.c.bf16 %v1336, %v1336
    %v1339 = vpack.c.bf16 %v1337, %v1337
    %s1340 = sshll.u32 %s422, 16
    %s1341 = sor.u32 %s422, %s1340
    %v1342 = vstv %s1341
    %v1344 = vunpack.c.l.bf16 %v1342
    %v1345 = vmul.f32 %v775, %v1344
    %v1346 = vmul.f32 %v776, %v1344
    %v1347 = vpack.c.bf16 %v1345, %v1345
    %v1348 = vpack.c.bf16 %v1346, %v1346
    %v1349 = vunpack.c.l.bf16 %v1338
    %v1350 = vunpack.c.l.bf16 %v1339
    %v1351 = vunpack.c.l.bf16 %v1347
    %v1352 = vunpack.c.l.bf16 %v1348
    %v1353 = vadd.f32 %v1349, %v1351
    %v1354 = vadd.f32 %v1350, %v1352
    %v1355 = vpack.c.bf16 %v1353, %v1353
    %v1356 = vpack.c.bf16 %v1354, %v1354
    %s1357 = sshll.u32 %s620, 16
    %s1358 = sor.u32 %s620, %s1357
    %v1359 = vstv %s1358
    %v1361 = vunpack.c.l.bf16 %v1359
    %v1362 = vmul.f32 %v794, %v1361
    %v1363 = vmul.f32 %v795, %v1361
    %v1364 = vpack.c.bf16 %v1362, %v1362
    %v1365 = vpack.c.bf16 %v1363, %v1363
    %v1366 = vunpack.c.l.bf16 %v1355
    %v1367 = vunpack.c.l.bf16 %v1356
    %v1368 = vunpack.c.l.bf16 %v1364
    %v1369 = vunpack.c.l.bf16 %v1365
    %v1370 = vadd.f32 %v1366, %v1368
    %v1371 = vadd.f32 %v1367, %v1369
    %v1372 = vpack.c.bf16 %v1370, %v1370
    %v1373 = vpack.c.bf16 %v1371, %v1371
    %s1374 = sshll.u32 %s686, 16
    %s1375 = sor.u32 %s686, %s1374
    %v1376 = vstv %s1375
    %v1378 = vunpack.c.l.bf16 %v1372
    %v1379 = vunpack.c.l.bf16 %v1373
    %v1380 = vunpack.c.l.bf16 %v1376
    %v1381 = vadd.f32 %v1378, %v1380
    %v1382 = vadd.f32 %v1379, %v1380
    %v1383 = vpack.c.bf16 %v1381, %v1381
    %v1384 = vpack.c.bf16 %v1382, %v1382
    %v1385 = vunpack.c.l.bf16 %v1383
    %v1386 = vunpack.c.l.bf16 %v1384
    %v1387 = vtanh.pop %v1385
    %v1388 = vtanh.pop %v1386
    %v1389 = vpack.c.bf16 %v1387, %v1387
    %v1390 = vpack.c.bf16 %v1388, %v1388
    %1391 = vst [vmem:[#allocation2 + $0x14] sm:$0xf] %v1389
    %1392 = vst [vmem:[#allocation2 + $0x44] sm:$0xf] %v1390
    %v1393 = vld [vmem:[%s2] sm:$0xf]
    %v1394 = vld [vmem:[%s2 + $0x4] sm:$0xf]
    %s1395 = scalar_lea.vmem %s2, 8
    %v1396 = vld [vmem:[%s1395] sm:$0xf]
    %v1397 = vld [vmem:[%s1395 + $0x4] sm:$0xf]
    %s1398 = scalar_lea.vmem %s2, 16
    %v1399 = vld [vmem:[%s1398] sm:$0xf]
    %v1400 = vld [vmem:[%s1398 + $0x4] sm:$0xf]
    %v1401 = vld [vmem:[%s3] sm:$0xf]
    %v1402 = vld [vmem:[%s3 + $0x4] sm:$0xf]
    %s1403 = scalar_lea.vmem %s3, 8
    %v1404 = vld [vmem:[%s1403] sm:$0xf]
    %v1405 = vld [vmem:[%s1403 + $0x4] sm:$0xf]
    %s1406 = scalar_lea.vmem %s3, 16
    %v1407 = vld [vmem:[%s1406] sm:$0xf]
    %v1408 = vld [vmem:[%s1406 + $0x4] sm:$0xf]
    %v1409 = vunpack.c.l.bf16 %v1393
    %v1410 = vunpack.c.l.bf16 %v1394
    %v1411 = vmul.f32 %v1409, %v709
    %v1412 = vmul.f32 %v1410, %v709
    %v1413 = vpack.c.bf16 %v1411, %v1411
    %v1414 = vpack.c.bf16 %v1412, %v1412
    %v1415 = vunpack.c.l.bf16 %v1401
    %v1416 = vunpack.c.l.bf16 %v1402
    %v1417 = vmul.f32 %v1415, %v720
    %v1418 = vmul.f32 %v1416, %v720
    %v1419 = vpack.c.bf16 %v1417, %v1417
    %v1420 = vpack.c.bf16 %v1418, %v1418
    %v1421 = vunpack.c.l.bf16 %v1413
    %v1422 = vunpack.c.l.bf16 %v1414
    %v1423 = vunpack.c.l.bf16 %v1419
    %v1424 = vunpack.c.l.bf16 %v1420
    %v1425 = vadd.f32 %v1421, %v1423
    %v1426 = vadd.f32 %v1422, %v1424
    %v1427 = vpack.c.bf16 %v1425, %v1425
    %v1428 = vpack.c.bf16 %v1426, %v1426
    %v1429 = vunpack.c.l.bf16 %v1396
    %v1430 = vunpack.c.l.bf16 %v1397
    %v1431 = vmul.f32 %v1429, %v739
    %v1432 = vmul.f32 %v1430, %v739
    %v1433 = vpack.c.bf16 %v1431, %v1431
    %v1434 = vpack.c.bf16 %v1432, %v1432
    %v1435 = vunpack.c.l.bf16 %v1427
    %v1436 = vunpack.c.l.bf16 %v1428
    %v1437 = vunpack.c.l.bf16 %v1433
    %v1438 = vunpack.c.l.bf16 %v1434
    %v1439 = vadd.f32 %v1435, %v1437
    %v1440 = vadd.f32 %v1436, %v1438
    %v1441 = vpack.c.bf16 %v1439, %v1439
    %v1442 = vpack.c.bf16 %v1440, %v1440
    %v1443 = vunpack.c.l.bf16 %v1404
    %v1444 = vunpack.c.l.bf16 %v1405
    %v1445 = vmul.f32 %v1443, %v758
    %v1446 = vmul.f32 %v1444, %v758
    %v1447 = vpack.c.bf16 %v1445, %v1445
    %v1448 = vpack.c.bf16 %v1446, %v1446
    %v1449 = vunpack.c.l.bf16 %v1441
    %v1450 = vunpack.c.l.bf16 %v1442
    %v1451 = vunpack.c.l.bf16 %v1447
    %v1452 = vunpack.c.l.bf16 %v1448
    %v1453 = vadd.f32 %v1449, %v1451
    %v1454 = vadd.f32 %v1450, %v1452
    %v1455 = vpack.c.bf16 %v1453, %v1453
    %v1456 = vpack.c.bf16 %v1454, %v1454
    %v1457 = vunpack.c.l.bf16 %v1399
    %v1458 = vunpack.c.l.bf16 %v1400
    %v1459 = vmul.f32 %v1457, %v777
    %v1460 = vmul.f32 %v1458, %v777
    %v1461 = vpack.c.bf16 %v1459, %v1459
    %v1462 = vpack.c.bf16 %v1460, %v1460
    %v1463 = vunpack.c.l.bf16 %v1455
    %v1464 = vunpack.c.l.bf16 %v1456
    %v1465 = vunpack.c.l.bf16 %v1461
    %v1466 = vunpack.c.l.bf16 %v1462
    %v1467 = vadd.f32 %v1463, %v1465
    %v1468 = vadd.f32 %v1464, %v1466
    %v1469 = vpack.c.bf16 %v1467, %v1467
    %v1470 = vpack.c.bf16 %v1468, %v1468
    %v1471 = vunpack.c.l.bf16 %v1407
    %v1472 = vunpack.c.l.bf16 %v1408
    %v1473 = vmul.f32 %v1471, %v796
    %v1474 = vmul.f32 %v1472, %v796
    %v1475 = vpack.c.bf16 %v1473, %v1473
    %v1476 = vpack.c.bf16 %v1474, %v1474
    %v1477 = vunpack.c.l.bf16 %v1469
    %v1478 = vunpack.c.l.bf16 %v1470
    %v1479 = vunpack.c.l.bf16 %v1475
    %v1480 = vunpack.c.l.bf16 %v1476
    %v1481 = vadd.f32 %v1477, %v1479
    %v1482 = vadd.f32 %v1478, %v1480
    %v1483 = vpack.c.bf16 %v1481, %v1481
    %v1484 = vpack.c.bf16 %v1482, %v1482
    %v1485 = vunpack.c.l.bf16 %v1483
    %v1486 = vunpack.c.l.bf16 %v1484
    %v1487 = vadd.f32 %v1485, %v815
    %v1488 = vadd.f32 %v1486, %v815
    %v1489 = vpack.c.bf16 %v1487, %v1487
    %v1490 = vpack.c.bf16 %v1488, %v1488
    %v1491 = vunpack.c.l.bf16 %v1489
    %v1492 = vunpack.c.l.bf16 %v1490
    %v1493 = vtanh.pop %v1491
    %v1494 = vtanh.pop %v1492
    %v1495 = vpack.c.bf16 %v1493, %v1493
    %v1496 = vpack.c.bf16 %v1494, %v1494
    %1497 = vst [vmem:[#allocation2 + $0x18] sm:$0xf] %v1495
    %1498 = vst [vmem:[#allocation2 + $0x48] sm:$0xf] %v1496
    %v1499 = vmul.f32 %v1409, %v832
    %v1500 = vmul.f32 %v1410, %v832
    %v1501 = vpack.c.bf16 %v1499, %v1499
    %v1502 = vpack.c.bf16 %v1500, %v1500
    %v1503 = vmul.f32 %v1415, %v841
    %v1504 = vmul.f32 %v1416, %v841
    %v1505 = vpack.c.bf16 %v1503, %v1503
    %v1506 = vpack.c.bf16 %v1504, %v1504
    %v1507 = vunpack.c.l.bf16 %v1501
    %v1508 = vunpack.c.l.bf16 %v1502
    %v1509 = vunpack.c.l.bf16 %v1505
    %v1510 = vunpack.c.l.bf16 %v1506
    %v1511 = vadd.f32 %v1507, %v1509
    %v1512 = vadd.f32 %v1508, %v1510
    %v1513 = vpack.c.bf16 %v1511, %v1511
    %v1514 = vpack.c.bf16 %v1512, %v1512
    %v1515 = vmul.f32 %v1429, %v858
    %v1516 = vmul.f32 %v1430, %v858
    %v1517 = vpack.c.bf16 %v1515, %v1515
    %v1518 = vpack.c.bf16 %v1516, %v1516
    %v1519 = vunpack.c.l.bf16 %v1513
    %v1520 = vunpack.c.l.bf16 %v1514
    %v1521 = vunpack.c.l.bf16 %v1517
    %v1522 = vunpack.c.l.bf16 %v1518
    %v1523 = vadd.f32 %v1519, %v1521
    %v1524 = vadd.f32 %v1520, %v1522
    %v1525 = vpack.c.bf16 %v1523, %v1523
    %v1526 = vpack.c.bf16 %v1524, %v1524
    %v1527 = vmul.f32 %v1443, %v875
    %v1528 = vmul.f32 %v1444, %v875
    %v1529 = vpack.c.bf16 %v1527, %v1527
    %v1530 = vpack.c.bf16 %v1528, %v1528
    %v1531 = vunpack.c.l.bf16 %v1525
    %v1532 = vunpack.c.l.bf16 %v1526
    %v1533 = vunpack.c.l.bf16 %v1529
    %v1534 = vunpack.c.l.bf16 %v1530
    %v1535 = vadd.f32 %v1531, %v1533
    %v1536 = vadd.f32 %v1532, %v1534
    %v1537 = vpack.c.bf16 %v1535, %v1535
    %v1538 = vpack.c.bf16 %v1536, %v1536
    %v1539 = vmul.f32 %v1457, %v892
    %v1540 = vmul.f32 %v1458, %v892
    %v1541 = vpack.c.bf16 %v1539, %v1539
    %v1542 = vpack.c.bf16 %v1540, %v1540
    %v1543 = vunpack.c.l.bf16 %v1537
    %v1544 = vunpack.c.l.bf16 %v1538
    %v1545 = vunpack.c.l.bf16 %v1541
    %v1546 = vunpack.c.l.bf16 %v1542
    %v1547 = vadd.f32 %v1543, %v1545
    %v1548 = vadd.f32 %v1544, %v1546
    %v1549 = vpack.c.bf16 %v1547, %v1547
    %v1550 = vpack.c.bf16 %v1548, %v1548
    %v1551 = vmul.f32 %v1471, %v909
    %v1552 = vmul.f32 %v1472, %v909
    %v1553 = vpack.c.bf16 %v1551, %v1551
    %v1554 = vpack.c.bf16 %v1552, %v1552
    %v1555 = vunpack.c.l.bf16 %v1549
    %v1556 = vunpack.c.l.bf16 %v1550
    %v1557 = vunpack.c.l.bf16 %v1553
    %v1558 = vunpack.c.l.bf16 %v1554
    %v1559 = vadd.f32 %v1555, %v1557
    %v1560 = vadd.f32 %v1556, %v1558
    %v1561 = vpack.c.bf16 %v1559, %v1559
    %v1562 = vpack.c.bf16 %v1560, %v1560
    %v1563 = vunpack.c.l.bf16 %v1561
    %v1564 = vunpack.c.l.bf16 %v1562
    %v1565 = vadd.f32 %v1563, %v928
    %v1566 = vadd.f32 %v1564, %v928
    %v1567 = vpack.c.bf16 %v1565, %v1565
    %v1568 = vpack.c.bf16 %v1566, %v1566
    %v1569 = vunpack.c.l.bf16 %v1567
    %v1570 = vunpack.c.l.bf16 %v1568
    %v1571 = vtanh.pop %v1569
    %v1572 = vtanh.pop %v1570
    %v1573 = vpack.c.bf16 %v1571, %v1571
    %v1574 = vpack.c.bf16 %v1572, %v1572
    %1575 = vst [vmem:[#allocation2 + $0x1c] sm:$0xf] %v1573
    %1576 = vst [vmem:[#allocation2 + $0x4c] sm:$0xf] %v1574
    %v1577 = vmul.f32 %v1409, %v945
    %v1578 = vmul.f32 %v1410, %v945
    %v1579 = vpack.c.bf16 %v1577, %v1577
    %v1580 = vpack.c.bf16 %v1578, %v1578
    %v1581 = vmul.f32 %v1415, %v954
    %v1582 = vmul.f32 %v1416, %v954
    %v1583 = vpack.c.bf16 %v1581, %v1581
    %v1584 = vpack.c.bf16 %v1582, %v1582
    %v1585 = vunpack.c.l.bf16 %v1579
    %v1586 = vunpack.c.l.bf16 %v1580
    %v1587 = vunpack.c.l.bf16 %v1583
    %v1588 = vunpack.c.l.bf16 %v1584
    %v1589 = vadd.f32 %v1585, %v1587
    %v1590 = vadd.f32 %v1586, %v1588
    %v1591 = vpack.c.bf16 %v1589, %v1589
    %v1592 = vpack.c.bf16 %v1590, %v1590
    %v1593 = vmul.f32 %v1429, %v971
    %v1594 = vmul.f32 %v1430, %v971
    %v1595 = vpack.c.bf16 %v1593, %v1593
    %v1596 = vpack.c.bf16 %v1594, %v1594
    %v1597 = vunpack.c.l.bf16 %v1591
    %v1598 = vunpack.c.l.bf16 %v1592
    %v1599 = vunpack.c.l.bf16 %v1595
    %v1600 = vunpack.c.l.bf16 %v1596
    %v1601 = vadd.f32 %v1597, %v1599
    %v1602 = vadd.f32 %v1598, %v1600
    %v1603 = vpack.c.bf16 %v1601, %v1601
    %v1604 = vpack.c.bf16 %v1602, %v1602
    %v1605 = vmul.f32 %v1443, %v988
    %v1606 = vmul.f32 %v1444, %v988
    %v1607 = vpack.c.bf16 %v1605, %v1605
    %v1608 = vpack.c.bf16 %v1606, %v1606
    %v1609 = vunpack.c.l.bf16 %v1603
    %v1610 = vunpack.c.l.bf16 %v1604
    %v1611 = vunpack.c.l.bf16 %v1607
    %v1612 = vunpack.c.l.bf16 %v1608
    %v1613 = vadd.f32 %v1609, %v1611
    %v1614 = vadd.f32 %v1610, %v1612
    %v1615 = vpack.c.bf16 %v1613, %v1613
    %v1616 = vpack.c.bf16 %v1614, %v1614
    %v1617 = vmul.f32 %v1457, %v1005
    %v1618 = vmul.f32 %v1458, %v1005
    %v1619 = vpack.c.bf16 %v1617, %v1617
    %v1620 = vpack.c.bf16 %v1618, %v1618
    %v1621 = vunpack.c.l.bf16 %v1615
    %v1622 = vunpack.c.l.bf16 %v1616
    %v1623 = vunpack.c.l.bf16 %v1619
    %v1624 = vunpack.c.l.bf16 %v1620
    %v1625 = vadd.f32 %v1621, %v1623
    %v1626 = vadd.f32 %v1622, %v1624
    %v1627 = vpack.c.bf16 %v1625, %v1625
    %v1628 = vpack.c.bf16 %v1626, %v1626
    %v1629 = vmul.f32 %v1471, %v1022
    %v1630 = vmul.f32 %v1472, %v1022
    %v1631 = vpack.c.bf16 %v1629, %v1629
    %v1632 = vpack.c.bf16 %v1630, %v1630
    %v1633 = vunpack.c.l.bf16 %v1627
    %v1634 = vunpack.c.l.bf16 %v1628
    %v1635 = vunpack.c.l.bf16 %v1631
    %v1636 = vunpack.c.l.bf16 %v1632
    %v1637 = vadd.f32 %v1633, %v1635
    %v1638 = vadd.f32 %v1634, %v1636
    %v1639 = vpack.c.bf16 %v1637, %v1637
    %v1640 = vpack.c.bf16 %v1638, %v1638
    %v1641 = vunpack.c.l.bf16 %v1639
    %v1642 = vunpack.c.l.bf16 %v1640
    %v1643 = vadd.f32 %v1641, %v1041
    %v1644 = vadd.f32 %v1642, %v1041
    %v1645 = vpack.c.bf16 %v1643, %v1643
    %v1646 = vpack.c.bf16 %v1644, %v1644
    %v1647 = vunpack.c.l.bf16 %v1645
    %v1648 = vunpack.c.l.bf16 %v1646
    %v1649 = vtanh.pop %v1647
    %v1650 = vtanh.pop %v1648
    %v1651 = vpack.c.bf16 %v1649, %v1649
    %v1652 = vpack.c.bf16 %v1650, %v1650
    %1653 = vst [vmem:[#allocation2 + $0x20] sm:$0xf] %v1651
    %1654 = vst [vmem:[#allocation2 + $0x50] sm:$0xf] %v1652
    %v1655 = vmul.f32 %v1409, %v1058
    %v1656 = vmul.f32 %v1410, %v1058
    %v1657 = vpack.c.bf16 %v1655, %v1655
    %v1658 = vpack.c.bf16 %v1656, %v1656
    %v1659 = vmul.f32 %v1415, %v1067
    %v1660 = vmul.f32 %v1416, %v1067
    %v1661 = vpack.c.bf16 %v1659, %v1659
    %v1662 = vpack.c.bf16 %v1660, %v1660
    %v1663 = vunpack.c.l.bf16 %v1657
    %v1664 = vunpack.c.l.bf16 %v1658
    %v1665 = vunpack.c.l.bf16 %v1661
    %v1666 = vunpack.c.l.bf16 %v1662
    %v1667 = vadd.f32 %v1663, %v1665
    %v1668 = vadd.f32 %v1664, %v1666
    %v1669 = vpack.c.bf16 %v1667, %v1667
    %v1670 = vpack.c.bf16 %v1668, %v1668
    %v1671 = vmul.f32 %v1429, %v1084
    %v1672 = vmul.f32 %v1430, %v1084
    %v1673 = vpack.c.bf16 %v1671, %v1671
    %v1674 = vpack.c.bf16 %v1672, %v1672
    %v1675 = vunpack.c.l.bf16 %v1669
    %v1676 = vunpack.c.l.bf16 %v1670
    %v1677 = vunpack.c.l.bf16 %v1673
    %v1678 = vunpack.c.l.bf16 %v1674
    %v1679 = vadd.f32 %v1675, %v1677
    %v1680 = vadd.f32 %v1676, %v1678
    %v1681 = vpack.c.bf16 %v1679, %v1679
    %v1682 = vpack.c.bf16 %v1680, %v1680
    %v1683 = vmul.f32 %v1443, %v1101
    %v1684 = vmul.f32 %v1444, %v1101
    %v1685 = vpack.c.bf16 %v1683, %v1683
    %v1686 = vpack.c.bf16 %v1684, %v1684
    %v1687 = vunpack.c.l.bf16 %v1681
    %v1688 = vunpack.c.l.bf16 %v1682
    %v1689 = vunpack.c.l.bf16 %v1685
    %v1690 = vunpack.c.l.bf16 %v1686
    %v1691 = vadd.f32 %v1687, %v1689
    %v1692 = vadd.f32 %v1688, %v1690
    %v1693 = vpack.c.bf16 %v1691, %v1691
    %v1694 = vpack.c.bf16 %v1692, %v1692
    %v1695 = vmul.f32 %v1457, %v1118
    %v1696 = vmul.f32 %v1458, %v1118
    %v1697 = vpack.c.bf16 %v1695, %v1695
    %v1698 = vpack.c.bf16 %v1696, %v1696
    %v1699 = vunpack.c.l.bf16 %v1693
    %v1700 = vunpack.c.l.bf16 %v1694
    %v1701 = vunpack.c.l.bf16 %v1697
    %v1702 = vunpack.c.l.bf16 %v1698
    %v1703 = vadd.f32 %v1699, %v1701
    %v1704 = vadd.f32 %v1700, %v1702
    %v1705 = vpack.c.bf16 %v1703, %v1703
    %v1706 = vpack.c.bf16 %v1704, %v1704
    %v1707 = vmul.f32 %v1471, %v1135
    %v1708 = vmul.f32 %v1472, %v1135
    %v1709 = vpack.c.bf16 %v1707, %v1707
    %v1710 = vpack.c.bf16 %v1708, %v1708
    %v1711 = vunpack.c.l.bf16 %v1705
    %v1712 = vunpack.c.l.bf16 %v1706
    %v1713 = vunpack.c.l.bf16 %v1709
    %v1714 = vunpack.c.l.bf16 %v1710
    %v1715 = vadd.f32 %v1711, %v1713
    %v1716 = vadd.f32 %v1712, %v1714
    %v1717 = vpack.c.bf16 %v1715, %v1715
    %v1718 = vpack.c.bf16 %v1716, %v1716
    %v1719 = vunpack.c.l.bf16 %v1717
    %v1720 = vunpack.c.l.bf16 %v1718
    %v1721 = vadd.f32 %v1719, %v1154
    %v1722 = vadd.f32 %v1720, %v1154
    %v1723 = vpack.c.bf16 %v1721, %v1721
    %v1724 = vpack.c.bf16 %v1722, %v1722
    %v1725 = vunpack.c.l.bf16 %v1723
    %v1726 = vunpack.c.l.bf16 %v1724
    %v1727 = vtanh.pop %v1725
    %v1728 = vtanh.pop %v1726
    %v1729 = vpack.c.bf16 %v1727, %v1727
    %v1730 = vpack.c.bf16 %v1728, %v1728
    %1731 = vst [vmem:[#allocation2 + $0x24] sm:$0xf] %v1729
    %1732 = vst [vmem:[#allocation2 + $0x54] sm:$0xf] %v1730
    %v1733 = vmul.f32 %v1409, %v1171
    %v1734 = vmul.f32 %v1410, %v1171
    %v1735 = vpack.c.bf16 %v1733, %v1733
    %v1736 = vpack.c.bf16 %v1734, %v1734
    %v1737 = vmul.f32 %v1415, %v1180
    %v1738 = vmul.f32 %v1416, %v1180
    %v1739 = vpack.c.bf16 %v1737, %v1737
    %v1740 = vpack.c.bf16 %v1738, %v1738
    %v1741 = vunpack.c.l.bf16 %v1735
    %v1742 = vunpack.c.l.bf16 %v1736
    %v1743 = vunpack.c.l.bf16 %v1739
    %v1744 = vunpack.c.l.bf16 %v1740
    %v1745 = vadd.f32 %v1741, %v1743
    %v1746 = vadd.f32 %v1742, %v1744
    %v1747 = vpack.c.bf16 %v1745, %v1745
    %v1748 = vpack.c.bf16 %v1746, %v1746
    %v1749 = vmul.f32 %v1429, %v1197
    %v1750 = vmul.f32 %v1430, %v1197
    %v1751 = vpack.c.bf16 %v1749, %v1749
    %v1752 = vpack.c.bf16 %v1750, %v1750
    %v1753 = vunpack.c.l.bf16 %v1747
    %v1754 = vunpack.c.l.bf16 %v1748
    %v1755 = vunpack.c.l.bf16 %v1751
    %v1756 = vunpack.c.l.bf16 %v1752
    %v1757 = vadd.f32 %v1753, %v1755
    %v1758 = vadd.f32 %v1754, %v1756
    %v1759 = vpack.c.bf16 %v1757, %v1757
    %v1760 = vpack.c.bf16 %v1758, %v1758
    %v1761 = vmul.f32 %v1443, %v1214
    %v1762 = vmul.f32 %v1444, %v1214
    %v1763 = vpack.c.bf16 %v1761, %v1761
    %v1764 = vpack.c.bf16 %v1762, %v1762
    %v1765 = vunpack.c.l.bf16 %v1759
    %v1766 = vunpack.c.l.bf16 %v1760
    %v1767 = vunpack.c.l.bf16 %v1763
    %v1768 = vunpack.c.l.bf16 %v1764
    %v1769 = vadd.f32 %v1765, %v1767
    %v1770 = vadd.f32 %v1766, %v1768
    %v1771 = vpack.c.bf16 %v1769, %v1769
    %v1772 = vpack.c.bf16 %v1770, %v1770
    %v1773 = vmul.f32 %v1457, %v1231
    %v1774 = vmul.f32 %v1458, %v1231
    %v1775 = vpack.c.bf16 %v1773, %v1773
    %v1776 = vpack.c.bf16 %v1774, %v1774
    %v1777 = vunpack.c.l.bf16 %v1771
    %v1778 = vunpack.c.l.bf16 %v1772
    %v1779 = vunpack.c.l.bf16 %v1775
    %v1780 = vunpack.c.l.bf16 %v1776
    %v1781 = vadd.f32 %v1777, %v1779
    %v1782 = vadd.f32 %v1778, %v1780
    %v1783 = vpack.c.bf16 %v1781, %v1781
    %v1784 = vpack.c.bf16 %v1782, %v1782
    %v1785 = vmul.f32 %v1471, %v1248
    %v1786 = vmul.f32 %v1472, %v1248
    %v1787 = vpack.c.bf16 %v1785, %v1785
    %v1788 = vpack.c.bf16 %v1786, %v1786
    %v1789 = vunpack.c.l.bf16 %v1783
    %v1790 = vunpack.c.l.bf16 %v1784
    %v1791 = vunpack.c.l.bf16 %v1787
    %v1792 = vunpack.c.l.bf16 %v1788
    %v1793 = vadd.f32 %v1789, %v1791
    %v1794 = vadd.f32 %v1790, %v1792
    %v1795 = vpack.c.bf16 %v1793, %v1793
    %v1796 = vpack.c.bf16 %v1794, %v1794
    %v1797 = vunpack.c.l.bf16 %v1795
    %v1798 = vunpack.c.l.bf16 %v1796
    %v1799 = vadd.f32 %v1797, %v1267
    %v1800 = vadd.f32 %v1798, %v1267
    %v1801 = vpack.c.bf16 %v1799, %v1799
    %v1802 = vpack.c.bf16 %v1800, %v1800
    %v1803 = vunpack.c.l.bf16 %v1801
    %v1804 = vunpack.c.l.bf16 %v1802
    %v1805 = vtanh.pop %v1803
    %v1806 = vtanh.pop %v1804
    %v1807 = vpack.c.bf16 %v1805, %v1805
    %v1808 = vpack.c.bf16 %v1806, %v1806
    %1809 = vst [vmem:[#allocation2 + $0x28] sm:$0xf] %v1807
    %1810 = vst [vmem:[#allocation2 + $0x58] sm:$0xf] %v1808
    %v1811 = vmul.f32 %v1409, %v1284
    %v1812 = vmul.f32 %v1410, %v1284
    %v1813 = vpack.c.bf16 %v1811, %v1811
    %v1814 = vpack.c.bf16 %v1812, %v1812
    %v1815 = vmul.f32 %v1415, %v1293
    %v1816 = vmul.f32 %v1416, %v1293
    %v1817 = vpack.c.bf16 %v1815, %v1815
    %v1818 = vpack.c.bf16 %v1816, %v1816
    %v1819 = vunpack.c.l.bf16 %v1813
    %v1820 = vunpack.c.l.bf16 %v1814
    %v1821 = vunpack.c.l.bf16 %v1817
    %v1822 = vunpack.c.l.bf16 %v1818
    %v1823 = vadd.f32 %v1819, %v1821
    %v1824 = vadd.f32 %v1820, %v1822
    %v1825 = vpack.c.bf16 %v1823, %v1823
    %v1826 = vpack.c.bf16 %v1824, %v1824
    %v1827 = vmul.f32 %v1429, %v1310
    %v1828 = vmul.f32 %v1430, %v1310
    %v1829 = vpack.c.bf16 %v1827, %v1827
    %v1830 = vpack.c.bf16 %v1828, %v1828
    %v1831 = vunpack.c.l.bf16 %v1825
    %v1832 = vunpack.c.l.bf16 %v1826
    %v1833 = vunpack.c.l.bf16 %v1829
    %v1834 = vunpack.c.l.bf16 %v1830
    %v1835 = vadd.f32 %v1831, %v1833
    %v1836 = vadd.f32 %v1832, %v1834
    %v1837 = vpack.c.bf16 %v1835, %v1835
    %v1838 = vpack.c.bf16 %v1836, %v1836
    %v1839 = vmul.f32 %v1443, %v1327
    %v1840 = vmul.f32 %v1444, %v1327
    %v1841 = vpack.c.bf16 %v1839, %v1839
    %v1842 = vpack.c.bf16 %v1840, %v1840
    %v1843 = vunpack.c.l.bf16 %v1837
    %v1844 = vunpack.c.l.bf16 %v1838
    %v1845 = vunpack.c.l.bf16 %v1841
    %v1846 = vunpack.c.l.bf16 %v1842
    %v1847 = vadd.f32 %v1843, %v1845
    %v1848 = vadd.f32 %v1844, %v1846
    %v1849 = vpack.c.bf16 %v1847, %v1847
    %v1850 = vpack.c.bf16 %v1848, %v1848
    %v1851 = vmul.f32 %v1457, %v1344
    %v1852 = vmul.f32 %v1458, %v1344
    %v1853 = vpack.c.bf16 %v1851, %v1851
    %v1854 = vpack.c.bf16 %v1852, %v1852
    %v1855 = vunpack.c.l.bf16 %v1849
    %v1856 = vunpack.c.l.bf16 %v1850
    %v1857 = vunpack.c.l.bf16 %v1853
    %v1858 = vunpack.c.l.bf16 %v1854
    %v1859 = vadd.f32 %v1855, %v1857
    %v1860 = vadd.f32 %v1856, %v1858
    %v1861 = vpack.c.bf16 %v1859, %v1859
    %v1862 = vpack.c.bf16 %v1860, %v1860
    %v1863 = vmul.f32 %v1471, %v1361
    %v1864 = vmul.f32 %v1472, %v1361
    %v1865 = vpack.c.bf16 %v1863, %v1863
    %v1866 = vpack.c.bf16 %v1864, %v1864
    %v1867 = vunpack.c.l.bf16 %v1861
    %v1868 = vunpack.c.l.bf16 %v1862
    %v1869 = vunpack.c.l.bf16 %v1865
    %v1870 = vunpack.c.l.bf16 %v1866
    %v1871 = vadd.f32 %v1867, %v1869
    %v1872 = vadd.f32 %v1868, %v1870
    %v1873 = vpack.c.bf16 %v1871, %v1871
    %v1874 = vpack.c.bf16 %v1872, %v1872
    %v1875 = vunpack.c.l.bf16 %v1873
    %v1876 = vunpack.c.l.bf16 %v1874
    %v1877 = vadd.f32 %v1875, %v1380
    %v1878 = vadd.f32 %v1876, %v1380
    %v1879 = vpack.c.bf16 %v1877, %v1877
    %v1880 = vpack.c.bf16 %v1878, %v1878
    %v1881 = vunpack.c.l.bf16 %v1879
    %v1882 = vunpack.c.l.bf16 %v1880
    %v1883 = vtanh.pop %v1881
    %v1884 = vtanh.pop %v1882
    %v1885 = vpack.c.bf16 %v1883, %v1883
    %v1886 = vpack.c.bf16 %v1884, %v1884
    %1887 = vst [vmem:[#allocation2 + $0x2c] sm:$0xf] %v1885
    %1888 = vst [vmem:[#allocation2 + $0x5c] sm:$0xf] %v1886
    %v1889 = vld [vmem:[#allocation2] sm:$0xff]
    %v1890 = vld [vmem:[#allocation2 + $0x8] sm:$0xff]
    %v1891 = vld [vmem:[#allocation2 + $0x10] sm:$0xff]
    %v1892 = vld [vmem:[#allocation2 + $0x18] sm:$0xff]
    %v1893 = vld [vmem:[#allocation2 + $0x20] sm:$0xff]
    %v1894 = vld [vmem:[#allocation2 + $0x28] sm:$0xff]
    %v1895 = vld [vmem:[#allocation2 + $0x30] sm:$0xff]
    %v1896 = vld [vmem:[#allocation2 + $0x38] sm:$0xff]
    %v1897 = vld [vmem:[#allocation2 + $0x40] sm:$0xff]
    %v1898 = vld [vmem:[#allocation2 + $0x48] sm:$0xff]
    %v1899 = vld [vmem:[#allocation2 + $0x50] sm:$0xff]
    %v1900 = vld [vmem:[#allocation2 + $0x58] sm:$0xff]
    %v1901 = vld [vmem:[#allocation10] sm:$0xff]
    %v1902 = vld [vmem:[#allocation10 + $0x8] sm:$0xff]
    %v1903 = vld [vmem:[#allocation10 + $0x10] sm:$0xff]
    %v1904 = vld [vmem:[#allocation10 + $0x18] sm:$0xff]
    %v1905 = vld [vmem:[#allocation10 + $0x20] sm:$0xff]
    %v1906 = vld [vmem:[#allocation10 + $0x28] sm:$0xff]
    %v1907 = vld [vmem:[#allocation10 + $0x30] sm:$0xff]
    %v1908 = vld [vmem:[#allocation10 + $0x38] sm:$0xff]
    %v1909 = vld [vmem:[#allocation10 + $0x40] sm:$0xff]
    %v1910 = vld [vmem:[#allocation10 + $0x48] sm:$0xff]
    %v1911 = vld [vmem:[#allocation10 + $0x50] sm:$0xff]
    %v1912 = vld [vmem:[#allocation10 + $0x58] sm:$0xff]
    %v1913 = vld [vmem:[#allocation10 + $0x60] sm:$0xff]
    %v1914 = vld [vmem:[#allocation10 + $0x68] sm:$0xff]
    %v1915 = vld [vmem:[#allocation10 + $0x70] sm:$0xff]
    %v1916 = vld [vmem:[#allocation10 + $0x78] sm:$0xff]
    %v1917 = vld [vmem:[#allocation10 + $0x80] sm:$0xff]
    %v1918 = vld [vmem:[#allocation10 + $0x88] sm:$0xff]
    %v1919 = vld [vmem:[#allocation10 + $0x90] sm:$0xff]
    %v1920 = vld [vmem:[#allocation10 + $0x98] sm:$0xff]
    %v1921 = vld [vmem:[#allocation10 + $0xa0] sm:$0xff]
    %v1922 = vld [vmem:[#allocation10 + $0xa8] sm:$0xff]
    %v1923 = vld [vmem:[#allocation10 + $0xb0] sm:$0xff]
    %v1924 = vld [vmem:[#allocation10 + $0xb8] sm:$0xff]
    %v1925 = vld [vmem:[#allocation10 + $0xc0] sm:$0xff]
    %v1926 = vld [vmem:[#allocation10 + $0xc8] sm:$0xff]
    %v1927 = vld [vmem:[#allocation10 + $0xd0] sm:$0xff]
    %v1928 = vld [vmem:[#allocation10 + $0xd8] sm:$0xff]
    %v1929 = vld [vmem:[#allocation10 + $0xe0] sm:$0xff]
    %v1930 = vld [vmem:[#allocation10 + $0xe8] sm:$0xff]
    %v1931 = vld [vmem:[#allocation10 + $0xf0] sm:$0xff]
    %v1932 = vld [vmem:[#allocation10 + $0xf8] sm:$0xff]
    %v1933 = vld [vmem:[#allocation10 + $0x100] sm:$0xff]
    %v1934 = vld [vmem:[#allocation10 + $0x108] sm:$0xff]
    %v1935 = vld [vmem:[#allocation10 + $0x110] sm:$0xff]
    %v1936 = vld [vmem:[#allocation10 + $0x118] sm:$0xff]
    %v1937 = vld [vmem:[#allocation10 + $0x120] sm:$0xff]
    %v1938 = vld [vmem:[#allocation10 + $0x128] sm:$0xff]
    %v1939 = vld [vmem:[#allocation10 + $0x130] sm:$0xff]
    %v1940 = vld [vmem:[#allocation10 + $0x138] sm:$0xff]
    %v1941 = vld [vmem:[#allocation10 + $0x140] sm:$0xff]
    %v1942 = vld [vmem:[#allocation10 + $0x148] sm:$0xff]
    %v1943 = vld [vmem:[#allocation10 + $0x150] sm:$0xff]
    %v1944 = vld [vmem:[#allocation10 + $0x158] sm:$0xff]
    %v1945 = vld [vmem:[#allocation10 + $0x160] sm:$0xff]
    %v1946 = vld [vmem:[#allocation10 + $0x168] sm:$0xff]
    %v1947 = vld [vmem:[#allocation10 + $0x170] sm:$0xff]
    %v1948 = vld [vmem:[#allocation10 + $0x178] sm:$0xff]
    %v1949 = vld [vmem:[#allocation10 + $0x180] sm:$0xff]
    %v1950 = vld [vmem:[#allocation10 + $0x188] sm:$0xff]
    %v1951 = vld [vmem:[#allocation10 + $0x190] sm:$0xff]
    %v1952 = vld [vmem:[#allocation10 + $0x198] sm:$0xff]
    %v1953 = vld [vmem:[#allocation10 + $0x1a0] sm:$0xff]
    %v1954 = vld [vmem:[#allocation10 + $0x1a8] sm:$0xff]
    %v1955 = vld [vmem:[#allocation10 + $0x1b0] sm:$0xff]
    %v1956 = vld [vmem:[#allocation10 + $0x1b8] sm:$0xff]
    %v1957 = vld [vmem:[#allocation10 + $0x1c0] sm:$0xff]
    %v1958 = vld [vmem:[#allocation10 + $0x1c8] sm:$0xff]
    %v1959 = vld [vmem:[#allocation10 + $0x1d0] sm:$0xff]
    %v1960 = vld [vmem:[#allocation10 + $0x1d8] sm:$0xff]
    %v1961 = vld [vmem:[#allocation10 + $0x1e0] sm:$0xff]
    %v1962 = vld [vmem:[#allocation10 + $0x1e8] sm:$0xff]
    %v1963 = vld [vmem:[#allocation10 + $0x1f0] sm:$0xff]
    %v1964 = vld [vmem:[#allocation10 + $0x1f8] sm:$0xff]
    %v1965 = vld [vmem:[#allocation10 + $0x200] sm:$0xff]
    %v1966 = vld [vmem:[#allocation10 + $0x208] sm:$0xff]
    %v1967 = vld [vmem:[#allocation10 + $0x210] sm:$0xff]
    %v1968 = vld [vmem:[#allocation10 + $0x218] sm:$0xff]
    %v1969 = vld [vmem:[#allocation10 + $0x220] sm:$0xff]
    %v1970 = vld [vmem:[#allocation10 + $0x228] sm:$0xff]
    %v1971 = vld [vmem:[#allocation10 + $0x230] sm:$0xff]
    %v1972 = vld [vmem:[#allocation10 + $0x238] sm:$0xff]
    %v1973 = vld [vmem:[#allocation10 + $0x240] sm:$0xff]
    %v1974 = vld [vmem:[#allocation10 + $0x248] sm:$0xff]
    %v1975 = vld [vmem:[#allocation10 + $0x250] sm:$0xff]
    %v1976 = vld [vmem:[#allocation10 + $0x258] sm:$0xff]
    %v1977 = vld [vmem:[#allocation10 + $0x260] sm:$0xff]
    %v1978 = vld [vmem:[#allocation10 + $0x268] sm:$0xff]
    %v1979 = vld [vmem:[#allocation10 + $0x270] sm:$0xff]
    %v1980 = vld [vmem:[#allocation10 + $0x278] sm:$0xff]
    %v1981 = vld [vmem:[#allocation10 + $0x280] sm:$0xff]
    %v1982 = vld [vmem:[#allocation10 + $0x288] sm:$0xff]
    %v1983 = vld [vmem:[#allocation10 + $0x290] sm:$0xff]
    %v1984 = vld [vmem:[#allocation10 + $0x298] sm:$0xff]
    %v1985 = vld [vmem:[#allocation10 + $0x2a0] sm:$0xff]
    %v1986 = vld [vmem:[#allocation10 + $0x2a8] sm:$0xff]
    %v1987 = vld [vmem:[#allocation10 + $0x2b0] sm:$0xff]
    %v1988 = vld [vmem:[#allocation10 + $0x2b8] sm:$0xff]
    %v1989 = vld [vmem:[#allocation10 + $0x2c0] sm:$0xff]
    %v1990 = vld [vmem:[#allocation10 + $0x2c8] sm:$0xff]
    %v1991 = vld [vmem:[#allocation10 + $0x2d0] sm:$0xff]
    %v1992 = vld [vmem:[#allocation10 + $0x2d8] sm:$0xff]
    %v1993 = vld [vmem:[#allocation10 + $0x2e0] sm:$0xff]
    %v1994 = vld [vmem:[#allocation10 + $0x2e8] sm:$0xff]
    %v1995 = vld [vmem:[#allocation10 + $0x2f0] sm:$0xff]
    %v1996 = vld [vmem:[#allocation10 + $0x2f8] sm:$0xff]
    %v1997 = vld [vmem:[#allocation10 + $0x300] sm:$0xff]
    %v1998 = vld [vmem:[#allocation10 + $0x308] sm:$0xff]
    %v1999 = vld [vmem:[#allocation10 + $0x310] sm:$0xff]
    %v2000 = vld [vmem:[#allocation10 + $0x318] sm:$0xff]
    %v2001 = vld [vmem:[#allocation10 + $0x320] sm:$0xff]
    %v2002 = vld [vmem:[#allocation10 + $0x328] sm:$0xff]
    %v2003 = vld [vmem:[#allocation10 + $0x330] sm:$0xff]
    %v2004 = vld [vmem:[#allocation10 + $0x338] sm:$0xff]
    %v2005 = vld [vmem:[#allocation10 + $0x340] sm:$0xff]
    %v2006 = vld [vmem:[#allocation10 + $0x348] sm:$0xff]
    %v2007 = vld [vmem:[#allocation10 + $0x350] sm:$0xff]
    %v2008 = vld [vmem:[#allocation10 + $0x358] sm:$0xff]
    %v2009 = vld [vmem:[#allocation10 + $0x360] sm:$0xff]
    %v2010 = vld [vmem:[#allocation10 + $0x368] sm:$0xff]
    %v2011 = vld [vmem:[#allocation10 + $0x370] sm:$0xff]
    %v2012 = vld [vmem:[#allocation10 + $0x378] sm:$0xff]
    %v2013 = vld [vmem:[#allocation10 + $0x380] sm:$0xff]
    %v2014 = vld [vmem:[#allocation10 + $0x388] sm:$0xff]
    %v2015 = vld [vmem:[#allocation10 + $0x390] sm:$0xff]
    %v2016 = vld [vmem:[#allocation10 + $0x398] sm:$0xff]
    %v2017 = vld [vmem:[#allocation10 + $0x3a0] sm:$0xff]
    %v2018 = vld [vmem:[#allocation10 + $0x3a8] sm:$0xff]
    %v2019 = vld [vmem:[#allocation10 + $0x3b0] sm:$0xff]
    %v2020 = vld [vmem:[#allocation10 + $0x3b8] sm:$0xff]
    %v2021 = vld [vmem:[#allocation10 + $0x3c0] sm:$0xff]
    %v2022 = vld [vmem:[#allocation10 + $0x3c8] sm:$0xff]
    %v2023 = vld [vmem:[#allocation10 + $0x3d0] sm:$0xff]
    %v2024 = vld [vmem:[#allocation10 + $0x3d8] sm:$0xff]
    %v2025 = vld [vmem:[#allocation10 + $0x3e0] sm:$0xff]
    %v2026 = vld [vmem:[#allocation10 + $0x3e8] sm:$0xff]
    %v2027 = vld [vmem:[#allocation10 + $0x3f0] sm:$0xff]
    %v2028 = vld [vmem:[#allocation10 + $0x3f8] sm:$0xff]
    %v2029 = vld [vmem:[#allocation10 + $0x400] sm:$0xff]
    %v2030 = vld [vmem:[#allocation10 + $0x408] sm:$0xff]
    %v2031 = vld [vmem:[#allocation10 + $0x410] sm:$0xff]
    %v2032 = vld [vmem:[#allocation10 + $0x418] sm:$0xff]
    %v2033 = vld [vmem:[#allocation10 + $0x420] sm:$0xff]
    %v2034 = vld [vmem:[#allocation10 + $0x428] sm:$0xff]
    %v2035 = vld [vmem:[#allocation10 + $0x430] sm:$0xff]
    %v2036 = vld [vmem:[#allocation10 + $0x438] sm:$0xff]
    %v2037 = vld [vmem:[#allocation10 + $0x440] sm:$0xff]
    %v2038 = vld [vmem:[#allocation10 + $0x448] sm:$0xff]
    %v2039 = vld [vmem:[#allocation10 + $0x450] sm:$0xff]
    %v2040 = vld [vmem:[#allocation10 + $0x458] sm:$0xff]
    %v2041 = vld [vmem:[#allocation10 + $0x460] sm:$0xff]
    %v2042 = vld [vmem:[#allocation10 + $0x468] sm:$0xff]
    %v2043 = vld [vmem:[#allocation10 + $0x470] sm:$0xff]
    %v2044 = vld [vmem:[#allocation10 + $0x478] sm:$0xff]
    %v2045 = vld [vmem:[#allocation10 + $0x480] sm:$0xff]
    %v2046 = vld [vmem:[#allocation10 + $0x488] sm:$0xff]
    %v2047 = vld [vmem:[#allocation10 + $0x490] sm:$0xff]
    %v2048 = vld [vmem:[#allocation10 + $0x498] sm:$0xff]
    %v2049 = vld [vmem:[#allocation10 + $0x4a0] sm:$0xff]
    %v2050 = vld [vmem:[#allocation10 + $0x4a8] sm:$0xff]
    %v2051 = vld [vmem:[#allocation10 + $0x4b0] sm:$0xff]
    %v2052 = vld [vmem:[#allocation10 + $0x4b8] sm:$0xff]
    %v2053 = vld [vmem:[#allocation10 + $0x4c0] sm:$0xff]
    %v2054 = vld [vmem:[#allocation10 + $0x4c8] sm:$0xff]
    %v2055 = vld [vmem:[#allocation10 + $0x4d0] sm:$0xff]
    %v2056 = vld [vmem:[#allocation10 + $0x4d8] sm:$0xff]
    %v2057 = vld [vmem:[#allocation10 + $0x4e0] sm:$0xff]
    %v2058 = vld [vmem:[#allocation10 + $0x4e8] sm:$0xff]
    %v2059 = vld [vmem:[#allocation10 + $0x4f0] sm:$0xff]
    %v2060 = vld [vmem:[#allocation10 + $0x4f8] sm:$0xff]
    %v2061 = vld [vmem:[#allocation10 + $0x500] sm:$0xff]
    %v2062 = vld [vmem:[#allocation10 + $0x508] sm:$0xff]
    %v2063 = vld [vmem:[#allocation10 + $0x510] sm:$0xff]
    %v2064 = vld [vmem:[#allocation10 + $0x518] sm:$0xff]
    %v2065 = vld [vmem:[#allocation10 + $0x520] sm:$0xff]
    %v2066 = vld [vmem:[#allocation10 + $0x528] sm:$0xff]
    %v2067 = vld [vmem:[#allocation10 + $0x530] sm:$0xff]
    %v2068 = vld [vmem:[#allocation10 + $0x538] sm:$0xff]
    %v2069 = vld [vmem:[#allocation10 + $0x540] sm:$0xff]
    %v2070 = vld [vmem:[#allocation10 + $0x548] sm:$0xff]
    %v2071 = vld [vmem:[#allocation10 + $0x550] sm:$0xff]
    %v2072 = vld [vmem:[#allocation10 + $0x558] sm:$0xff]
    %v2073 = vld [vmem:[#allocation10 + $0x560] sm:$0xff]
    %v2074 = vld [vmem:[#allocation10 + $0x568] sm:$0xff]
    %v2075 = vld [vmem:[#allocation10 + $0x570] sm:$0xff]
    %v2076 = vld [vmem:[#allocation10 + $0x578] sm:$0xff]
    %v2077 = vld [vmem:[#allocation10 + $0x580] sm:$0xff]
    %v2078 = vld [vmem:[#allocation10 + $0x588] sm:$0xff]
    %v2079 = vld [vmem:[#allocation10 + $0x590] sm:$0xff]
    %v2080 = vld [vmem:[#allocation10 + $0x598] sm:$0xff]
    %v2081 = vld [vmem:[#allocation10 + $0x5a0] sm:$0xff]
    %v2082 = vld [vmem:[#allocation10 + $0x5a8] sm:$0xff]
    %v2083 = vld [vmem:[#allocation10 + $0x5b0] sm:$0xff]
    %v2084 = vld [vmem:[#allocation10 + $0x5b8] sm:$0xff]
    %v2085 = vld [vmem:[#allocation10 + $0x5c0] sm:$0xff]
    %v2086 = vld [vmem:[#allocation10 + $0x5c8] sm:$0xff]
    %v2087 = vld [vmem:[#allocation10 + $0x5d0] sm:$0xff]
    %v2088 = vld [vmem:[#allocation10 + $0x5d8] sm:$0xff]
    %v2089 = vld [vmem:[#allocation10 + $0x5e0] sm:$0xff]
    %v2090 = vld [vmem:[#allocation10 + $0x5e8] sm:$0xff]
    %v2091 = vld [vmem:[#allocation10 + $0x5f0] sm:$0xff]
    %v2092 = vld [vmem:[#allocation10 + $0x5f8] sm:$0xff]
    %v2093 = vld [vmem:[#allocation10 + $0x600] sm:$0xff]
    %v2094 = vld [vmem:[#allocation10 + $0x608] sm:$0xff]
    %v2095 = vld [vmem:[#allocation10 + $0x610] sm:$0xff]
    %v2096 = vld [vmem:[#allocation10 + $0x618] sm:$0xff]
    %v2097 = vld [vmem:[#allocation10 + $0x620] sm:$0xff]
    %v2098 = vld [vmem:[#allocation10 + $0x628] sm:$0xff]
    %v2099 = vld [vmem:[#allocation10 + $0x630] sm:$0xff]
    %v2100 = vld [vmem:[#allocation10 + $0x638] sm:$0xff]
    %v2101 = vld [vmem:[#allocation10 + $0x640] sm:$0xff]
    %v2102 = vld [vmem:[#allocation10 + $0x648] sm:$0xff]
    %v2103 = vld [vmem:[#allocation10 + $0x650] sm:$0xff]
    %v2104 = vld [vmem:[#allocation10 + $0x658] sm:$0xff]
    %v2105 = vld [vmem:[#allocation10 + $0x660] sm:$0xff]
    %v2106 = vld [vmem:[#allocation10 + $0x668] sm:$0xff]
    %v2107 = vld [vmem:[#allocation10 + $0x670] sm:$0xff]
    %v2108 = vld [vmem:[#allocation10 + $0x678] sm:$0xff]
    %v2109 = vld [vmem:[#allocation10 + $0x680] sm:$0xff]
    %v2110 = vld [vmem:[#allocation10 + $0x688] sm:$0xff]
    %v2111 = vld [vmem:[#allocation10 + $0x690] sm:$0xff]
    %v2112 = vld [vmem:[#allocation10 + $0x698] sm:$0xff]
    %v2113 = vld [vmem:[#allocation10 + $0x6a0] sm:$0xff]
    %v2114 = vld [vmem:[#allocation10 + $0x6a8] sm:$0xff]
    %v2115 = vld [vmem:[#allocation10 + $0x6b0] sm:$0xff]
    %v2116 = vld [vmem:[#allocation10 + $0x6b8] sm:$0xff]
    %v2117 = vld [vmem:[#allocation10 + $0x6c0] sm:$0xff]
    %v2118 = vld [vmem:[#allocation10 + $0x6c8] sm:$0xff]
    %v2119 = vld [vmem:[#allocation10 + $0x6d0] sm:$0xff]
    %v2120 = vld [vmem:[#allocation10 + $0x6d8] sm:$0xff]
    %v2121 = vld [vmem:[#allocation10 + $0x6e0] sm:$0xff]
    %v2122 = vld [vmem:[#allocation10 + $0x6e8] sm:$0xff]
    %v2123 = vld [vmem:[#allocation10 + $0x6f0] sm:$0xff]
    %v2124 = vld [vmem:[#allocation10 + $0x6f8] sm:$0xff]
    %v2125 = vld [vmem:[#allocation10 + $0x700] sm:$0xff]
    %v2126 = vld [vmem:[#allocation10 + $0x708] sm:$0xff]
    %v2127 = vld [vmem:[#allocation10 + $0x710] sm:$0xff]
    %v2128 = vld [vmem:[#allocation10 + $0x718] sm:$0xff]
    %v2129 = vld [vmem:[#allocation10 + $0x720] sm:$0xff]
    %v2130 = vld [vmem:[#allocation10 + $0x728] sm:$0xff]
    %v2131 = vld [vmem:[#allocation10 + $0x730] sm:$0xff]
    %v2132 = vld [vmem:[#allocation10 + $0x738] sm:$0xff]
    %v2133 = vld [vmem:[#allocation10 + $0x740] sm:$0xff]
    %v2134 = vld [vmem:[#allocation10 + $0x748] sm:$0xff]
    %v2135 = vld [vmem:[#allocation10 + $0x750] sm:$0xff]
    %v2136 = vld [vmem:[#allocation10 + $0x758] sm:$0xff]
    %v2137 = vld [vmem:[#allocation10 + $0x760] sm:$0xff]
    %v2138 = vld [vmem:[#allocation10 + $0x768] sm:$0xff]
    %v2139 = vld [vmem:[#allocation10 + $0x770] sm:$0xff]
    %v2140 = vld [vmem:[#allocation10 + $0x778] sm:$0xff]
    %v2141 = vld [vmem:[#allocation10 + $0x780] sm:$0xff]
    %v2142 = vld [vmem:[#allocation10 + $0x788] sm:$0xff]
    %v2143 = vld [vmem:[#allocation10 + $0x790] sm:$0xff]
    %v2144 = vld [vmem:[#allocation10 + $0x798] sm:$0xff]
    %v2145 = vld [vmem:[#allocation10 + $0x7a0] sm:$0xff]
    %v2146 = vld [vmem:[#allocation10 + $0x7a8] sm:$0xff]
    %v2147 = vld [vmem:[#allocation10 + $0x7b0] sm:$0xff]
    %v2148 = vld [vmem:[#allocation10 + $0x7b8] sm:$0xff]
    %v2149 = vld [vmem:[#allocation10 + $0x7c0] sm:$0xff]
    %v2150 = vld [vmem:[#allocation10 + $0x7c8] sm:$0xff]
    %v2151 = vld [vmem:[#allocation10 + $0x7d0] sm:$0xff]
    %v2152 = vld [vmem:[#allocation10 + $0x7d8] sm:$0xff]
    %v2153 = vld [vmem:[#allocation10 + $0x7e0] sm:$0xff]
    %v2154 = vld [vmem:[#allocation10 + $0x7e8] sm:$0xff]
    %v2155 = vld [vmem:[#allocation10 + $0x7f0] sm:$0xff]
    %v2156 = vld [vmem:[#allocation10 + $0x7f8] sm:$0xff]
    %v2157 = vld [vmem:[#allocation10 + $0x800] sm:$0xff]
    %v2158 = vld [vmem:[#allocation10 + $0x808] sm:$0xff]
    %v2159 = vld [vmem:[#allocation10 + $0x810] sm:$0xff]
    %v2160 = vld [vmem:[#allocation10 + $0x818] sm:$0xff]
    %v2161 = vld [vmem:[#allocation10 + $0x820] sm:$0xff]
    %v2162 = vld [vmem:[#allocation10 + $0x828] sm:$0xff]
    %v2163 = vld [vmem:[#allocation10 + $0x830] sm:$0xff]
    %v2164 = vld [vmem:[#allocation10 + $0x838] sm:$0xff]
    %v2165 = vld [vmem:[#allocation10 + $0x840] sm:$0xff]
    %v2166 = vld [vmem:[#allocation10 + $0x848] sm:$0xff]
    %v2167 = vld [vmem:[#allocation10 + $0x850] sm:$0xff]
    %v2168 = vld [vmem:[#allocation10 + $0x858] sm:$0xff]
    %v2169 = vld [vmem:[#allocation10 + $0x860] sm:$0xff]
    %v2170 = vld [vmem:[#allocation10 + $0x868] sm:$0xff]
    %v2171 = vld [vmem:[#allocation10 + $0x870] sm:$0xff]
    %v2172 = vld [vmem:[#allocation10 + $0x878] sm:$0xff]
    %v2173 = vld [vmem:[#allocation10 + $0x880] sm:$0xff]
    %v2174 = vld [vmem:[#allocation10 + $0x888] sm:$0xff]
    %v2175 = vld [vmem:[#allocation10 + $0x890] sm:$0xff]
    %v2176 = vld [vmem:[#allocation10 + $0x898] sm:$0xff]
    %v2177 = vld [vmem:[#allocation10 + $0x8a0] sm:$0xff]
    %v2178 = vld [vmem:[#allocation10 + $0x8a8] sm:$0xff]
    %v2179 = vld [vmem:[#allocation10 + $0x8b0] sm:$0xff]
    %v2180 = vld [vmem:[#allocation10 + $0x8b8] sm:$0xff]
    %v2181 = vld [vmem:[#allocation10 + $0x8c0] sm:$0xff]
    %v2182 = vld [vmem:[#allocation10 + $0x8c8] sm:$0xff]
    %v2183 = vld [vmem:[#allocation10 + $0x8d0] sm:$0xff]
    %v2184 = vld [vmem:[#allocation10 + $0x8d8] sm:$0xff]
    %v2185 = vld [vmem:[#allocation10 + $0x8e0] sm:$0xff]
    %v2186 = vld [vmem:[#allocation10 + $0x8e8] sm:$0xff]
    %v2187 = vld [vmem:[#allocation10 + $0x8f0] sm:$0xff]
    %v2188 = vld [vmem:[#allocation10 + $0x8f8] sm:$0xff]
    %v2189 = vld [vmem:[#allocation10 + $0x900] sm:$0xff]
    %v2190 = vld [vmem:[#allocation10 + $0x908] sm:$0xff]
    %v2191 = vld [vmem:[#allocation10 + $0x910] sm:$0xff]
    %v2192 = vld [vmem:[#allocation10 + $0x918] sm:$0xff]
    %v2193 = vld [vmem:[#allocation10 + $0x920] sm:$0xff]
    %v2194 = vld [vmem:[#allocation10 + $0x928] sm:$0xff]
    %v2195 = vld [vmem:[#allocation10 + $0x930] sm:$0xff]
    %v2196 = vld [vmem:[#allocation10 + $0x938] sm:$0xff]
    %v2197 = vld [vmem:[#allocation10 + $0x940] sm:$0xff]
    %v2198 = vld [vmem:[#allocation10 + $0x948] sm:$0xff]
    %v2199 = vld [vmem:[#allocation10 + $0x950] sm:$0xff]
    %v2200 = vld [vmem:[#allocation10 + $0x958] sm:$0xff]
    %v2201 = vld [vmem:[#allocation10 + $0x960] sm:$0xff]
    %v2202 = vld [vmem:[#allocation10 + $0x968] sm:$0xff]
    %v2203 = vld [vmem:[#allocation10 + $0x970] sm:$0xff]
    %v2204 = vld [vmem:[#allocation10 + $0x978] sm:$0xff]
    %v2205 = vld [vmem:[#allocation10 + $0x980] sm:$0xff]
    %v2206 = vld [vmem:[#allocation10 + $0x988] sm:$0xff]
    %v2207 = vld [vmem:[#allocation10 + $0x990] sm:$0xff]
    %v2208 = vld [vmem:[#allocation10 + $0x998] sm:$0xff]
    %v2209 = vld [vmem:[#allocation10 + $0x9a0] sm:$0xff]
    %v2210 = vld [vmem:[#allocation10 + $0x9a8] sm:$0xff]
    %v2211 = vld [vmem:[#allocation10 + $0x9b0] sm:$0xff]
    %v2212 = vld [vmem:[#allocation10 + $0x9b8] sm:$0xff]
    %v2213 = vld [vmem:[#allocation10 + $0x9c0] sm:$0xff]
    %v2214 = vld [vmem:[#allocation10 + $0x9c8] sm:$0xff]
    %v2215 = vld [vmem:[#allocation10 + $0x9d0] sm:$0xff]
    %v2216 = vld [vmem:[#allocation10 + $0x9d8] sm:$0xff]
    %v2217 = vld [vmem:[#allocation10 + $0x9e0] sm:$0xff]
    %v2218 = vld [vmem:[#allocation10 + $0x9e8] sm:$0xff]
    %v2219 = vld [vmem:[#allocation10 + $0x9f0] sm:$0xff]
    %v2220 = vld [vmem:[#allocation10 + $0x9f8] sm:$0xff]
    %v2221 = vld [vmem:[#allocation10 + $0xa00] sm:$0xff]
    %v2222 = vld [vmem:[#allocation10 + $0xa08] sm:$0xff]
    %v2223 = vld [vmem:[#allocation10 + $0xa10] sm:$0xff]
    %v2224 = vld [vmem:[#allocation10 + $0xa18] sm:$0xff]
    %v2225 = vld [vmem:[#allocation10 + $0xa20] sm:$0xff]
    %v2226 = vld [vmem:[#allocation10 + $0xa28] sm:$0xff]
    %v2227 = vld [vmem:[#allocation10 + $0xa30] sm:$0xff]
    %v2228 = vld [vmem:[#allocation10 + $0xa38] sm:$0xff]
    %v2229 = vld [vmem:[#allocation10 + $0xa40] sm:$0xff]
    %v2230 = vld [vmem:[#allocation10 + $0xa48] sm:$0xff]
    %v2231 = vld [vmem:[#allocation10 + $0xa50] sm:$0xff]
    %v2232 = vld [vmem:[#allocation10 + $0xa58] sm:$0xff]
    %v2233 = vld [vmem:[#allocation10 + $0xa60] sm:$0xff]
    %v2234 = vld [vmem:[#allocation10 + $0xa68] sm:$0xff]
    %v2235 = vld [vmem:[#allocation10 + $0xa70] sm:$0xff]
    %v2236 = vld [vmem:[#allocation10 + $0xa78] sm:$0xff]
    %v2237 = vld [vmem:[#allocation10 + $0xa80] sm:$0xff]
    %v2238 = vld [vmem:[#allocation10 + $0xa88] sm:$0xff]
    %v2239 = vld [vmem:[#allocation10 + $0xa90] sm:$0xff]
    %v2240 = vld [vmem:[#allocation10 + $0xa98] sm:$0xff]
    %v2241 = vld [vmem:[#allocation10 + $0xaa0] sm:$0xff]
    %v2242 = vld [vmem:[#allocation10 + $0xaa8] sm:$0xff]
    %v2243 = vld [vmem:[#allocation10 + $0xab0] sm:$0xff]
    %v2244 = vld [vmem:[#allocation10 + $0xab8] sm:$0xff]
    %v2245 = vld [vmem:[#allocation10 + $0xac0] sm:$0xff]
    %v2246 = vld [vmem:[#allocation10 + $0xac8] sm:$0xff]
    %v2247 = vld [vmem:[#allocation10 + $0xad0] sm:$0xff]
    %v2248 = vld [vmem:[#allocation10 + $0xad8] sm:$0xff]
    %v2249 = vld [vmem:[#allocation10 + $0xae0] sm:$0xff]
    %v2250 = vld [vmem:[#allocation10 + $0xae8] sm:$0xff]
    %v2251 = vld [vmem:[#allocation10 + $0xaf0] sm:$0xff]
    %v2252 = vld [vmem:[#allocation10 + $0xaf8] sm:$0xff]
    %v2253 = vld [vmem:[#allocation10 + $0xb00] sm:$0xff]
    %v2254 = vld [vmem:[#allocation10 + $0xb08] sm:$0xff]
    %v2255 = vld [vmem:[#allocation10 + $0xb10] sm:$0xff]
    %v2256 = vld [vmem:[#allocation10 + $0xb18] sm:$0xff]
    %v2257 = vld [vmem:[#allocation10 + $0xb20] sm:$0xff]
    %v2258 = vld [vmem:[#allocation10 + $0xb28] sm:$0xff]
    %v2259 = vld [vmem:[#allocation10 + $0xb30] sm:$0xff]
    %v2260 = vld [vmem:[#allocation10 + $0xb38] sm:$0xff]
    %v2261 = vld [vmem:[#allocation10 + $0xb40] sm:$0xff]
    %v2262 = vld [vmem:[#allocation10 + $0xb48] sm:$0xff]
    %v2263 = vld [vmem:[#allocation10 + $0xb50] sm:$0xff]
    %v2264 = vld [vmem:[#allocation10 + $0xb58] sm:$0xff]
    %v2265 = vld [vmem:[#allocation10 + $0xb60] sm:$0xff]
    %v2266 = vld [vmem:[#allocation10 + $0xb68] sm:$0xff]
    %v2267 = vld [vmem:[#allocation10 + $0xb70] sm:$0xff]
    %v2268 = vld [vmem:[#allocation10 + $0xb78] sm:$0xff]
    %v2269 = vld [vmem:[#allocation10 + $0xb80] sm:$0xff]
    %v2270 = vld [vmem:[#allocation10 + $0xb88] sm:$0xff]
    %v2271 = vld [vmem:[#allocation10 + $0xb90] sm:$0xff]
    %v2272 = vld [vmem:[#allocation10 + $0xb98] sm:$0xff]
    %v2273 = vld [vmem:[#allocation10 + $0xba0] sm:$0xff]
    %v2274 = vld [vmem:[#allocation10 + $0xba8] sm:$0xff]
    %v2275 = vld [vmem:[#allocation10 + $0xbb0] sm:$0xff]
    %v2276 = vld [vmem:[#allocation10 + $0xbb8] sm:$0xff]
    %v2277 = vld [vmem:[#allocation10 + $0xbc0] sm:$0xff]
    %v2278 = vld [vmem:[#allocation10 + $0xbc8] sm:$0xff]
    %v2279 = vld [vmem:[#allocation10 + $0xbd0] sm:$0xff]
    %v2280 = vld [vmem:[#allocation10 + $0xbd8] sm:$0xff]
    %v2281 = vld [vmem:[#allocation10 + $0xbe0] sm:$0xff]
    %v2282 = vld [vmem:[#allocation10 + $0xbe8] sm:$0xff]
    %v2283 = vld [vmem:[#allocation10 + $0xbf0] sm:$0xff]
    %v2284 = vld [vmem:[#allocation10 + $0xbf8] sm:$0xff]
    %v2285 = vld [vmem:[#allocation11] sm:$0xf]
    %v2287 = vperm.slane %v2285, 0
    %v2288 = vperm.slane %v2285, 1
    %v2289 = vperm.slane %v2285, 2
    %v2290 = vperm.slane %v2285, 3
    %v2307 = vunpack.c.l.b16 %v1889
    %v2308 = vunpack.c.h.b16 %v1889
    %v2309 = vunpack.c.l.b16 %v1890
    %v2310 = vunpack.c.h.b16 %v1890
    %v2311 = vunpack.c.l.b16 %v1891
    %v2312 = vunpack.c.h.b16 %v1891
    %v2313 = vunpack.c.l.b16 %v1892
    %v2314 = vunpack.c.h.b16 %v1892
    %v2315 = vunpack.c.l.b16 %v1893
    %v2316 = vunpack.c.h.b16 %v1893
    %v2317 = vunpack.c.l.b16 %v1894
    %v2318 = vunpack.c.h.b16 %v1894
    %v2319 = vunpack.c.l.b16 %v1895
    %v2320 = vunpack.c.h.b16 %v1895
    %v2321 = vunpack.c.l.b16 %v1896
    %v2322 = vunpack.c.h.b16 %v1896
    %v2323 = vunpack.c.l.b16 %v1897
    %v2324 = vunpack.c.h.b16 %v1897
    %v2325 = vunpack.c.l.b16 %v1898
    %v2326 = vunpack.c.h.b16 %v1898
    %v2327 = vunpack.c.l.b16 %v1899
    %v2328 = vunpack.c.h.b16 %v1899
    %v2329 = vunpack.c.l.b16 %v1900
    %v2330 = vunpack.c.h.b16 %v1900
    %v2331 = vpack.c.b16 %v2319, %v2307
    %v2332 = vpack.c.b16 %v2320, %v2308
    %v2333 = vpack.c.b16 %v2321, %v2309
    %v2334 = vpack.c.b16 %v2322, %v2310
    %v2335 = vpack.c.b16 %v2323, %v2311
    %v2336 = vpack.c.b16 %v2324, %v2312
    %v2337 = vpack.c.b16 %v2325, %v2313
    %v2338 = vpack.c.b16 %v2326, %v2314
    %v2339 = vpack.c.b16 %v2327, %v2315
    %v2340 = vpack.c.b16 %v2328, %v2316
    %v2341 = vpack.c.b16 %v2329, %v2317
    %v2342 = vpack.c.b16 %v2330, %v2318
    %v2739 = vunpack.c.l.b16 %v1901
    %v2740 = vunpack.c.h.b16 %v1901
    %v2741 = vunpack.c.l.b16 %v1902
    %v2742 = vunpack.c.h.b16 %v1902
    %v2743 = vunpack.c.l.b16 %v1903
    %v2744 = vunpack.c.h.b16 %v1903
    %v2745 = vunpack.c.l.b16 %v1904
    %v2746 = vunpack.c.h.b16 %v1904
    %v2747 = vunpack.c.l.b16 %v1905
    %v2748 = vunpack.c.h.b16 %v1905
    %v2749 = vunpack.c.l.b16 %v1906
    %v2750 = vunpack.c.h.b16 %v1906
    %v2751 = vunpack.c.l.b16 %v1907
    %v2752 = vunpack.c.h.b16 %v1907
    %v2753 = vunpack.c.l.b16 %v1908
    %v2754 = vunpack.c.h.b16 %v1908
    %v2755 = vunpack.c.l.b16 %v1909
    %v2756 = vunpack.c.h.b16 %v1909
    %v2757 = vunpack.c.l.b16 %v1910
    %v2758 = vunpack.c.h.b16 %v1910
    %v2759 = vunpack.c.l.b16 %v1911
    %v2760 = vunpack.c.h.b16 %v1911
    %v2761 = vunpack.c.l.b16 %v1912
    %v2762 = vunpack.c.h.b16 %v1912
    %v2763 = vunpack.c.l.b16 %v1913
    %v2764 = vunpack.c.h.b16 %v1913
    %v2765 = vunpack.c.l.b16 %v1914
    %v2766 = vunpack.c.h.b16 %v1914
    %v2767 = vunpack.c.l.b16 %v1915
    %v2768 = vunpack.c.h.b16 %v1915
    %v2769 = vunpack.c.l.b16 %v1916
    %v2770 = vunpack.c.h.b16 %v1916
    %v2771 = vunpack.c.l.b16 %v1917
    %v2772 = vunpack.c.h.b16 %v1917
    %v2773 = vunpack.c.l.b16 %v1918
    %v2774 = vunpack.c.h.b16 %v1918
    %v2775 = vunpack.c.l.b16 %v1919
    %v2776 = vunpack.c.h.b16 %v1919
    %v2777 = vunpack.c.l.b16 %v1920
    %v2778 = vunpack.c.h.b16 %v1920
    %v2779 = vunpack.c.l.b16 %v1921
    %v2780 = vunpack.c.h.b16 %v1921
    %v2781 = vunpack.c.l.b16 %v1922
    %v2782 = vunpack.c.h.b16 %v1922
    %v2783 = vunpack.c.l.b16 %v1923
    %v2784 = vunpack.c.h.b16 %v1923
    %v2785 = vunpack.c.l.b16 %v1924
    %v2786 = vunpack.c.h.b16 %v1924
    %v2787 = vunpack.c.l.b16 %v1925
    %v2788 = vunpack.c.h.b16 %v1925
    %v2789 = vunpack.c.l.b16 %v1926
    %v2790 = vunpack.c.h.b16 %v1926
    %v2791 = vunpack.c.l.b16 %v1927
    %v2792 = vunpack.c.h.b16 %v1927
    %v2793 = vunpack.c.l.b16 %v1928
    %v2794 = vunpack.c.h.b16 %v1928
    %v2795 = vunpack.c.l.b16 %v1929
    %v2796 = vunpack.c.h.b16 %v1929
    %v2797 = vunpack.c.l.b16 %v1930
    %v2798 = vunpack.c.h.b16 %v1930
    %v2799 = vunpack.c.l.b16 %v1931
    %v2800 = vunpack.c.h.b16 %v1931
    %v2801 = vunpack.c.l.b16 %v1932
    %v2802 = vunpack.c.h.b16 %v1932
    %v2803 = vunpack.c.l.b16 %v1933
    %v2804 = vunpack.c.h.b16 %v1933
    %v2805 = vunpack.c.l.b16 %v1934
    %v2806 = vunpack.c.h.b16 %v1934
    %v2807 = vunpack.c.l.b16 %v1935
    %v2808 = vunpack.c.h.b16 %v1935
    %v2809 = vunpack.c.l.b16 %v1936
    %v2810 = vunpack.c.h.b16 %v1936
    %v2811 = vunpack.c.l.b16 %v1937
    %v2812 = vunpack.c.h.b16 %v1937
    %v2813 = vunpack.c.l.b16 %v1938
    %v2814 = vunpack.c.h.b16 %v1938
    %v2815 = vunpack.c.l.b16 %v1939
    %v2816 = vunpack.c.h.b16 %v1939
    %v2817 = vunpack.c.l.b16 %v1940
    %v2818 = vunpack.c.h.b16 %v1940
    %v2819 = vunpack.c.l.b16 %v1941
    %v2820 = vunpack.c.h.b16 %v1941
    %v2821 = vunpack.c.l.b16 %v1942
    %v2822 = vunpack.c.h.b16 %v1942
    %v2823 = vunpack.c.l.b16 %v1943
    %v2824 = vunpack.c.h.b16 %v1943
    %v2825 = vunpack.c.l.b16 %v1944
    %v2826 = vunpack.c.h.b16 %v1944
    %v2827 = vunpack.c.l.b16 %v1945
    %v2828 = vunpack.c.h.b16 %v1945
    %v2829 = vunpack.c.l.b16 %v1946
    %v2830 = vunpack.c.h.b16 %v1946
    %v2831 = vunpack.c.l.b16 %v1947
    %v2832 = vunpack.c.h.b16 %v1947
    %v2833 = vunpack.c.l.b16 %v1948
    %v2834 = vunpack.c.h.b16 %v1948
    %v2835 = vunpack.c.l.b16 %v1949
    %v2836 = vunpack.c.h.b16 %v1949
    %v2837 = vunpack.c.l.b16 %v1950
    %v2838 = vunpack.c.h.b16 %v1950
    %v2839 = vunpack.c.l.b16 %v1951
    %v2840 = vunpack.c.h.b16 %v1951
    %v2841 = vunpack.c.l.b16 %v1952
    %v2842 = vunpack.c.h.b16 %v1952
    %v2843 = vunpack.c.l.b16 %v1953
    %v2844 = vunpack.c.h.b16 %v1953
    %v2845 = vunpack.c.l.b16 %v1954
    %v2846 = vunpack.c.h.b16 %v1954
    %v2847 = vunpack.c.l.b16 %v1955
    %v2848 = vunpack.c.h.b16 %v1955
    %v2849 = vunpack.c.l.b16 %v1956
    %v2850 = vunpack.c.h.b16 %v1956
    %v2851 = vunpack.c.l.b16 %v1957
    %v2852 = vunpack.c.h.b16 %v1957
    %v2853 = vunpack.c.l.b16 %v1958
    %v2854 = vunpack.c.h.b16 %v1958
    %v2855 = vunpack.c.l.b16 %v1959
    %v2856 = vunpack.c.h.b16 %v1959
    %v2857 = vunpack.c.l.b16 %v1960
    %v2858 = vunpack.c.h.b16 %v1960
    %v2859 = vunpack.c.l.b16 %v1961
    %v2860 = vunpack.c.h.b16 %v1961
    %v2861 = vunpack.c.l.b16 %v1962
    %v2862 = vunpack.c.h.b16 %v1962
    %v2863 = vunpack.c.l.b16 %v1963
    %v2864 = vunpack.c.h.b16 %v1963
    %v2865 = vunpack.c.l.b16 %v1964
    %v2866 = vunpack.c.h.b16 %v1964
    %v2867 = vunpack.c.l.b16 %v1965
    %v2868 = vunpack.c.h.b16 %v1965
    %v2869 = vunpack.c.l.b16 %v1966
    %v2870 = vunpack.c.h.b16 %v1966
    %v2871 = vunpack.c.l.b16 %v1967
    %v2872 = vunpack.c.h.b16 %v1967
    %v2873 = vunpack.c.l.b16 %v1968
    %v2874 = vunpack.c.h.b16 %v1968
    %v2875 = vunpack.c.l.b16 %v1969
    %v2876 = vunpack.c.h.b16 %v1969
    %v2877 = vunpack.c.l.b16 %v1970
    %v2878 = vunpack.c.h.b16 %v1970
    %v2879 = vunpack.c.l.b16 %v1971
    %v2880 = vunpack.c.h.b16 %v1971
    %v2881 = vunpack.c.l.b16 %v1972
    %v2882 = vunpack.c.h.b16 %v1972
    %v2883 = vunpack.c.l.b16 %v1973
    %v2884 = vunpack.c.h.b16 %v1973
    %v2885 = vunpack.c.l.b16 %v1974
    %v2886 = vunpack.c.h.b16 %v1974
    %v2887 = vunpack.c.l.b16 %v1975
    %v2888 = vunpack.c.h.b16 %v1975
    %v2889 = vunpack.c.l.b16 %v1976
    %v2890 = vunpack.c.h.b16 %v1976
    %v2891 = vunpack.c.l.b16 %v1977
    %v2892 = vunpack.c.h.b16 %v1977
    %v2893 = vunpack.c.l.b16 %v1978
    %v2894 = vunpack.c.h.b16 %v1978
    %v2895 = vunpack.c.l.b16 %v1979
    %v2896 = vunpack.c.h.b16 %v1979
    %v2897 = vunpack.c.l.b16 %v1980
    %v2898 = vunpack.c.h.b16 %v1980
    %v2899 = vunpack.c.l.b16 %v1981
    %v2900 = vunpack.c.h.b16 %v1981
    %v2901 = vunpack.c.l.b16 %v1982
    %v2902 = vunpack.c.h.b16 %v1982
    %v2903 = vunpack.c.l.b16 %v1983
    %v2904 = vunpack.c.h.b16 %v1983
    %v2905 = vunpack.c.l.b16 %v1984
    %v2906 = vunpack.c.h.b16 %v1984
    %v2907 = vunpack.c.l.b16 %v1985
    %v2908 = vunpack.c.h.b16 %v1985
    %v2909 = vunpack.c.l.b16 %v1986
    %v2910 = vunpack.c.h.b16 %v1986
    %v2911 = vunpack.c.l.b16 %v1987
    %v2912 = vunpack.c.h.b16 %v1987
    %v2913 = vunpack.c.l.b16 %v1988
    %v2914 = vunpack.c.h.b16 %v1988
    %v2915 = vunpack.c.l.b16 %v1989
    %v2916 = vunpack.c.h.b16 %v1989
    %v2917 = vunpack.c.l.b16 %v1990
    %v2918 = vunpack.c.h.b16 %v1990
    %v2919 = vunpack.c.l.b16 %v1991
    %v2920 = vunpack.c.h.b16 %v1991
    %v2921 = vunpack.c.l.b16 %v1992
    %v2922 = vunpack.c.h.b16 %v1992
    %v2923 = vunpack.c.l.b16 %v1993
    %v2924 = vunpack.c.h.b16 %v1993
    %v2925 = vunpack.c.l.b16 %v1994
    %v2926 = vunpack.c.h.b16 %v1994
    %v2927 = vunpack.c.l.b16 %v1995
    %v2928 = vunpack.c.h.b16 %v1995
    %v2929 = vunpack.c.l.b16 %v1996
    %v2930 = vunpack.c.h.b16 %v1996
    %v2931 = vunpack.c.l.b16 %v1997
    %v2932 = vunpack.c.h.b16 %v1997
    %v2933 = vunpack.c.l.b16 %v1998
    %v2934 = vunpack.c.h.b16 %v1998
    %v2935 = vunpack.c.l.b16 %v1999
    %v2936 = vunpack.c.h.b16 %v1999
    %v2937 = vunpack.c.l.b16 %v2000
    %v2938 = vunpack.c.h.b16 %v2000
    %v2939 = vunpack.c.l.b16 %v2001
    %v2940 = vunpack.c.h.b16 %v2001
    %v2941 = vunpack.c.l.b16 %v2002
    %v2942 = vunpack.c.h.b16 %v2002
    %v2943 = vunpack.c.l.b16 %v2003
    %v2944 = vunpack.c.h.b16 %v2003
    %v2945 = vunpack.c.l.b16 %v2004
    %v2946 = vunpack.c.h.b16 %v2004
    %v2947 = vunpack.c.l.b16 %v2005
    %v2948 = vunpack.c.h.b16 %v2005
    %v2949 = vunpack.c.l.b16 %v2006
    %v2950 = vunpack.c.h.b16 %v2006
    %v2951 = vunpack.c.l.b16 %v2007
    %v2952 = vunpack.c.h.b16 %v2007
    %v2953 = vunpack.c.l.b16 %v2008
    %v2954 = vunpack.c.h.b16 %v2008
    %v2955 = vunpack.c.l.b16 %v2009
    %v2956 = vunpack.c.h.b16 %v2009
    %v2957 = vunpack.c.l.b16 %v2010
    %v2958 = vunpack.c.h.b16 %v2010
    %v2959 = vunpack.c.l.b16 %v2011
    %v2960 = vunpack.c.h.b16 %v2011
    %v2961 = vunpack.c.l.b16 %v2012
    %v2962 = vunpack.c.h.b16 %v2012
    %v2963 = vunpack.c.l.b16 %v2013
    %v2964 = vunpack.c.h.b16 %v2013
    %v2965 = vunpack.c.l.b16 %v2014
    %v2966 = vunpack.c.h.b16 %v2014
    %v2967 = vunpack.c.l.b16 %v2015
    %v2968 = vunpack.c.h.b16 %v2015
    %v2969 = vunpack.c.l.b16 %v2016
    %v2970 = vunpack.c.h.b16 %v2016
    %v2971 = vunpack.c.l.b16 %v2017
    %v2972 = vunpack.c.h.b16 %v2017
    %v2973 = vunpack.c.l.b16 %v2018
    %v2974 = vunpack.c.h.b16 %v2018
    %v2975 = vunpack.c.l.b16 %v2019
    %v2976 = vunpack.c.h.b16 %v2019
    %v2977 = vunpack.c.l.b16 %v2020
    %v2978 = vunpack.c.h.b16 %v2020
    %v2979 = vunpack.c.l.b16 %v2021
    %v2980 = vunpack.c.h.b16 %v2021
    %v2981 = vunpack.c.l.b16 %v2022
    %v2982 = vunpack.c.h.b16 %v2022
    %v2983 = vunpack.c.l.b16 %v2023
    %v2984 = vunpack.c.h.b16 %v2023
    %v2985 = vunpack.c.l.b16 %v2024
    %v2986 = vunpack.c.h.b16 %v2024
    %v2987 = vunpack.c.l.b16 %v2025
    %v2988 = vunpack.c.h.b16 %v2025
    %v2989 = vunpack.c.l.b16 %v2026
    %v2990 = vunpack.c.h.b16 %v2026
    %v2991 = vunpack.c.l.b16 %v2027
    %v2992 = vunpack.c.h.b16 %v2027
    %v2993 = vunpack.c.l.b16 %v2028
    %v2994 = vunpack.c.h.b16 %v2028
    %v2995 = vunpack.c.l.b16 %v2029
    %v2996 = vunpack.c.h.b16 %v2029
    %v2997 = vunpack.c.l.b16 %v2030
    %v2998 = vunpack.c.h.b16 %v2030
    %v2999 = vunpack.c.l.b16 %v2031
    %v3000 = vunpack.c.h.b16 %v2031
    %v3001 = vunpack.c.l.b16 %v2032
    %v3002 = vunpack.c.h.b16 %v2032
    %v3003 = vunpack.c.l.b16 %v2033
    %v3004 = vunpack.c.h.b16 %v2033
    %v3005 = vunpack.c.l.b16 %v2034
    %v3006 = vunpack.c.h.b16 %v2034
    %v3007 = vunpack.c.l.b16 %v2035
    %v3008 = vunpack.c.h.b16 %v2035
    %v3009 = vunpack.c.l.b16 %v2036
    %v3010 = vunpack.c.h.b16 %v2036
    %v3011 = vunpack.c.l.b16 %v2037
    %v3012 = vunpack.c.h.b16 %v2037
    %v3013 = vunpack.c.l.b16 %v2038
    %v3014 = vunpack.c.h.b16 %v2038
    %v3015 = vunpack.c.l.b16 %v2039
    %v3016 = vunpack.c.h.b16 %v2039
    %v3017 = vunpack.c.l.b16 %v2040
    %v3018 = vunpack.c.h.b16 %v2040
    %v3019 = vunpack.c.l.b16 %v2041
    %v3020 = vunpack.c.h.b16 %v2041
    %v3021 = vunpack.c.l.b16 %v2042
    %v3022 = vunpack.c.h.b16 %v2042
    %v3023 = vunpack.c.l.b16 %v2043
    %v3024 = vunpack.c.h.b16 %v2043
    %v3025 = vunpack.c.l.b16 %v2044
    %v3026 = vunpack.c.h.b16 %v2044
    %v3027 = vunpack.c.l.b16 %v2045
    %v3028 = vunpack.c.h.b16 %v2045
    %v3029 = vunpack.c.l.b16 %v2046
    %v3030 = vunpack.c.h.b16 %v2046
    %v3031 = vunpack.c.l.b16 %v2047
    %v3032 = vunpack.c.h.b16 %v2047
    %v3033 = vunpack.c.l.b16 %v2048
    %v3034 = vunpack.c.h.b16 %v2048
    %v3035 = vunpack.c.l.b16 %v2049
    %v3036 = vunpack.c.h.b16 %v2049
    %v3037 = vunpack.c.l.b16 %v2050
    %v3038 = vunpack.c.h.b16 %v2050
    %v3039 = vunpack.c.l.b16 %v2051
    %v3040 = vunpack.c.h.b16 %v2051
    %v3041 = vunpack.c.l.b16 %v2052
    %v3042 = vunpack.c.h.b16 %v2052
    %v3043 = vunpack.c.l.b16 %v2053
    %v3044 = vunpack.c.h.b16 %v2053
    %v3045 = vunpack.c.l.b16 %v2054
    %v3046 = vunpack.c.h.b16 %v2054
    %v3047 = vunpack.c.l.b16 %v2055
    %v3048 = vunpack.c.h.b16 %v2055
    %v3049 = vunpack.c.l.b16 %v2056
    %v3050 = vunpack.c.h.b16 %v2056
    %v3051 = vunpack.c.l.b16 %v2057
    %v3052 = vunpack.c.h.b16 %v2057
    %v3053 = vunpack.c.l.b16 %v2058
    %v3054 = vunpack.c.h.b16 %v2058
    %v3055 = vunpack.c.l.b16 %v2059
    %v3056 = vunpack.c.h.b16 %v2059
    %v3057 = vunpack.c.l.b16 %v2060
    %v3058 = vunpack.c.h.b16 %v2060
    %v3059 = vunpack.c.l.b16 %v2061
    %v3060 = vunpack.c.h.b16 %v2061
    %v3061 = vunpack.c.l.b16 %v2062
    %v3062 = vunpack.c.h.b16 %v2062
    %v3063 = vunpack.c.l.b16 %v2063
    %v3064 = vunpack.c.h.b16 %v2063
    %v3065 = vunpack.c.l.b16 %v2064
    %v3066 = vunpack.c.h.b16 %v2064
    %v3067 = vunpack.c.l.b16 %v2065
    %v3068 = vunpack.c.h.b16 %v2065
    %v3069 = vunpack.c.l.b16 %v2066
    %v3070 = vunpack.c.h.b16 %v2066
    %v3071 = vunpack.c.l.b16 %v2067
    %v3072 = vunpack.c.h.b16 %v2067
    %v3073 = vunpack.c.l.b16 %v2068
    %v3074 = vunpack.c.h.b16 %v2068
    %v3075 = vunpack.c.l.b16 %v2069
    %v3076 = vunpack.c.h.b16 %v2069
    %v3077 = vunpack.c.l.b16 %v2070
    %v3078 = vunpack.c.h.b16 %v2070
    %v3079 = vunpack.c.l.b16 %v2071
    %v3080 = vunpack.c.h.b16 %v2071
    %v3081 = vunpack.c.l.b16 %v2072
    %v3082 = vunpack.c.h.b16 %v2072
    %v3083 = vunpack.c.l.b16 %v2073
    %v3084 = vunpack.c.h.b16 %v2073
    %v3085 = vunpack.c.l.b16 %v2074
    %v3086 = vunpack.c.h.b16 %v2074
    %v3087 = vunpack.c.l.b16 %v2075
    %v3088 = vunpack.c.h.b16 %v2075
    %v3089 = vunpack.c.l.b16 %v2076
    %v3090 = vunpack.c.h.b16 %v2076
    %v3091 = vunpack.c.l.b16 %v2077
    %v3092 = vunpack.c.h.b16 %v2077
    %v3093 = vunpack.c.l.b16 %v2078
    %v3094 = vunpack.c.h.b16 %v2078
    %v3095 = vunpack.c.l.b16 %v2079
    %v3096 = vunpack.c.h.b16 %v2079
    %v3097 = vunpack.c.l.b16 %v2080
    %v3098 = vunpack.c.h.b16 %v2080
    %v3099 = vunpack.c.l.b16 %v2081
    %v3100 = vunpack.c.h.b16 %v2081
    %v3101 = vunpack.c.l.b16 %v2082
    %v3102 = vunpack.c.h.b16 %v2082
    %v3103 = vunpack.c.l.b16 %v2083
    %v3104 = vunpack.c.h.b16 %v2083
    %v3105 = vunpack.c.l.b16 %v2084
    %v3106 = vunpack.c.h.b16 %v2084
    %v3107 = vunpack.c.l.b16 %v2085
    %v3108 = vunpack.c.h.b16 %v2085
    %v3109 = vunpack.c.l.b16 %v2086
    %v3110 = vunpack.c.h.b16 %v2086
    %v3111 = vunpack.c.l.b16 %v2087
    %v3112 = vunpack.c.h.b16 %v2087
    %v3113 = vunpack.c.l.b16 %v2088
    %v3114 = vunpack.c.h.b16 %v2088
    %v3115 = vunpack.c.l.b16 %v2089
    %v3116 = vunpack.c.h.b16 %v2089
    %v3117 = vunpack.c.l.b16 %v2090
    %v3118 = vunpack.c.h.b16 %v2090
    %v3119 = vunpack.c.l.b16 %v2091
    %v3120 = vunpack.c.h.b16 %v2091
    %v3121 = vunpack.c.l.b16 %v2092
    %v3122 = vunpack.c.h.b16 %v2092
    %v3123 = vunpack.c.l.b16 %v2093
    %v3124 = vunpack.c.h.b16 %v2093
    %v3125 = vunpack.c.l.b16 %v2094
    %v3126 = vunpack.c.h.b16 %v2094
    %v3127 = vunpack.c.l.b16 %v2095
    %v3128 = vunpack.c.h.b16 %v2095
    %v3129 = vunpack.c.l.b16 %v2096
    %v3130 = vunpack.c.h.b16 %v2096
    %v3131 = vunpack.c.l.b16 %v2097
    %v3132 = vunpack.c.h.b16 %v2097
    %v3133 = vunpack.c.l.b16 %v2098
    %v3134 = vunpack.c.h.b16 %v2098
    %v3135 = vunpack.c.l.b16 %v2099
    %v3136 = vunpack.c.h.b16 %v2099
    %v3137 = vunpack.c.l.b16 %v2100
    %v3138 = vunpack.c.h.b16 %v2100
    %v3139 = vunpack.c.l.b16 %v2101
    %v3140 = vunpack.c.h.b16 %v2101
    %v3141 = vunpack.c.l.b16 %v2102
    %v3142 = vunpack.c.h.b16 %v2102
    %v3143 = vunpack.c.l.b16 %v2103
    %v3144 = vunpack.c.h.b16 %v2103
    %v3145 = vunpack.c.l.b16 %v2104
    %v3146 = vunpack.c.h.b16 %v2104
    %v3147 = vunpack.c.l.b16 %v2105
    %v3148 = vunpack.c.h.b16 %v2105
    %v3149 = vunpack.c.l.b16 %v2106
    %v3150 = vunpack.c.h.b16 %v2106
    %v3151 = vunpack.c.l.b16 %v2107
    %v3152 = vunpack.c.h.b16 %v2107
    %v3153 = vunpack.c.l.b16 %v2108
    %v3154 = vunpack.c.h.b16 %v2108
    %v3155 = vunpack.c.l.b16 %v2109
    %v3156 = vunpack.c.h.b16 %v2109
    %v3157 = vunpack.c.l.b16 %v2110
    %v3158 = vunpack.c.h.b16 %v2110
    %v3159 = vunpack.c.l.b16 %v2111
    %v3160 = vunpack.c.h.b16 %v2111
    %v3161 = vunpack.c.l.b16 %v2112
    %v3162 = vunpack.c.h.b16 %v2112
    %v3163 = vunpack.c.l.b16 %v2113
    %v3164 = vunpack.c.h.b16 %v2113
    %v3165 = vunpack.c.l.b16 %v2114
    %v3166 = vunpack.c.h.b16 %v2114
    %v3167 = vunpack.c.l.b16 %v2115
    %v3168 = vunpack.c.h.b16 %v2115
    %v3169 = vunpack.c.l.b16 %v2116
    %v3170 = vunpack.c.h.b16 %v2116
    %v3171 = vunpack.c.l.b16 %v2117
    %v3172 = vunpack.c.h.b16 %v2117
    %v3173 = vunpack.c.l.b16 %v2118
    %v3174 = vunpack.c.h.b16 %v2118
    %v3175 = vunpack.c.l.b16 %v2119
    %v3176 = vunpack.c.h.b16 %v2119
    %v3177 = vunpack.c.l.b16 %v2120
    %v3178 = vunpack.c.h.b16 %v2120
    %v3179 = vunpack.c.l.b16 %v2121
    %v3180 = vunpack.c.h.b16 %v2121
    %v3181 = vunpack.c.l.b16 %v2122
    %v3182 = vunpack.c.h.b16 %v2122
    %v3183 = vunpack.c.l.b16 %v2123
    %v3184 = vunpack.c.h.b16 %v2123
    %v3185 = vunpack.c.l.b16 %v2124
    %v3186 = vunpack.c.h.b16 %v2124
    %v3187 = vunpack.c.l.b16 %v2125
    %v3188 = vunpack.c.h.b16 %v2125
    %v3189 = vunpack.c.l.b16 %v2126
    %v3190 = vunpack.c.h.b16 %v2126
    %v3191 = vunpack.c.l.b16 %v2127
    %v3192 = vunpack.c.h.b16 %v2127
    %v3193 = vunpack.c.l.b16 %v2128
    %v3194 = vunpack.c.h.b16 %v2128
    %v3195 = vunpack.c.l.b16 %v2129
    %v3196 = vunpack.c.h.b16 %v2129
    %v3197 = vunpack.c.l.b16 %v2130
    %v3198 = vunpack.c.h.b16 %v2130
    %v3199 = vunpack.c.l.b16 %v2131
    %v3200 = vunpack.c.h.b16 %v2131
    %v3201 = vunpack.c.l.b16 %v2132
    %v3202 = vunpack.c.h.b16 %v2132
    %v3203 = vunpack.c.l.b16 %v2133
    %v3204 = vunpack.c.h.b16 %v2133
    %v3205 = vunpack.c.l.b16 %v2134
    %v3206 = vunpack.c.h.b16 %v2134
    %v3207 = vunpack.c.l.b16 %v2135
    %v3208 = vunpack.c.h.b16 %v2135
    %v3209 = vunpack.c.l.b16 %v2136
    %v3210 = vunpack.c.h.b16 %v2136
    %v3211 = vunpack.c.l.b16 %v2137
    %v3212 = vunpack.c.h.b16 %v2137
    %v3213 = vunpack.c.l.b16 %v2138
    %v3214 = vunpack.c.h.b16 %v2138
    %v3215 = vunpack.c.l.b16 %v2139
    %v3216 = vunpack.c.h.b16 %v2139
    %v3217 = vunpack.c.l.b16 %v2140
    %v3218 = vunpack.c.h.b16 %v2140
    %v3219 = vunpack.c.l.b16 %v2141
    %v3220 = vunpack.c.h.b16 %v2141
    %v3221 = vunpack.c.l.b16 %v2142
    %v3222 = vunpack.c.h.b16 %v2142
    %v3223 = vunpack.c.l.b16 %v2143
    %v3224 = vunpack.c.h.b16 %v2143
    %v3225 = vunpack.c.l.b16 %v2144
    %v3226 = vunpack.c.h.b16 %v2144
    %v3227 = vunpack.c.l.b16 %v2145
    %v3228 = vunpack.c.h.b16 %v2145
    %v3229 = vunpack.c.l.b16 %v2146
    %v3230 = vunpack.c.h.b16 %v2146
    %v3231 = vunpack.c.l.b16 %v2147
    %v3232 = vunpack.c.h.b16 %v2147
    %v3233 = vunpack.c.l.b16 %v2148
    %v3234 = vunpack.c.h.b16 %v2148
    %v3235 = vunpack.c.l.b16 %v2149
    %v3236 = vunpack.c.h.b16 %v2149
    %v3237 = vunpack.c.l.b16 %v2150
    %v3238 = vunpack.c.h.b16 %v2150
    %v3239 = vunpack.c.l.b16 %v2151
    %v3240 = vunpack.c.h.b16 %v2151
    %v3241 = vunpack.c.l.b16 %v2152
    %v3242 = vunpack.c.h.b16 %v2152
    %v3243 = vunpack.c.l.b16 %v2153
    %v3244 = vunpack.c.h.b16 %v2153
    %v3245 = vunpack.c.l.b16 %v2154
    %v3246 = vunpack.c.h.b16 %v2154
    %v3247 = vunpack.c.l.b16 %v2155
    %v3248 = vunpack.c.h.b16 %v2155
    %v3249 = vunpack.c.l.b16 %v2156
    %v3250 = vunpack.c.h.b16 %v2156
    %v3251 = vunpack.c.l.b16 %v2157
    %v3252 = vunpack.c.h.b16 %v2157
    %v3253 = vunpack.c.l.b16 %v2158
    %v3254 = vunpack.c.h.b16 %v2158
    %v3255 = vunpack.c.l.b16 %v2159
    %v3256 = vunpack.c.h.b16 %v2159
    %v3257 = vunpack.c.l.b16 %v2160
    %v3258 = vunpack.c.h.b16 %v2160
    %v3259 = vunpack.c.l.b16 %v2161
    %v3260 = vunpack.c.h.b16 %v2161
    %v3261 = vunpack.c.l.b16 %v2162
    %v3262 = vunpack.c.h.b16 %v2162
    %v3263 = vunpack.c.l.b16 %v2163
    %v3264 = vunpack.c.h.b16 %v2163
    %v3265 = vunpack.c.l.b16 %v2164
    %v3266 = vunpack.c.h.b16 %v2164
    %v3267 = vunpack.c.l.b16 %v2165
    %v3268 = vunpack.c.h.b16 %v2165
    %v3269 = vunpack.c.l.b16 %v2166
    %v3270 = vunpack.c.h.b16 %v2166
    %v3271 = vunpack.c.l.b16 %v2167
    %v3272 = vunpack.c.h.b16 %v2167
    %v3273 = vunpack.c.l.b16 %v2168
    %v3274 = vunpack.c.h.b16 %v2168
    %v3275 = vunpack.c.l.b16 %v2169
    %v3276 = vunpack.c.h.b16 %v2169
    %v3277 = vunpack.c.l.b16 %v2170
    %v3278 = vunpack.c.h.b16 %v2170
    %v3279 = vunpack.c.l.b16 %v2171
    %v3280 = vunpack.c.h.b16 %v2171
    %v3281 = vunpack.c.l.b16 %v2172
    %v3282 = vunpack.c.h.b16 %v2172
    %v3283 = vunpack.c.l.b16 %v2173
    %v3284 = vunpack.c.h.b16 %v2173
    %v3285 = vunpack.c.l.b16 %v2174
    %v3286 = vunpack.c.h.b16 %v2174
    %v3287 = vunpack.c.l.b16 %v2175
    %v3288 = vunpack.c.h.b16 %v2175
    %v3289 = vunpack.c.l.b16 %v2176
    %v3290 = vunpack.c.h.b16 %v2176
    %v3291 = vunpack.c.l.b16 %v2177
    %v3292 = vunpack.c.h.b16 %v2177
    %v3293 = vunpack.c.l.b16 %v2178
    %v3294 = vunpack.c.h.b16 %v2178
    %v3295 = vunpack.c.l.b16 %v2179
    %v3296 = vunpack.c.h.b16 %v2179
    %v3297 = vunpack.c.l.b16 %v2180
    %v3298 = vunpack.c.h.b16 %v2180
    %v3299 = vunpack.c.l.b16 %v2181
    %v3300 = vunpack.c.h.b16 %v2181
    %v3301 = vunpack.c.l.b16 %v2182
    %v3302 = vunpack.c.h.b16 %v2182
    %v3303 = vunpack.c.l.b16 %v2183
    %v3304 = vunpack.c.h.b16 %v2183
    %v3305 = vunpack.c.l.b16 %v2184
    %v3306 = vunpack.c.h.b16 %v2184
    %v3307 = vunpack.c.l.b16 %v2185
    %v3308 = vunpack.c.h.b16 %v2185
    %v3309 = vunpack.c.l.b16 %v2186
    %v3310 = vunpack.c.h.b16 %v2186
    %v3311 = vunpack.c.l.b16 %v2187
    %v3312 = vunpack.c.h.b16 %v2187
    %v3313 = vunpack.c.l.b16 %v2188
    %v3314 = vunpack.c.h.b16 %v2188
    %v3315 = vunpack.c.l.b16 %v2189
    %v3316 = vunpack.c.h.b16 %v2189
    %v3317 = vunpack.c.l.b16 %v2190
    %v3318 = vunpack.c.h.b16 %v2190
    %v3319 = vunpack.c.l.b16 %v2191
    %v3320 = vunpack.c.h.b16 %v2191
    %v3321 = vunpack.c.l.b16 %v2192
    %v3322 = vunpack.c.h.b16 %v2192
    %v3323 = vunpack.c.l.b16 %v2193
    %v3324 = vunpack.c.h.b16 %v2193
    %v3325 = vunpack.c.l.b16 %v2194
    %v3326 = vunpack.c.h.b16 %v2194
    %v3327 = vunpack.c.l.b16 %v2195
    %v3328 = vunpack.c.h.b16 %v2195
    %v3329 = vunpack.c.l.b16 %v2196
    %v3330 = vunpack.c.h.b16 %v2196
    %v3331 = vunpack.c.l.b16 %v2197
    %v3332 = vunpack.c.h.b16 %v2197
    %v3333 = vunpack.c.l.b16 %v2198
    %v3334 = vunpack.c.h.b16 %v2198
    %v3335 = vunpack.c.l.b16 %v2199
    %v3336 = vunpack.c.h.b16 %v2199
    %v3337 = vunpack.c.l.b16 %v2200
    %v3338 = vunpack.c.h.b16 %v2200
    %v3339 = vunpack.c.l.b16 %v2201
    %v3340 = vunpack.c.h.b16 %v2201
    %v3341 = vunpack.c.l.b16 %v2202
    %v3342 = vunpack.c.h.b16 %v2202
    %v3343 = vunpack.c.l.b16 %v2203
    %v3344 = vunpack.c.h.b16 %v2203
    %v3345 = vunpack.c.l.b16 %v2204
    %v3346 = vunpack.c.h.b16 %v2204
    %v3347 = vunpack.c.l.b16 %v2205
    %v3348 = vunpack.c.h.b16 %v2205
    %v3349 = vunpack.c.l.b16 %v2206
    %v3350 = vunpack.c.h.b16 %v2206
    %v3351 = vunpack.c.l.b16 %v2207
    %v3352 = vunpack.c.h.b16 %v2207
    %v3353 = vunpack.c.l.b16 %v2208
    %v3354 = vunpack.c.h.b16 %v2208
    %v3355 = vunpack.c.l.b16 %v2209
    %v3356 = vunpack.c.h.b16 %v2209
    %v3357 = vunpack.c.l.b16 %v2210
    %v3358 = vunpack.c.h.b16 %v2210
    %v3359 = vunpack.c.l.b16 %v2211
    %v3360 = vunpack.c.h.b16 %v2211
    %v3361 = vunpack.c.l.b16 %v2212
    %v3362 = vunpack.c.h.b16 %v2212
    %v3363 = vunpack.c.l.b16 %v2213
    %v3364 = vunpack.c.h.b16 %v2213
    %v3365 = vunpack.c.l.b16 %v2214
    %v3366 = vunpack.c.h.b16 %v2214
    %v3367 = vunpack.c.l.b16 %v2215
    %v3368 = vunpack.c.h.b16 %v2215
    %v3369 = vunpack.c.l.b16 %v2216
    %v3370 = vunpack.c.h.b16 %v2216
    %v3371 = vunpack.c.l.b16 %v2217
    %v3372 = vunpack.c.h.b16 %v2217
    %v3373 = vunpack.c.l.b16 %v2218
    %v3374 = vunpack.c.h.b16 %v2218
    %v3375 = vunpack.c.l.b16 %v2219
    %v3376 = vunpack.c.h.b16 %v2219
    %v3377 = vunpack.c.l.b16 %v2220
    %v3378 = vunpack.c.h.b16 %v2220
    %v3379 = vunpack.c.l.b16 %v2221
    %v3380 = vunpack.c.h.b16 %v2221
    %v3381 = vunpack.c.l.b16 %v2222
    %v3382 = vunpack.c.h.b16 %v2222
    %v3383 = vunpack.c.l.b16 %v2223
    %v3384 = vunpack.c.h.b16 %v2223
    %v3385 = vunpack.c.l.b16 %v2224
    %v3386 = vunpack.c.h.b16 %v2224
    %v3387 = vunpack.c.l.b16 %v2225
    %v3388 = vunpack.c.h.b16 %v2225
    %v3389 = vunpack.c.l.b16 %v2226
    %v3390 = vunpack.c.h.b16 %v2226
    %v3391 = vunpack.c.l.b16 %v2227
    %v3392 = vunpack.c.h.b16 %v2227
    %v3393 = vunpack.c.l.b16 %v2228
    %v3394 = vunpack.c.h.b16 %v2228
    %v3395 = vunpack.c.l.b16 %v2229
    %v3396 = vunpack.c.h.b16 %v2229
    %v3397 = vunpack.c.l.b16 %v2230
    %v3398 = vunpack.c.h.b16 %v2230
    %v3399 = vunpack.c.l.b16 %v2231
    %v3400 = vunpack.c.h.b16 %v2231
    %v3401 = vunpack.c.l.b16 %v2232
    %v3402 = vunpack.c.h.b16 %v2232
    %v3403 = vunpack.c.l.b16 %v2233
    %v3404 = vunpack.c.h.b16 %v2233
    %v3405 = vunpack.c.l.b16 %v2234
    %v3406 = vunpack.c.h.b16 %v2234
    %v3407 = vunpack.c.l.b16 %v2235
    %v3408 = vunpack.c.h.b16 %v2235
    %v3409 = vunpack.c.l.b16 %v2236
    %v3410 = vunpack.c.h.b16 %v2236
    %v3411 = vunpack.c.l.b16 %v2237
    %v3412 = vunpack.c.h.b16 %v2237
    %v3413 = vunpack.c.l.b16 %v2238
    %v3414 = vunpack.c.h.b16 %v2238
    %v3415 = vunpack.c.l.b16 %v2239
    %v3416 = vunpack.c.h.b16 %v2239
    %v3417 = vunpack.c.l.b16 %v2240
    %v3418 = vunpack.c.h.b16 %v2240
    %v3419 = vunpack.c.l.b16 %v2241
    %v3420 = vunpack.c.h.b16 %v2241
    %v3421 = vunpack.c.l.b16 %v2242
    %v3422 = vunpack.c.h.b16 %v2242
    %v3423 = vunpack.c.l.b16 %v2243
    %v3424 = vunpack.c.h.b16 %v2243
    %v3425 = vunpack.c.l.b16 %v2244
    %v3426 = vunpack.c.h.b16 %v2244
    %v3427 = vunpack.c.l.b16 %v2245
    %v3428 = vunpack.c.h.b16 %v2245
    %v3429 = vunpack.c.l.b16 %v2246
    %v3430 = vunpack.c.h.b16 %v2246
    %v3431 = vunpack.c.l.b16 %v2247
    %v3432 = vunpack.c.h.b16 %v2247
    %v3433 = vunpack.c.l.b16 %v2248
    %v3434 = vunpack.c.h.b16 %v2248
    %v3435 = vunpack.c.l.b16 %v2249
    %v3436 = vunpack.c.h.b16 %v2249
    %v3437 = vunpack.c.l.b16 %v2250
    %v3438 = vunpack.c.h.b16 %v2250
    %v3439 = vunpack.c.l.b16 %v2251
    %v3440 = vunpack.c.h.b16 %v2251
    %v3441 = vunpack.c.l.b16 %v2252
    %v3442 = vunpack.c.h.b16 %v2252
    %v3443 = vunpack.c.l.b16 %v2253
    %v3444 = vunpack.c.h.b16 %v2253
    %v3445 = vunpack.c.l.b16 %v2254
    %v3446 = vunpack.c.h.b16 %v2254
    %v3447 = vunpack.c.l.b16 %v2255
    %v3448 = vunpack.c.h.b16 %v2255
    %v3449 = vunpack.c.l.b16 %v2256
    %v3450 = vunpack.c.h.b16 %v2256
    %v3451 = vunpack.c.l.b16 %v2257
    %v3452 = vunpack.c.h.b16 %v2257
    %v3453 = vunpack.c.l.b16 %v2258
    %v3454 = vunpack.c.h.b16 %v2258
    %v3455 = vunpack.c.l.b16 %v2259
    %v3456 = vunpack.c.h.b16 %v2259
    %v3457 = vunpack.c.l.b16 %v2260
    %v3458 = vunpack.c.h.b16 %v2260
    %v3459 = vunpack.c.l.b16 %v2261
    %v3460 = vunpack.c.h.b16 %v2261
    %v3461 = vunpack.c.l.b16 %v2262
    %v3462 = vunpack.c.h.b16 %v2262
    %v3463 = vunpack.c.l.b16 %v2263
    %v3464 = vunpack.c.h.b16 %v2263
    %v3465 = vunpack.c.l.b16 %v2264
    %v3466 = vunpack.c.h.b16 %v2264
    %v3467 = vunpack.c.l.b16 %v2265
    %v3468 = vunpack.c.h.b16 %v2265
    %v3469 = vunpack.c.l.b16 %v2266
    %v3470 = vunpack.c.h.b16 %v2266
    %v3471 = vunpack.c.l.b16 %v2267
    %v3472 = vunpack.c.h.b16 %v2267
    %v3473 = vunpack.c.l.b16 %v2268
    %v3474 = vunpack.c.h.b16 %v2268
    %v3475 = vunpack.c.l.b16 %v2269
    %v3476 = vunpack.c.h.b16 %v2269
    %v3477 = vunpack.c.l.b16 %v2270
    %v3478 = vunpack.c.h.b16 %v2270
    %v3479 = vunpack.c.l.b16 %v2271
    %v3480 = vunpack.c.h.b16 %v2271
    %v3481 = vunpack.c.l.b16 %v2272
    %v3482 = vunpack.c.h.b16 %v2272
    %v3483 = vunpack.c.l.b16 %v2273
    %v3484 = vunpack.c.h.b16 %v2273
    %v3485 = vunpack.c.l.b16 %v2274
    %v3486 = vunpack.c.h.b16 %v2274
    %v3487 = vunpack.c.l.b16 %v2275
    %v3488 = vunpack.c.h.b16 %v2275
    %v3489 = vunpack.c.l.b16 %v2276
    %v3490 = vunpack.c.h.b16 %v2276
    %v3491 = vunpack.c.l.b16 %v2277
    %v3492 = vunpack.c.h.b16 %v2277
    %v3493 = vunpack.c.l.b16 %v2278
    %v3494 = vunpack.c.h.b16 %v2278
    %v3495 = vunpack.c.l.b16 %v2279
    %v3496 = vunpack.c.h.b16 %v2279
    %v3497 = vunpack.c.l.b16 %v2280
    %v3498 = vunpack.c.h.b16 %v2280
    %v3499 = vunpack.c.l.b16 %v2281
    %v3500 = vunpack.c.h.b16 %v2281
    %v3501 = vunpack.c.l.b16 %v2282
    %v3502 = vunpack.c.h.b16 %v2282
    %v3503 = vunpack.c.l.b16 %v2283
    %v3504 = vunpack.c.h.b16 %v2283
    %v3505 = vunpack.c.l.b16 %v2284
    %v3506 = vunpack.c.h.b16 %v2284
    %v3507 = vpack.c.b16 %v2743, %v2739
    %v3508 = vpack.c.b16 %v2744, %v2740
    %v3509 = vpack.c.b16 %v2745, %v2741
    %v3510 = vpack.c.b16 %v2746, %v2742
    %v3511 = vpack.c.b16 %v2751, %v2747
    %v3512 = vpack.c.b16 %v2752, %v2748
    %v3513 = vpack.c.b16 %v2753, %v2749
    %v3514 = vpack.c.b16 %v2754, %v2750
    %v3515 = vpack.c.b16 %v2759, %v2755
    %v3516 = vpack.c.b16 %v2760, %v2756
    %v3517 = vpack.c.b16 %v2761, %v2757
    %v3518 = vpack.c.b16 %v2762, %v2758
    %v3519 = vpack.c.b16 %v2767, %v2763
    %v3520 = vpack.c.b16 %v2768, %v2764
    %v3521 = vpack.c.b16 %v2769, %v2765
    %v3522 = vpack.c.b16 %v2770, %v2766
    %v3523 = vpack.c.b16 %v2775, %v2771
    %v3524 = vpack.c.b16 %v2776, %v2772
    %v3525 = vpack.c.b16 %v2777, %v2773
    %v3526 = vpack.c.b16 %v2778, %v2774
    %v3527 = vpack.c.b16 %v2783, %v2779
    %v3528 = vpack.c.b16 %v2784, %v2780
    %v3529 = vpack.c.b16 %v2785, %v2781
    %v3530 = vpack.c.b16 %v2786, %v2782
    %v3531 = vpack.c.b16 %v2791, %v2787
    %v3532 = vpack.c.b16 %v2792, %v2788
    %v3533 = vpack.c.b16 %v2793, %v2789
    %v3534 = vpack.c.b16 %v2794, %v2790
    %v3535 = vpack.c.b16 %v2799, %v2795
    %v3536 = vpack.c.b16 %v2800, %v2796
    %v3537 = vpack.c.b16 %v2801, %v2797
    %v3538 = vpack.c.b16 %v2802, %v2798
    %v3539 = vpack.c.b16 %v2807, %v2803
    %v3540 = vpack.c.b16 %v2808, %v2804
    %v3541 = vpack.c.b16 %v2809, %v2805
    %v3542 = vpack.c.b16 %v2810, %v2806
    %v3543 = vpack.c.b16 %v2815, %v2811
    %v3544 = vpack.c.b16 %v2816, %v2812
    %v3545 = vpack.c.b16 %v2817, %v2813
    %v3546 = vpack.c.b16 %v2818, %v2814
    %v3547 = vpack.c.b16 %v2823, %v2819
    %v3548 = vpack.c.b16 %v2824, %v2820
    %v3549 = vpack.c.b16 %v2825, %v2821
    %v3550 = vpack.c.b16 %v2826, %v2822
    %v3551 = vpack.c.b16 %v2831, %v2827
    %v3552 = vpack.c.b16 %v2832, %v2828
    %v3553 = vpack.c.b16 %v2833, %v2829
    %v3554 = vpack.c.b16 %v2834, %v2830
    %v3555 = vpack.c.b16 %v2839, %v2835
    %v3556 = vpack.c.b16 %v2840, %v2836
    %v3557 = vpack.c.b16 %v2841, %v2837
    %v3558 = vpack.c.b16 %v2842, %v2838
    %v3559 = vpack.c.b16 %v2847, %v2843
    %v3560 = vpack.c.b16 %v2848, %v2844
    %v3561 = vpack.c.b16 %v2849, %v2845
    %v3562 = vpack.c.b16 %v2850, %v2846
    %v3563 = vpack.c.b16 %v2855, %v2851
    %v3564 = vpack.c.b16 %v2856, %v2852
    %v3565 = vpack.c.b16 %v2857, %v2853
    %v3566 = vpack.c.b16 %v2858, %v2854
    %v3567 = vpack.c.b16 %v2863, %v2859
    %v3568 = vpack.c.b16 %v2864, %v2860
    %v3569 = vpack.c.b16 %v2865, %v2861
    %v3570 = vpack.c.b16 %v2866, %v2862
    %v3571 = vpack.c.b16 %v2871, %v2867
    %v3572 = vpack.c.b16 %v2872, %v2868
    %v3573 = vpack.c.b16 %v2873, %v2869
    %v3574 = vpack.c.b16 %v2874, %v2870
    %v3575 = vpack.c.b16 %v2879, %v2875
    %v3576 = vpack.c.b16 %v2880, %v2876
    %v3577 = vpack.c.b16 %v2881, %v2877
    %v3578 = vpack.c.b16 %v2882, %v2878
    %v3579 = vpack.c.b16 %v2887, %v2883
    %v3580 = vpack.c.b16 %v2888, %v2884
    %v3581 = vpack.c.b16 %v2889, %v2885
    %v3582 = vpack.c.b16 %v2890, %v2886
    %v3583 = vpack.c.b16 %v2895, %v2891
    %v3584 = vpack.c.b16 %v2896, %v2892
    %v3585 = vpack.c.b16 %v2897, %v2893
    %v3586 = vpack.c.b16 %v2898, %v2894
    %v3587 = vpack.c.b16 %v2903, %v2899
    %v3588 = vpack.c.b16 %v2904, %v2900
    %v3589 = vpack.c.b16 %v2905, %v2901
    %v3590 = vpack.c.b16 %v2906, %v2902
    %v3591 = vpack.c.b16 %v2911, %v2907
    %v3592 = vpack.c.b16 %v2912, %v2908
    %v3593 = vpack.c.b16 %v2913, %v2909
    %v3594 = vpack.c.b16 %v2914, %v2910
    %v3595 = vpack.c.b16 %v2919, %v2915
    %v3596 = vpack.c.b16 %v2920, %v2916
    %v3597 = vpack.c.b16 %v2921, %v2917
    %v3598 = vpack.c.b16 %v2922, %v2918
    %v3599 = vpack.c.b16 %v2927, %v2923
    %v3600 = vpack.c.b16 %v2928, %v2924
    %v3601 = vpack.c.b16 %v2929, %v2925
    %v3602 = vpack.c.b16 %v2930, %v2926
    %v3603 = vpack.c.b16 %v2935, %v2931
    %v3604 = vpack.c.b16 %v2936, %v2932
    %v3605 = vpack.c.b16 %v2937, %v2933
    %v3606 = vpack.c.b16 %v2938, %v2934
    %v3607 = vpack.c.b16 %v2943, %v2939
    %v3608 = vpack.c.b16 %v2944, %v2940
    %v3609 = vpack.c.b16 %v2945, %v2941
    %v3610 = vpack.c.b16 %v2946, %v2942
    %v3611 = vpack.c.b16 %v2951, %v2947
    %v3612 = vpack.c.b16 %v2952, %v2948
    %v3613 = vpack.c.b16 %v2953, %v2949
    %v3614 = vpack.c.b16 %v2954, %v2950
    %v3615 = vpack.c.b16 %v2959, %v2955
    %v3616 = vpack.c.b16 %v2960, %v2956
    %v3617 = vpack.c.b16 %v2961, %v2957
    %v3618 = vpack.c.b16 %v2962, %v2958
    %v3619 = vpack.c.b16 %v2967, %v2963
    %v3620 = vpack.c.b16 %v2968, %v2964
    %v3621 = vpack.c.b16 %v2969, %v2965
    %v3622 = vpack.c.b16 %v2970, %v2966
    %v3623 = vpack.c.b16 %v2975, %v2971
    %v3624 = vpack.c.b16 %v2976, %v2972
    %v3625 = vpack.c.b16 %v2977, %v2973
    %v3626 = vpack.c.b16 %v2978, %v2974
    %v3627 = vpack.c.b16 %v2983, %v2979
    %v3628 = vpack.c.b16 %v2984, %v2980
    %v3629 = vpack.c.b16 %v2985, %v2981
    %v3630 = vpack.c.b16 %v2986, %v2982
    %v3631 = vpack.c.b16 %v2991, %v2987
    %v3632 = vpack.c.b16 %v2992, %v2988
    %v3633 = vpack.c.b16 %v2993, %v2989
    %v3634 = vpack.c.b16 %v2994, %v2990
    %v3635 = vpack.c.b16 %v2999, %v2995
    %v3636 = vpack.c.b16 %v3000, %v2996
    %v3637 = vpack.c.b16 %v3001, %v2997
    %v3638 = vpack.c.b16 %v3002, %v2998
    %v3639 = vpack.c.b16 %v3007, %v3003
    %v3640 = vpack.c.b16 %v3008, %v3004
    %v3641 = vpack.c.b16 %v3009, %v3005
    %v3642 = vpack.c.b16 %v3010, %v3006
    %v3643 = vpack.c.b16 %v3015, %v3011
    %v3644 = vpack.c.b16 %v3016, %v3012
    %v3645 = vpack.c.b16 %v3017, %v3013
    %v3646 = vpack.c.b16 %v3018, %v3014
    %v3647 = vpack.c.b16 %v3023, %v3019
    %v3648 = vpack.c.b16 %v3024, %v3020
    %v3649 = vpack.c.b16 %v3025, %v3021
    %v3650 = vpack.c.b16 %v3026, %v3022
    %v3651 = vpack.c.b16 %v3031, %v3027
    %v3652 = vpack.c.b16 %v3032, %v3028
    %v3653 = vpack.c.b16 %v3033, %v3029
    %v3654 = vpack.c.b16 %v3034, %v3030
    %v3655 = vpack.c.b16 %v3039, %v3035
    %v3656 = vpack.c.b16 %v3040, %v3036
    %v3657 = vpack.c.b16 %v3041, %v3037
    %v3658 = vpack.c.b16 %v3042, %v3038
    %v3659 = vpack.c.b16 %v3047, %v3043
    %v3660 = vpack.c.b16 %v3048, %v3044
    %v3661 = vpack.c.b16 %v3049, %v3045
    %v3662 = vpack.c.b16 %v3050, %v3046
    %v3663 = vpack.c.b16 %v3055, %v3051
    %v3664 = vpack.c.b16 %v3056, %v3052
    %v3665 = vpack.c.b16 %v3057, %v3053
    %v3666 = vpack.c.b16 %v3058, %v3054
    %v3667 = vpack.c.b16 %v3063, %v3059
    %v3668 = vpack.c.b16 %v3064, %v3060
    %v3669 = vpack.c.b16 %v3065, %v3061
    %v3670 = vpack.c.b16 %v3066, %v3062
    %v3671 = vpack.c.b16 %v3071, %v3067
    %v3672 = vpack.c.b16 %v3072, %v3068
    %v3673 = vpack.c.b16 %v3073, %v3069
    %v3674 = vpack.c.b16 %v3074, %v3070
    %v3675 = vpack.c.b16 %v3079, %v3075
    %v3676 = vpack.c.b16 %v3080, %v3076
    %v3677 = vpack.c.b16 %v3081, %v3077
    %v3678 = vpack.c.b16 %v3082, %v3078
    %v3679 = vpack.c.b16 %v3087, %v3083
    %v3680 = vpack.c.b16 %v3088, %v3084
    %v3681 = vpack.c.b16 %v3089, %v3085
    %v3682 = vpack.c.b16 %v3090, %v3086
    %v3683 = vpack.c.b16 %v3095, %v3091
    %v3684 = vpack.c.b16 %v3096, %v3092
    %v3685 = vpack.c.b16 %v3097, %v3093
    %v3686 = vpack.c.b16 %v3098, %v3094
    %v3687 = vpack.c.b16 %v3103, %v3099
    %v3688 = vpack.c.b16 %v3104, %v3100
    %v3689 = vpack.c.b16 %v3105, %v3101
    %v3690 = vpack.c.b16 %v3106, %v3102
    %v3691 = vpack.c.b16 %v3111, %v3107
    %v3692 = vpack.c.b16 %v3112, %v3108
    %v3693 = vpack.c.b16 %v3113, %v3109
    %v3694 = vpack.c.b16 %v3114, %v3110
    %v3695 = vpack.c.b16 %v3119, %v3115
    %v3696 = vpack.c.b16 %v3120, %v3116
    %v3697 = vpack.c.b16 %v3121, %v3117
    %v3698 = vpack.c.b16 %v3122, %v3118
    %v3699 = vpack.c.b16 %v3127, %v3123
    %v3700 = vpack.c.b16 %v3128, %v3124
    %v3701 = vpack.c.b16 %v3129, %v3125
    %v3702 = vpack.c.b16 %v3130, %v3126
    %v3703 = vpack.c.b16 %v3135, %v3131
    %v3704 = vpack.c.b16 %v3136, %v3132
    %v3705 = vpack.c.b16 %v3137, %v3133
    %v3706 = vpack.c.b16 %v3138, %v3134
    %v3707 = vpack.c.b16 %v3143, %v3139
    %v3708 = vpack.c.b16 %v3144, %v3140
    %v3709 = vpack.c.b16 %v3145, %v3141
    %v3710 = vpack.c.b16 %v3146, %v3142
    %v3711 = vpack.c.b16 %v3151, %v3147
    %v3712 = vpack.c.b16 %v3152, %v3148
    %v3713 = vpack.c.b16 %v3153, %v3149
    %v3714 = vpack.c.b16 %v3154, %v3150
    %v3715 = vpack.c.b16 %v3159, %v3155
    %v3716 = vpack.c.b16 %v3160, %v3156
    %v3717 = vpack.c.b16 %v3161, %v3157
    %v3718 = vpack.c.b16 %v3162, %v3158
    %v3719 = vpack.c.b16 %v3167, %v3163
    %v3720 = vpack.c.b16 %v3168, %v3164
    %v3721 = vpack.c.b16 %v3169, %v3165
    %v3722 = vpack.c.b16 %v3170, %v3166
    %v3723 = vpack.c.b16 %v3175, %v3171
    %v3724 = vpack.c.b16 %v3176, %v3172
    %v3725 = vpack.c.b16 %v3177, %v3173
    %v3726 = vpack.c.b16 %v3178, %v3174
    %v3727 = vpack.c.b16 %v3183, %v3179
    %v3728 = vpack.c.b16 %v3184, %v3180
    %v3729 = vpack.c.b16 %v3185, %v3181
    %v3730 = vpack.c.b16 %v3186, %v3182
    %v3731 = vpack.c.b16 %v3191, %v3187
    %v3732 = vpack.c.b16 %v3192, %v3188
    %v3733 = vpack.c.b16 %v3193, %v3189
    %v3734 = vpack.c.b16 %v3194, %v3190
    %v3735 = vpack.c.b16 %v3199, %v3195
    %v3736 = vpack.c.b16 %v3200, %v3196
    %v3737 = vpack.c.b16 %v3201, %v3197
    %v3738 = vpack.c.b16 %v3202, %v3198
    %v3739 = vpack.c.b16 %v3207, %v3203
    %v3740 = vpack.c.b16 %v3208, %v3204
    %v3741 = vpack.c.b16 %v3209, %v3205
    %v3742 = vpack.c.b16 %v3210, %v3206
    %v3743 = vpack.c.b16 %v3215, %v3211
    %v3744 = vpack.c.b16 %v3216, %v3212
    %v3745 = vpack.c.b16 %v3217, %v3213
    %v3746 = vpack.c.b16 %v3218, %v3214
    %v3747 = vpack.c.b16 %v3223, %v3219
    %v3748 = vpack.c.b16 %v3224, %v3220
    %v3749 = vpack.c.b16 %v3225, %v3221
    %v3750 = vpack.c.b16 %v3226, %v3222
    %v3751 = vpack.c.b16 %v3231, %v3227
    %v3752 = vpack.c.b16 %v3232, %v3228
    %v3753 = vpack.c.b16 %v3233, %v3229
    %v3754 = vpack.c.b16 %v3234, %v3230
    %v3755 = vpack.c.b16 %v3239, %v3235
    %v3756 = vpack.c.b16 %v3240, %v3236
    %v3757 = vpack.c.b16 %v3241, %v3237
    %v3758 = vpack.c.b16 %v3242, %v3238
    %v3759 = vpack.c.b16 %v3247, %v3243
    %v3760 = vpack.c.b16 %v3248, %v3244
    %v3761 = vpack.c.b16 %v3249, %v3245
    %v3762 = vpack.c.b16 %v3250, %v3246
    %v3763 = vpack.c.b16 %v3255, %v3251
    %v3764 = vpack.c.b16 %v3256, %v3252
    %v3765 = vpack.c.b16 %v3257, %v3253
    %v3766 = vpack.c.b16 %v3258, %v3254
    %v3767 = vpack.c.b16 %v3263, %v3259
    %v3768 = vpack.c.b16 %v3264, %v3260
    %v3769 = vpack.c.b16 %v3265, %v3261
    %v3770 = vpack.c.b16 %v3266, %v3262
    %v3771 = vpack.c.b16 %v3271, %v3267
    %v3772 = vpack.c.b16 %v3272, %v3268
    %v3773 = vpack.c.b16 %v3273, %v3269
    %v3774 = vpack.c.b16 %v3274, %v3270
    %v3775 = vpack.c.b16 %v3279, %v3275
    %v3776 = vpack.c.b16 %v3280, %v3276
    %v3777 = vpack.c.b16 %v3281, %v3277
    %v3778 = vpack.c.b16 %v3282, %v3278
    %v3779 = vpack.c.b16 %v3287, %v3283
    %v3780 = vpack.c.b16 %v3288, %v3284
    %v3781 = vpack.c.b16 %v3289, %v3285
    %v3782 = vpack.c.b16 %v3290, %v3286
    %v3783 = vpack.c.b16 %v3295, %v3291
    %v3784 = vpack.c.b16 %v3296, %v3292
    %v3785 = vpack.c.b16 %v3297, %v3293
    %v3786 = vpack.c.b16 %v3298, %v3294
    %v3787 = vpack.c.b16 %v3303, %v3299
    %v3788 = vpack.c.b16 %v3304, %v3300
    %v3789 = vpack.c.b16 %v3305, %v3301
    %v3790 = vpack.c.b16 %v3306, %v3302
    %v3791 = vpack.c.b16 %v3311, %v3307
    %v3792 = vpack.c.b16 %v3312, %v3308
    %v3793 = vpack.c.b16 %v3313, %v3309
    %v3794 = vpack.c.b16 %v3314, %v3310
    %v3795 = vpack.c.b16 %v3319, %v3315
    %v3796 = vpack.c.b16 %v3320, %v3316
    %v3797 = vpack.c.b16 %v3321, %v3317
    %v3798 = vpack.c.b16 %v3322, %v3318
    %v3799 = vpack.c.b16 %v3327, %v3323
    %v3800 = vpack.c.b16 %v3328, %v3324
    %v3801 = vpack.c.b16 %v3329, %v3325
    %v3802 = vpack.c.b16 %v3330, %v3326
    %v3803 = vpack.c.b16 %v3335, %v3331
    %v3804 = vpack.c.b16 %v3336, %v3332
    %v3805 = vpack.c.b16 %v3337, %v3333
    %v3806 = vpack.c.b16 %v3338, %v3334
    %v3807 = vpack.c.b16 %v3343, %v3339
    %v3808 = vpack.c.b16 %v3344, %v3340
    %v3809 = vpack.c.b16 %v3345, %v3341
    %v3810 = vpack.c.b16 %v3346, %v3342
    %v3811 = vpack.c.b16 %v3351, %v3347
    %v3812 = vpack.c.b16 %v3352, %v3348
    %v3813 = vpack.c.b16 %v3353, %v3349
    %v3814 = vpack.c.b16 %v3354, %v3350
    %v3815 = vpack.c.b16 %v3359, %v3355
    %v3816 = vpack.c.b16 %v3360, %v3356
    %v3817 = vpack.c.b16 %v3361, %v3357
    %v3818 = vpack.c.b16 %v3362, %v3358
    %v3819 = vpack.c.b16 %v3367, %v3363
    %v3820 = vpack.c.b16 %v3368, %v3364
    %v3821 = vpack.c.b16 %v3369, %v3365
    %v3822 = vpack.c.b16 %v3370, %v3366
    %v3823 = vpack.c.b16 %v3375, %v3371
    %v3824 = vpack.c.b16 %v3376, %v3372
    %v3825 = vpack.c.b16 %v3377, %v3373
    %v3826 = vpack.c.b16 %v3378, %v3374
    %v3827 = vpack.c.b16 %v3383, %v3379
    %v3828 = vpack.c.b16 %v3384, %v3380
    %v3829 = vpack.c.b16 %v3385, %v3381
    %v3830 = vpack.c.b16 %v3386, %v3382
    %v3831 = vpack.c.b16 %v3391, %v3387
    %v3832 = vpack.c.b16 %v3392, %v3388
    %v3833 = vpack.c.b16 %v3393, %v3389
    %v3834 = vpack.c.b16 %v3394, %v3390
    %v3835 = vpack.c.b16 %v3399, %v3395
    %v3836 = vpack.c.b16 %v3400, %v3396
    %v3837 = vpack.c.b16 %v3401, %v3397
    %v3838 = vpack.c.b16 %v3402, %v3398
    %v3839 = vpack.c.b16 %v3407, %v3403
    %v3840 = vpack.c.b16 %v3408, %v3404
    %v3841 = vpack.c.b16 %v3409, %v3405
    %v3842 = vpack.c.b16 %v3410, %v3406
    %v3843 = vpack.c.b16 %v3415, %v3411
    %v3844 = vpack.c.b16 %v3416, %v3412
    %v3845 = vpack.c.b16 %v3417, %v3413
    %v3846 = vpack.c.b16 %v3418, %v3414
    %v3847 = vpack.c.b16 %v3423, %v3419
    %v3848 = vpack.c.b16 %v3424, %v3420
    %v3849 = vpack.c.b16 %v3425, %v3421
    %v3850 = vpack.c.b16 %v3426, %v3422
    %v3851 = vpack.c.b16 %v3431, %v3427
    %v3852 = vpack.c.b16 %v3432, %v3428
    %v3853 = vpack.c.b16 %v3433, %v3429
    %v3854 = vpack.c.b16 %v3434, %v3430
    %v3855 = vpack.c.b16 %v3439, %v3435
    %v3856 = vpack.c.b16 %v3440, %v3436
    %v3857 = vpack.c.b16 %v3441, %v3437
    %v3858 = vpack.c.b16 %v3442, %v3438
    %v3859 = vpack.c.b16 %v3447, %v3443
    %v3860 = vpack.c.b16 %v3448, %v3444
    %v3861 = vpack.c.b16 %v3449, %v3445
    %v3862 = vpack.c.b16 %v3450, %v3446
    %v3863 = vpack.c.b16 %v3455, %v3451
    %v3864 = vpack.c.b16 %v3456, %v3452
    %v3865 = vpack.c.b16 %v3457, %v3453
    %v3866 = vpack.c.b16 %v3458, %v3454
    %v3867 = vpack.c.b16 %v3463, %v3459
    %v3868 = vpack.c.b16 %v3464, %v3460
    %v3869 = vpack.c.b16 %v3465, %v3461
    %v3870 = vpack.c.b16 %v3466, %v3462
    %v3871 = vpack.c.b16 %v3471, %v3467
    %v3872 = vpack.c.b16 %v3472, %v3468
    %v3873 = vpack.c.b16 %v3473, %v3469
    %v3874 = vpack.c.b16 %v3474, %v3470
    %v3875 = vpack.c.b16 %v3479, %v3475
    %v3876 = vpack.c.b16 %v3480, %v3476
    %v3877 = vpack.c.b16 %v3481, %v3477
    %v3878 = vpack.c.b16 %v3482, %v3478
    %v3879 = vpack.c.b16 %v3487, %v3483
    %v3880 = vpack.c.b16 %v3488, %v3484
    %v3881 = vpack.c.b16 %v3489, %v3485
    %v3882 = vpack.c.b16 %v3490, %v3486
    %v3883 = vpack.c.b16 %v3495, %v3491
    %v3884 = vpack.c.b16 %v3496, %v3492
    %v3885 = vpack.c.b16 %v3497, %v3493
    %v3886 = vpack.c.b16 %v3498, %v3494
    %v3887 = vpack.c.b16 %v3503, %v3499
    %v3888 = vpack.c.b16 %v3504, %v3500
    %v3889 = vpack.c.b16 %v3505, %v3501
    %v3890 = vpack.c.b16 %v3506, %v3502
    %4275 = vmatpush.bf16.msra.mxu0 %v3535
    %4276 = vmatpush.bf16.msra.mxu0 %v3531
    %4277 = vmatpush.bf16.msra.mxu0 %v3527
    %4278 = vmatpush.bf16.msra.mxu0 %v3523
    %4279 = vmatpush.bf16.msra.mxu0 %v3519
    %4280 = vmatpush.bf16.msra.mxu0 %v3515
    %4281 = vmatpush.bf16.msra.mxu0 %v3511
    %4282 = vmatpush.bf16.msra.mxu0 %v3507
    %4283 = vmatmul.bf16.gmra.mxu0 %v2331
    %v4284 = vpop.f32.mrf.mxu0
    %v4285 = vadd.f32 %v2287, %v4284
    %v4286 = vpop.f32.mrf.mxu0
    %v4287 = vadd.f32 %v2287, %v4286
    %4288 = vdwg.mxu0
    %4289 = vmatpush.bf16.msra.mxu0 %v3567
    %4290 = vmatpush.bf16.msra.mxu0 %v3563
    %4291 = vmatpush.bf16.msra.mxu0 %v3559
    %4292 = vmatpush.bf16.msra.mxu0 %v3555
    %4293 = vmatpush.bf16.msra.mxu0 %v3551
    %4294 = vmatpush.bf16.msra.mxu0 %v3547
    %4295 = vmatpush.bf16.msra.mxu0 %v3543
    %4296 = vmatpush.bf16.msra.mxu0 %v3539
    %4297 = vmatmul.bf16.gmra.mxu0 %v2332
    %v4298 = vpop.f32.mrf.mxu0
    %v4299 = vadd.f32 %v4285, %v4298
    %v4300 = vpop.f32.mrf.mxu0
    %v4301 = vadd.f32 %v4287, %v4300
    %4302 = vdwg.mxu0
    %4303 = vmatpush.bf16.msra.mxu0 %v3599
    %4304 = vmatpush.bf16.msra.mxu0 %v3595
    %4305 = vmatpush.bf16.msra.mxu0 %v3591
    %4306 = vmatpush.bf16.msra.mxu0 %v3587
    %4307 = vmatpush.bf16.msra.mxu0 %v3583
    %4308 = vmatpush.bf16.msra.mxu0 %v3579
    %4309 = vmatpush.bf16.msra.mxu0 %v3575
    %4310 = vmatpush.bf16.msra.mxu0 %v3571
    %4311 = vmatmul.bf16.gmra.mxu0 %v2333
    %v4312 = vpop.f32.mrf.mxu0
    %v4313 = vadd.f32 %v4299, %v4312
    %v4314 = vpop.f32.mrf.mxu0
    %v4315 = vadd.f32 %v4301, %v4314
    %4316 = vdwg.mxu0
    %4317 = vmatpush.bf16.msra.mxu0 %v3631
    %4318 = vmatpush.bf16.msra.mxu0 %v3627
    %4319 = vmatpush.bf16.msra.mxu0 %v3623
    %4320 = vmatpush.bf16.msra.mxu0 %v3619
    %4321 = vmatpush.bf16.msra.mxu0 %v3615
    %4322 = vmatpush.bf16.msra.mxu0 %v3611
    %4323 = vmatpush.bf16.msra.mxu0 %v3607
    %4324 = vmatpush.bf16.msra.mxu0 %v3603
    %4325 = vmatmul.bf16.gmra.mxu0 %v2334
    %v4326 = vpop.f32.mrf.mxu0
    %v4327 = vadd.f32 %v4313, %v4326
    %v4328 = vpop.f32.mrf.mxu0
    %v4329 = vadd.f32 %v4315, %v4328
    %4330 = vdwg.mxu0
    %4331 = vmatpush.bf16.msra.mxu0 %v3663
    %4332 = vmatpush.bf16.msra.mxu0 %v3659
    %4333 = vmatpush.bf16.msra.mxu0 %v3655
    %4334 = vmatpush.bf16.msra.mxu0 %v3651
    %4335 = vmatpush.bf16.msra.mxu0 %v3647
    %4336 = vmatpush.bf16.msra.mxu0 %v3643
    %4337 = vmatpush.bf16.msra.mxu0 %v3639
    %4338 = vmatpush.bf16.msra.mxu0 %v3635
    %4339 = vmatmul.bf16.gmra.mxu0 %v2335
    %v4340 = vpop.f32.mrf.mxu0
    %v4341 = vadd.f32 %v4327, %v4340
    %v4342 = vpop.f32.mrf.mxu0
    %v4343 = vadd.f32 %v4329, %v4342
    %4344 = vdwg.mxu0
    %4345 = vmatpush.bf16.msra.mxu0 %v3695
    %4346 = vmatpush.bf16.msra.mxu0 %v3691
    %4347 = vmatpush.bf16.msra.mxu0 %v3687
    %4348 = vmatpush.bf16.msra.mxu0 %v3683
    %4349 = vmatpush.bf16.msra.mxu0 %v3679
    %4350 = vmatpush.bf16.msra.mxu0 %v3675
    %4351 = vmatpush.bf16.msra.mxu0 %v3671
    %4352 = vmatpush.bf16.msra.mxu0 %v3667
    %4353 = vmatmul.bf16.gmra.mxu0 %v2336
    %v4354 = vpop.f32.mrf.mxu0
    %v4355 = vadd.f32 %v4341, %v4354
    %v4356 = vpop.f32.mrf.mxu0
    %v4357 = vadd.f32 %v4343, %v4356
    %4358 = vdwg.mxu0
    %4359 = vmatpush.bf16.msra.mxu0 %v3727
    %4360 = vmatpush.bf16.msra.mxu0 %v3723
    %4361 = vmatpush.bf16.msra.mxu0 %v3719
    %4362 = vmatpush.bf16.msra.mxu0 %v3715
    %4363 = vmatpush.bf16.msra.mxu0 %v3711
    %4364 = vmatpush.bf16.msra.mxu0 %v3707
    %4365 = vmatpush.bf16.msra.mxu0 %v3703
    %4366 = vmatpush.bf16.msra.mxu0 %v3699
    %4367 = vmatmul.bf16.gmra.mxu0 %v2337
    %v4368 = vpop.f32.mrf.mxu0
    %v4369 = vadd.f32 %v4355, %v4368
    %v4370 = vpop.f32.mrf.mxu0
    %v4371 = vadd.f32 %v4357, %v4370
    %4372 = vdwg.mxu0
    %4373 = vmatpush.bf16.msra.mxu0 %v3759
    %4374 = vmatpush.bf16.msra.mxu0 %v3755
    %4375 = vmatpush.bf16.msra.mxu0 %v3751
    %4376 = vmatpush.bf16.msra.mxu0 %v3747
    %4377 = vmatpush.bf16.msra.mxu0 %v3743
    %4378 = vmatpush.bf16.msra.mxu0 %v3739
    %4379 = vmatpush.bf16.msra.mxu0 %v3735
    %4380 = vmatpush.bf16.msra.mxu0 %v3731
    %4381 = vmatmul.bf16.gmra.mxu0 %v2338
    %v4382 = vpop.f32.mrf.mxu0
    %v4383 = vadd.f32 %v4369, %v4382
    %v4384 = vpop.f32.mrf.mxu0
    %v4385 = vadd.f32 %v4371, %v4384
    %4386 = vdwg.mxu0
    %4387 = vmatpush.bf16.msra.mxu0 %v3791
    %4388 = vmatpush.bf16.msra.mxu0 %v3787
    %4389 = vmatpush.bf16.msra.mxu0 %v3783
    %4390 = vmatpush.bf16.msra.mxu0 %v3779
    %4391 = vmatpush.bf16.msra.mxu0 %v3775
    %4392 = vmatpush.bf16.msra.mxu0 %v3771
    %4393 = vmatpush.bf16.msra.mxu0 %v3767
    %4394 = vmatpush.bf16.msra.mxu0 %v3763
    %4395 = vmatmul.bf16.gmra.mxu0 %v2339
    %v4396 = vpop.f32.mrf.mxu0
    %v4397 = vadd.f32 %v4383, %v4396
    %v4398 = vpop.f32.mrf.mxu0
    %v4399 = vadd.f32 %v4385, %v4398
    %4400 = vdwg.mxu0
    %4401 = vmatpush.bf16.msra.mxu0 %v3823
    %4402 = vmatpush.bf16.msra.mxu0 %v3819
    %4403 = vmatpush.bf16.msra.mxu0 %v3815
    %4404 = vmatpush.bf16.msra.mxu0 %v3811
    %4405 = vmatpush.bf16.msra.mxu0 %v3807
    %4406 = vmatpush.bf16.msra.mxu0 %v3803
    %4407 = vmatpush.bf16.msra.mxu0 %v3799
    %4408 = vmatpush.bf16.msra.mxu0 %v3795
    %4409 = vmatmul.bf16.gmra.mxu0 %v2340
    %v4410 = vpop.f32.mrf.mxu0
    %v4411 = vadd.f32 %v4397, %v4410
    %v4412 = vpop.f32.mrf.mxu0
    %v4413 = vadd.f32 %v4399, %v4412
    %4414 = vdwg.mxu0
    %4415 = vmatpush.bf16.msra.mxu0 %v3855
    %4416 = vmatpush.bf16.msra.mxu0 %v3851
    %4417 = vmatpush.bf16.msra.mxu0 %v3847
    %4418 = vmatpush.bf16.msra.mxu0 %v3843
    %4419 = vmatpush.bf16.msra.mxu0 %v3839
    %4420 = vmatpush.bf16.msra.mxu0 %v3835
    %4421 = vmatpush.bf16.msra.mxu0 %v3831
    %4422 = vmatpush.bf16.msra.mxu0 %v3827
    %4423 = vmatmul.bf16.gmra.mxu0 %v2341
    %v4424 = vpop.f32.mrf.mxu0
    %v4425 = vadd.f32 %v4411, %v4424
    %v4426 = vpop.f32.mrf.mxu0
    %v4427 = vadd.f32 %v4413, %v4426
    %4428 = vdwg.mxu0
    %4429 = vmatpush.bf16.msra.mxu0 %v3887
    %4430 = vmatpush.bf16.msra.mxu0 %v3883
    %4431 = vmatpush.bf16.msra.mxu0 %v3879
    %4432 = vmatpush.bf16.msra.mxu0 %v3875
    %4433 = vmatpush.bf16.msra.mxu0 %v3871
    %4434 = vmatpush.bf16.msra.mxu0 %v3867
    %4435 = vmatpush.bf16.msra.mxu0 %v3863
    %4436 = vmatpush.bf16.msra.mxu0 %v3859
    %4437 = vmatmul.bf16.gmra.mxu0 %v2342
    %v4438 = vpop.f32.mrf.mxu0
    %v4439 = vadd.f32 %v4425, %v4438
    %v4440 = vpop.f32.mrf.mxu0
    %v4441 = vadd.f32 %v4427, %v4440
    %4442 = vdwg.mxu0
    %4443 = vmatpush.bf16.msra.mxu0 %v3536
    %4444 = vmatpush.bf16.msra.mxu0 %v3532
    %4445 = vmatpush.bf16.msra.mxu0 %v3528
    %4446 = vmatpush.bf16.msra.mxu0 %v3524
    %4447 = vmatpush.bf16.msra.mxu0 %v3520
    %4448 = vmatpush.bf16.msra.mxu0 %v3516
    %4449 = vmatpush.bf16.msra.mxu0 %v3512
    %4450 = vmatpush.bf16.msra.mxu0 %v3508
    %4451 = vmatmul.bf16.gmra.mxu0 %v2331
    %v4452 = vpop.f32.mrf.mxu0
    %v4453 = vadd.f32 %v2288, %v4452
    %v4454 = vpop.f32.mrf.mxu0
    %v4455 = vadd.f32 %v2288, %v4454
    %4456 = vdwg.mxu0
    %4457 = vmatpush.bf16.msra.mxu0 %v3568
    %4458 = vmatpush.bf16.msra.mxu0 %v3564
    %4459 = vmatpush.bf16.msra.mxu0 %v3560
    %4460 = vmatpush.bf16.msra.mxu0 %v3556
    %4461 = vmatpush.bf16.msra.mxu0 %v3552
    %4462 = vmatpush.bf16.msra.mxu0 %v3548
    %4463 = vmatpush.bf16.msra.mxu0 %v3544
    %4464 = vmatpush.bf16.msra.mxu0 %v3540
    %4465 = vmatmul.bf16.gmra.mxu0 %v2332
    %v4466 = vpop.f32.mrf.mxu0
    %v4467 = vadd.f32 %v4453, %v4466
    %v4468 = vpop.f32.mrf.mxu0
    %v4469 = vadd.f32 %v4455, %v4468
    %4470 = vdwg.mxu0
    %4471 = vmatpush.bf16.msra.mxu0 %v3600
    %4472 = vmatpush.bf16.msra.mxu0 %v3596
    %4473 = vmatpush.bf16.msra.mxu0 %v3592
    %4474 = vmatpush.bf16.msra.mxu0 %v3588
    %4475 = vmatpush.bf16.msra.mxu0 %v3584
    %4476 = vmatpush.bf16.msra.mxu0 %v3580
    %4477 = vmatpush.bf16.msra.mxu0 %v3576
    %4478 = vmatpush.bf16.msra.mxu0 %v3572
    %4479 = vmatmul.bf16.gmra.mxu0 %v2333
    %v4480 = vpop.f32.mrf.mxu0
    %v4481 = vadd.f32 %v4467, %v4480
    %v4482 = vpop.f32.mrf.mxu0
    %v4483 = vadd.f32 %v4469, %v4482
    %4484 = vdwg.mxu0
    %4485 = vmatpush.bf16.msra.mxu0 %v3632
    %4486 = vmatpush.bf16.msra.mxu0 %v3628
    %4487 = vmatpush.bf16.msra.mxu0 %v3624
    %4488 = vmatpush.bf16.msra.mxu0 %v3620
    %4489 = vmatpush.bf16.msra.mxu0 %v3616
    %4490 = vmatpush.bf16.msra.mxu0 %v3612
    %4491 = vmatpush.bf16.msra.mxu0 %v3608
    %4492 = vmatpush.bf16.msra.mxu0 %v3604
    %4493 = vmatmul.bf16.gmra.mxu0 %v2334
    %v4494 = vpop.f32.mrf.mxu0
    %v4495 = vadd.f32 %v4481, %v4494
    %v4496 = vpop.f32.mrf.mxu0
    %v4497 = vadd.f32 %v4483, %v4496
    %4498 = vdwg.mxu0
    %4499 = vmatpush.bf16.msra.mxu0 %v3664
    %4500 = vmatpush.bf16.msra.mxu0 %v3660
    %4501 = vmatpush.bf16.msra.mxu0 %v3656
    %4502 = vmatpush.bf16.msra.mxu0 %v3652
    %4503 = vmatpush.bf16.msra.mxu0 %v3648
    %4504 = vmatpush.bf16.msra.mxu0 %v3644
    %4505 = vmatpush.bf16.msra.mxu0 %v3640
    %4506 = vmatpush.bf16.msra.mxu0 %v3636
    %4507 = vmatmul.bf16.gmra.mxu0 %v2335
    %v4508 = vpop.f32.mrf.mxu0
    %v4509 = vadd.f32 %v4495, %v4508
    %v4510 = vpop.f32.mrf.mxu0
    %v4511 = vadd.f32 %v4497, %v4510
    %4512 = vdwg.mxu0
    %4513 = vmatpush.bf16.msra.mxu0 %v3696
    %4514 = vmatpush.bf16.msra.mxu0 %v3692
    %4515 = vmatpush.bf16.msra.mxu0 %v3688
    %4516 = vmatpush.bf16.msra.mxu0 %v3684
    %4517 = vmatpush.bf16.msra.mxu0 %v3680
    %4518 = vmatpush.bf16.msra.mxu0 %v3676
    %4519 = vmatpush.bf16.msra.mxu0 %v3672
    %4520 = vmatpush.bf16.msra.mxu0 %v3668
    %4521 = vmatmul.bf16.gmra.mxu0 %v2336
    %v4522 = vpop.f32.mrf.mxu0
    %v4523 = vadd.f32 %v4509, %v4522
    %v4524 = vpop.f32.mrf.mxu0
    %v4525 = vadd.f32 %v4511, %v4524
    %4526 = vdwg.mxu0
    %4527 = vmatpush.bf16.msra.mxu0 %v3728
    %4528 = vmatpush.bf16.msra.mxu0 %v3724
    %4529 = vmatpush.bf16.msra.mxu0 %v3720
    %4530 = vmatpush.bf16.msra.mxu0 %v3716
    %4531 = vmatpush.bf16.msra.mxu0 %v3712
    %4532 = vmatpush.bf16.msra.mxu0 %v3708
    %4533 = vmatpush.bf16.msra.mxu0 %v3704
    %4534 = vmatpush.bf16.msra.mxu0 %v3700
    %4535 = vmatmul.bf16.gmra.mxu0 %v2337
    %v4536 = vpop.f32.mrf.mxu0
    %v4537 = vadd.f32 %v4523, %v4536
    %v4538 = vpop.f32.mrf.mxu0
    %v4539 = vadd.f32 %v4525, %v4538
    %4540 = vdwg.mxu0
    %4541 = vmatpush.bf16.msra.mxu0 %v3760
    %4542 = vmatpush.bf16.msra.mxu0 %v3756
    %4543 = vmatpush.bf16.msra.mxu0 %v3752
    %4544 = vmatpush.bf16.msra.mxu0 %v3748
    %4545 = vmatpush.bf16.msra.mxu0 %v3744
    %4546 = vmatpush.bf16.msra.mxu0 %v3740
    %4547 = vmatpush.bf16.msra.mxu0 %v3736
    %4548 = vmatpush.bf16.msra.mxu0 %v3732
    %4549 = vmatmul.bf16.gmra.mxu0 %v2338
    %v4550 = vpop.f32.mrf.mxu0
    %v4551 = vadd.f32 %v4537, %v4550
    %v4552 = vpop.f32.mrf.mxu0
    %v4553 = vadd.f32 %v4539, %v4552
    %4554 = vdwg.mxu0
    %4555 = vmatpush.bf16.msra.mxu0 %v3792
    %4556 = vmatpush.bf16.msra.mxu0 %v3788
    %4557 = vmatpush.bf16.msra.mxu0 %v3784
    %4558 = vmatpush.bf16.msra.mxu0 %v3780
    %4559 = vmatpush.bf16.msra.mxu0 %v3776
    %4560 = vmatpush.bf16.msra.mxu0 %v3772
    %4561 = vmatpush.bf16.msra.mxu0 %v3768
    %4562 = vmatpush.bf16.msra.mxu0 %v3764
    %4563 = vmatmul.bf16.gmra.mxu0 %v2339
    %v4564 = vpop.f32.mrf.mxu0
    %v4565 = vadd.f32 %v4551, %v4564
    %v4566 = vpop.f32.mrf.mxu0
    %v4567 = vadd.f32 %v4553, %v4566
    %4568 = vdwg.mxu0
    %4569 = vmatpush.bf16.msra.mxu0 %v3824
    %4570 = vmatpush.bf16.msra.mxu0 %v3820
    %4571 = vmatpush.bf16.msra.mxu0 %v3816
    %4572 = vmatpush.bf16.msra.mxu0 %v3812
    %4573 = vmatpush.bf16.msra.mxu0 %v3808
    %4574 = vmatpush.bf16.msra.mxu0 %v3804
    %4575 = vmatpush.bf16.msra.mxu0 %v3800
    %4576 = vmatpush.bf16.msra.mxu0 %v3796
    %4577 = vmatmul.bf16.gmra.mxu0 %v2340
    %v4578 = vpop.f32.mrf.mxu0
    %v4579 = vadd.f32 %v4565, %v4578
    %v4580 = vpop.f32.mrf.mxu0
    %v4581 = vadd.f32 %v4567, %v4580
    %4582 = vdwg.mxu0
    %4583 = vmatpush.bf16.msra.mxu0 %v3856
    %4584 = vmatpush.bf16.msra.mxu0 %v3852
    %4585 = vmatpush.bf16.msra.mxu0 %v3848
    %4586 = vmatpush.bf16.msra.mxu0 %v3844
    %4587 = vmatpush.bf16.msra.mxu0 %v3840
    %4588 = vmatpush.bf16.msra.mxu0 %v3836
    %4589 = vmatpush.bf16.msra.mxu0 %v3832
    %4590 = vmatpush.bf16.msra.mxu0 %v3828
    %4591 = vmatmul.bf16.gmra.mxu0 %v2341
    %v4592 = vpop.f32.mrf.mxu0
    %v4593 = vadd.f32 %v4579, %v4592
    %v4594 = vpop.f32.mrf.mxu0
    %v4595 = vadd.f32 %v4581, %v4594
    %4596 = vdwg.mxu0
    %4597 = vmatpush.bf16.msra.mxu0 %v3888
    %4598 = vmatpush.bf16.msra.mxu0 %v3884
    %4599 = vmatpush.bf16.msra.mxu0 %v3880
    %4600 = vmatpush.bf16.msra.mxu0 %v3876
    %4601 = vmatpush.bf16.msra.mxu0 %v3872
    %4602 = vmatpush.bf16.msra.mxu0 %v3868
    %4603 = vmatpush.bf16.msra.mxu0 %v3864
    %4604 = vmatpush.bf16.msra.mxu0 %v3860
    %4605 = vmatmul.bf16.gmra.mxu0 %v2342
    %v4606 = vpop.f32.mrf.mxu0
    %v4607 = vadd.f32 %v4593, %v4606
    %v4608 = vpop.f32.mrf.mxu0
    %v4609 = vadd.f32 %v4595, %v4608
    %4610 = vdwg.mxu0
    %4611 = vmatpush.bf16.msra.mxu0 %v3537
    %4612 = vmatpush.bf16.msra.mxu0 %v3533
    %4613 = vmatpush.bf16.msra.mxu0 %v3529
    %4614 = vmatpush.bf16.msra.mxu0 %v3525
    %4615 = vmatpush.bf16.msra.mxu0 %v3521
    %4616 = vmatpush.bf16.msra.mxu0 %v3517
    %4617 = vmatpush.bf16.msra.mxu0 %v3513
    %4618 = vmatpush.bf16.msra.mxu0 %v3509
    %4619 = vmatmul.bf16.gmra.mxu0 %v2331
    %v4620 = vpop.f32.mrf.mxu0
    %v4621 = vadd.f32 %v2289, %v4620
    %v4622 = vpop.f32.mrf.mxu0
    %v4623 = vadd.f32 %v2289, %v4622
    %4624 = vdwg.mxu0
    %4625 = vmatpush.bf16.msra.mxu0 %v3569
    %4626 = vmatpush.bf16.msra.mxu0 %v3565
    %4627 = vmatpush.bf16.msra.mxu0 %v3561
    %4628 = vmatpush.bf16.msra.mxu0 %v3557
    %4629 = vmatpush.bf16.msra.mxu0 %v3553
    %4630 = vmatpush.bf16.msra.mxu0 %v3549
    %4631 = vmatpush.bf16.msra.mxu0 %v3545
    %4632 = vmatpush.bf16.msra.mxu0 %v3541
    %4633 = vmatmul.bf16.gmra.mxu0 %v2332
    %v4634 = vpop.f32.mrf.mxu0
    %v4635 = vadd.f32 %v4621, %v4634
    %v4636 = vpop.f32.mrf.mxu0
    %v4637 = vadd.f32 %v4623, %v4636
    %4638 = vdwg.mxu0
    %4639 = vmatpush.bf16.msra.mxu0 %v3601
    %4640 = vmatpush.bf16.msra.mxu0 %v3597
    %4641 = vmatpush.bf16.msra.mxu0 %v3593
    %4642 = vmatpush.bf16.msra.mxu0 %v3589
    %4643 = vmatpush.bf16.msra.mxu0 %v3585
    %4644 = vmatpush.bf16.msra.mxu0 %v3581
    %4645 = vmatpush.bf16.msra.mxu0 %v3577
    %4646 = vmatpush.bf16.msra.mxu0 %v3573
    %4647 = vmatmul.bf16.gmra.mxu0 %v2333
    %v4648 = vpop.f32.mrf.mxu0
    %v4649 = vadd.f32 %v4635, %v4648
    %v4650 = vpop.f32.mrf.mxu0
    %v4651 = vadd.f32 %v4637, %v4650
    %4652 = vdwg.mxu0
    %4653 = vmatpush.bf16.msra.mxu0 %v3633
    %4654 = vmatpush.bf16.msra.mxu0 %v3629
    %4655 = vmatpush.bf16.msra.mxu0 %v3625
    %4656 = vmatpush.bf16.msra.mxu0 %v3621
    %4657 = vmatpush.bf16.msra.mxu0 %v3617
    %4658 = vmatpush.bf16.msra.mxu0 %v3613
    %4659 = vmatpush.bf16.msra.mxu0 %v3609
    %4660 = vmatpush.bf16.msra.mxu0 %v3605
    %4661 = vmatmul.bf16.gmra.mxu0 %v2334
    %v4662 = vpop.f32.mrf.mxu0
    %v4663 = vadd.f32 %v4649, %v4662
    %v4664 = vpop.f32.mrf.mxu0
    %v4665 = vadd.f32 %v4651, %v4664
    %4666 = vdwg.mxu0
    %4667 = vmatpush.bf16.msra.mxu0 %v3665
    %4668 = vmatpush.bf16.msra.mxu0 %v3661
    %4669 = vmatpush.bf16.msra.mxu0 %v3657
    %4670 = vmatpush.bf16.msra.mxu0 %v3653
    %4671 = vmatpush.bf16.msra.mxu0 %v3649
    %4672 = vmatpush.bf16.msra.mxu0 %v3645
    %4673 = vmatpush.bf16.msra.mxu0 %v3641
    %4674 = vmatpush.bf16.msra.mxu0 %v3637
    %4675 = vmatmul.bf16.gmra.mxu0 %v2335
    %v4676 = vpop.f32.mrf.mxu0
    %v4677 = vadd.f32 %v4663, %v4676
    %v4678 = vpop.f32.mrf.mxu0
    %v4679 = vadd.f32 %v4665, %v4678
    %4680 = vdwg.mxu0
    %4681 = vmatpush.bf16.msra.mxu0 %v3697
    %4682 = vmatpush.bf16.msra.mxu0 %v3693
    %4683 = vmatpush.bf16.msra.mxu0 %v3689
    %4684 = vmatpush.bf16.msra.mxu0 %v3685
    %4685 = vmatpush.bf16.msra.mxu0 %v3681
    %4686 = vmatpush.bf16.msra.mxu0 %v3677
    %4687 = vmatpush.bf16.msra.mxu0 %v3673
    %4688 = vmatpush.bf16.msra.mxu0 %v3669
    %4689 = vmatmul.bf16.gmra.mxu0 %v2336
    %v4690 = vpop.f32.mrf.mxu0
    %v4691 = vadd.f32 %v4677, %v4690
    %v4692 = vpop.f32.mrf.mxu0
    %v4693 = vadd.f32 %v4679, %v4692
    %4694 = vdwg.mxu0
    %4695 = vmatpush.bf16.msra.mxu0 %v3729
    %4696 = vmatpush.bf16.msra.mxu0 %v3725
    %4697 = vmatpush.bf16.msra.mxu0 %v3721
    %4698 = vmatpush.bf16.msra.mxu0 %v3717
    %4699 = vmatpush.bf16.msra.mxu0 %v3713
    %4700 = vmatpush.bf16.msra.mxu0 %v3709
    %4701 = vmatpush.bf16.msra.mxu0 %v3705
    %4702 = vmatpush.bf16.msra.mxu0 %v3701
    %4703 = vmatmul.bf16.gmra.mxu0 %v2337
    %v4704 = vpop.f32.mrf.mxu0
    %v4705 = vadd.f32 %v4691, %v4704
    %v4706 = vpop.f32.mrf.mxu0
    %v4707 = vadd.f32 %v4693, %v4706
    %4708 = vdwg.mxu0
    %4709 = vmatpush.bf16.msra.mxu0 %v3761
    %4710 = vmatpush.bf16.msra.mxu0 %v3757
    %4711 = vmatpush.bf16.msra.mxu0 %v3753
    %4712 = vmatpush.bf16.msra.mxu0 %v3749
    %4713 = vmatpush.bf16.msra.mxu0 %v3745
    %4714 = vmatpush.bf16.msra.mxu0 %v3741
    %4715 = vmatpush.bf16.msra.mxu0 %v3737
    %4716 = vmatpush.bf16.msra.mxu0 %v3733
    %4717 = vmatmul.bf16.gmra.mxu0 %v2338
    %v4718 = vpop.f32.mrf.mxu0
    %v4719 = vadd.f32 %v4705, %v4718
    %v4720 = vpop.f32.mrf.mxu0
    %v4721 = vadd.f32 %v4707, %v4720
    %4722 = vdwg.mxu0
    %4723 = vmatpush.bf16.msra.mxu0 %v3793
    %4724 = vmatpush.bf16.msra.mxu0 %v3789
    %4725 = vmatpush.bf16.msra.mxu0 %v3785
    %4726 = vmatpush.bf16.msra.mxu0 %v3781
    %4727 = vmatpush.bf16.msra.mxu0 %v3777
    %4728 = vmatpush.bf16.msra.mxu0 %v3773
    %4729 = vmatpush.bf16.msra.mxu0 %v3769
    %4730 = vmatpush.bf16.msra.mxu0 %v3765
    %4731 = vmatmul.bf16.gmra.mxu0 %v2339
    %v4732 = vpop.f32.mrf.mxu0
    %v4733 = vadd.f32 %v4719, %v4732
    %v4734 = vpop.f32.mrf.mxu0
    %v4735 = vadd.f32 %v4721, %v4734
    %4736 = vdwg.mxu0
    %4737 = vmatpush.bf16.msra.mxu0 %v3825
    %4738 = vmatpush.bf16.msra.mxu0 %v3821
    %4739 = vmatpush.bf16.msra.mxu0 %v3817
    %4740 = vmatpush.bf16.msra.mxu0 %v3813
    %4741 = vmatpush.bf16.msra.mxu0 %v3809
    %4742 = vmatpush.bf16.msra.mxu0 %v3805
    %4743 = vmatpush.bf16.msra.mxu0 %v3801
    %4744 = vmatpush.bf16.msra.mxu0 %v3797
    %4745 = vmatmul.bf16.gmra.mxu0 %v2340
    %v4746 = vpop.f32.mrf.mxu0
    %v4747 = vadd.f32 %v4733, %v4746
    %v4748 = vpop.f32.mrf.mxu0
    %v4749 = vadd.f32 %v4735, %v4748
    %4750 = vdwg.mxu0
    %4751 = vmatpush.bf16.msra.mxu0 %v3857
    %4752 = vmatpush.bf16.msra.mxu0 %v3853
    %4753 = vmatpush.bf16.msra.mxu0 %v3849
    %4754 = vmatpush.bf16.msra.mxu0 %v3845
    %4755 = vmatpush.bf16.msra.mxu0 %v3841
    %4756 = vmatpush.bf16.msra.mxu0 %v3837
    %4757 = vmatpush.bf16.msra.mxu0 %v3833
    %4758 = vmatpush.bf16.msra.mxu0 %v3829
    %4759 = vmatmul.bf16.gmra.mxu0 %v2341
    %v4760 = vpop.f32.mrf.mxu0
    %v4761 = vadd.f32 %v4747, %v4760
    %v4762 = vpop.f32.mrf.mxu0
    %v4763 = vadd.f32 %v4749, %v4762
    %4764 = vdwg.mxu0
    %4765 = vmatpush.bf16.msra.mxu0 %v3889
    %4766 = vmatpush.bf16.msra.mxu0 %v3885
    %4767 = vmatpush.bf16.msra.mxu0 %v3881
    %4768 = vmatpush.bf16.msra.mxu0 %v3877
    %4769 = vmatpush.bf16.msra.mxu0 %v3873
    %4770 = vmatpush.bf16.msra.mxu0 %v3869
    %4771 = vmatpush.bf16.msra.mxu0 %v3865
    %4772 = vmatpush.bf16.msra.mxu0 %v3861
    %4773 = vmatmul.bf16.gmra.mxu0 %v2342
    %v4774 = vpop.f32.mrf.mxu0
    %v4775 = vadd.f32 %v4761, %v4774
    %v4776 = vpop.f32.mrf.mxu0
    %v4777 = vadd.f32 %v4763, %v4776
    %4778 = vdwg.mxu0
    %4779 = vmatpush.bf16.msra.mxu0 %v3538
    %4780 = vmatpush.bf16.msra.mxu0 %v3534
    %4781 = vmatpush.bf16.msra.mxu0 %v3530
    %4782 = vmatpush.bf16.msra.mxu0 %v3526
    %4783 = vmatpush.bf16.msra.mxu0 %v3522
    %4784 = vmatpush.bf16.msra.mxu0 %v3518
    %4785 = vmatpush.bf16.msra.mxu0 %v3514
    %4786 = vmatpush.bf16.msra.mxu0 %v3510
    %4787 = vmatmul.bf16.gmra.mxu0 %v2331
    %v4788 = vpop.f32.mrf.mxu0
    %v4789 = vadd.f32 %v2290, %v4788
    %v4790 = vpop.f32.mrf.mxu0
    %v4791 = vadd.f32 %v2290, %v4790
    %4792 = vdwg.mxu0
    %4793 = vmatpush.bf16.msra.mxu0 %v3570
    %4794 = vmatpush.bf16.msra.mxu0 %v3566
    %4795 = vmatpush.bf16.msra.mxu0 %v3562
    %4796 = vmatpush.bf16.msra.mxu0 %v3558
    %4797 = vmatpush.bf16.msra.mxu0 %v3554
    %4798 = vmatpush.bf16.msra.mxu0 %v3550
    %4799 = vmatpush.bf16.msra.mxu0 %v3546
    %4800 = vmatpush.bf16.msra.mxu0 %v3542
    %4801 = vmatmul.bf16.gmra.mxu0 %v2332
    %v4802 = vpop.f32.mrf.mxu0
    %v4803 = vadd.f32 %v4789, %v4802
    %v4804 = vpop.f32.mrf.mxu0
    %v4805 = vadd.f32 %v4791, %v4804
    %4806 = vdwg.mxu0
    %4807 = vmatpush.bf16.msra.mxu0 %v3602
    %4808 = vmatpush.bf16.msra.mxu0 %v3598
    %4809 = vmatpush.bf16.msra.mxu0 %v3594
    %4810 = vmatpush.bf16.msra.mxu0 %v3590
    %4811 = vmatpush.bf16.msra.mxu0 %v3586
    %4812 = vmatpush.bf16.msra.mxu0 %v3582
    %4813 = vmatpush.bf16.msra.mxu0 %v3578
    %4814 = vmatpush.bf16.msra.mxu0 %v3574
    %4815 = vmatmul.bf16.gmra.mxu0 %v2333
    %v4816 = vpop.f32.mrf.mxu0
    %v4817 = vadd.f32 %v4803, %v4816
    %v4818 = vpop.f32.mrf.mxu0
    %v4819 = vadd.f32 %v4805, %v4818
    %4820 = vdwg.mxu0
    %4821 = vmatpush.bf16.msra.mxu0 %v3634
    %4822 = vmatpush.bf16.msra.mxu0 %v3630
    %4823 = vmatpush.bf16.msra.mxu0 %v3626
    %4824 = vmatpush.bf16.msra.mxu0 %v3622
    %4825 = vmatpush.bf16.msra.mxu0 %v3618
    %4826 = vmatpush.bf16.msra.mxu0 %v3614
    %4827 = vmatpush.bf16.msra.mxu0 %v3610
    %4828 = vmatpush.bf16.msra.mxu0 %v3606
    %4829 = vmatmul.bf16.gmra.mxu0 %v2334
    %v4830 = vpop.f32.mrf.mxu0
    %v4831 = vadd.f32 %v4817, %v4830
    %v4832 = vpop.f32.mrf.mxu0
    %v4833 = vadd.f32 %v4819, %v4832
    %4834 = vdwg.mxu0
    %4835 = vmatpush.bf16.msra.mxu0 %v3666
    %4836 = vmatpush.bf16.msra.mxu0 %v3662
    %4837 = vmatpush.bf16.msra.mxu0 %v3658
    %4838 = vmatpush.bf16.msra.mxu0 %v3654
    %4839 = vmatpush.bf16.msra.mxu0 %v3650
    %4840 = vmatpush.bf16.msra.mxu0 %v3646
    %4841 = vmatpush.bf16.msra.mxu0 %v3642
    %4842 = vmatpush.bf16.msra.mxu0 %v3638
    %4843 = vmatmul.bf16.gmra.mxu0 %v2335
    %v4844 = vpop.f32.mrf.mxu0
    %v4845 = vadd.f32 %v4831, %v4844
    %v4846 = vpop.f32.mrf.mxu0
    %v4847 = vadd.f32 %v4833, %v4846
    %4848 = vdwg.mxu0
    %4849 = vmatpush.bf16.msra.mxu0 %v3698
    %4850 = vmatpush.bf16.msra.mxu0 %v3694
    %4851 = vmatpush.bf16.msra.mxu0 %v3690
    %4852 = vmatpush.bf16.msra.mxu0 %v3686
    %4853 = vmatpush.bf16.msra.mxu0 %v3682
    %4854 = vmatpush.bf16.msra.mxu0 %v3678
    %4855 = vmatpush.bf16.msra.mxu0 %v3674
    %4856 = vmatpush.bf16.msra.mxu0 %v3670
    %4857 = vmatmul.bf16.gmra.mxu0 %v2336
    %v4858 = vpop.f32.mrf.mxu0
    %v4859 = vadd.f32 %v4845, %v4858
    %v4860 = vpop.f32.mrf.mxu0
    %v4861 = vadd.f32 %v4847, %v4860
    %4862 = vdwg.mxu0
    %4863 = vmatpush.bf16.msra.mxu0 %v3730
    %4864 = vmatpush.bf16.msra.mxu0 %v3726
    %4865 = vmatpush.bf16.msra.mxu0 %v3722
    %4866 = vmatpush.bf16.msra.mxu0 %v3718
    %4867 = vmatpush.bf16.msra.mxu0 %v3714
    %4868 = vmatpush.bf16.msra.mxu0 %v3710
    %4869 = vmatpush.bf16.msra.mxu0 %v3706
    %4870 = vmatpush.bf16.msra.mxu0 %v3702
    %4871 = vmatmul.bf16.gmra.mxu0 %v2337
    %v4872 = vpop.f32.mrf.mxu0
    %v4873 = vadd.f32 %v4859, %v4872
    %v4874 = vpop.f32.mrf.mxu0
    %v4875 = vadd.f32 %v4861, %v4874
    %4876 = vdwg.mxu0
    %4877 = vmatpush.bf16.msra.mxu0 %v3762
    %4878 = vmatpush.bf16.msra.mxu0 %v3758
    %4879 = vmatpush.bf16.msra.mxu0 %v3754
    %4880 = vmatpush.bf16.msra.mxu0 %v3750
    %4881 = vmatpush.bf16.msra.mxu0 %v3746
    %4882 = vmatpush.bf16.msra.mxu0 %v3742
    %4883 = vmatpush.bf16.msra.mxu0 %v3738
    %4884 = vmatpush.bf16.msra.mxu0 %v3734
    %4885 = vmatmul.bf16.gmra.mxu0 %v2338
    %v4886 = vpop.f32.mrf.mxu0
    %v4887 = vadd.f32 %v4873, %v4886
    %v4888 = vpop.f32.mrf.mxu0
    %v4889 = vadd.f32 %v4875, %v4888
    %4890 = vdwg.mxu0
    %4891 = vmatpush.bf16.msra.mxu0 %v3794
    %4892 = vmatpush.bf16.msra.mxu0 %v3790
    %4893 = vmatpush.bf16.msra.mxu0 %v3786
    %4894 = vmatpush.bf16.msra.mxu0 %v3782
    %4895 = vmatpush.bf16.msra.mxu0 %v3778
    %4896 = vmatpush.bf16.msra.mxu0 %v3774
    %4897 = vmatpush.bf16.msra.mxu0 %v3770
    %4898 = vmatpush.bf16.msra.mxu0 %v3766
    %4899 = vmatmul.bf16.gmra.mxu0 %v2339
    %v4900 = vpop.f32.mrf.mxu0
    %v4901 = vadd.f32 %v4887, %v4900
    %v4902 = vpop.f32.mrf.mxu0
    %v4903 = vadd.f32 %v4889, %v4902
    %4904 = vdwg.mxu0
    %4905 = vmatpush.bf16.msra.mxu0 %v3826
    %4906 = vmatpush.bf16.msra.mxu0 %v3822
    %4907 = vmatpush.bf16.msra.mxu0 %v3818
    %4908 = vmatpush.bf16.msra.mxu0 %v3814
    %4909 = vmatpush.bf16.msra.mxu0 %v3810
    %4910 = vmatpush.bf16.msra.mxu0 %v3806
    %4911 = vmatpush.bf16.msra.mxu0 %v3802
    %4912 = vmatpush.bf16.msra.mxu0 %v3798
    %4913 = vmatmul.bf16.gmra.mxu0 %v2340
    %v4914 = vpop.f32.mrf.mxu0
    %v4915 = vadd.f32 %v4901, %v4914
    %v4916 = vpop.f32.mrf.mxu0
    %v4917 = vadd.f32 %v4903, %v4916
    %4918 = vdwg.mxu0
    %4919 = vmatpush.bf16.msra.mxu0 %v3858
    %4920 = vmatpush.bf16.msra.mxu0 %v3854
    %4921 = vmatpush.bf16.msra.mxu0 %v3850
    %4922 = vmatpush.bf16.msra.mxu0 %v3846
    %4923 = vmatpush.bf16.msra.mxu0 %v3842
    %4924 = vmatpush.bf16.msra.mxu0 %v3838
    %4925 = vmatpush.bf16.msra.mxu0 %v3834
    %4926 = vmatpush.bf16.msra.mxu0 %v3830
    %4927 = vmatmul.bf16.gmra.mxu0 %v2341
    %v4928 = vpop.f32.mrf.mxu0
    %v4929 = vadd.f32 %v4915, %v4928
    %v4930 = vpop.f32.mrf.mxu0
    %v4931 = vadd.f32 %v4917, %v4930
    %4932 = vdwg.mxu0
    %4933 = vmatpush.bf16.msra.mxu0 %v3890
    %4934 = vmatpush.bf16.msra.mxu0 %v3886
    %4935 = vmatpush.bf16.msra.mxu0 %v3882
    %4936 = vmatpush.bf16.msra.mxu0 %v3878
    %4937 = vmatpush.bf16.msra.mxu0 %v3874
    %4938 = vmatpush.bf16.msra.mxu0 %v3870
    %4939 = vmatpush.bf16.msra.mxu0 %v3866
    %4940 = vmatpush.bf16.msra.mxu0 %v3862
    %4941 = vmatmul.bf16.gmra.mxu0 %v2342
    %v4942 = vpop.f32.mrf.mxu0
    %v4943 = vadd.f32 %v4929, %v4942
    %v4944 = vpop.f32.mrf.mxu0
    %v4945 = vadd.f32 %v4931, %v4944
    %4946 = vdwg.mxu0
    %v4947 = vmax.f32 %v4439, 0.0
    %v4948 = vmax.f32 %v4607, 0.0
    %v4949 = vmax.f32 %v4775, 0.0
    %v4950 = vmax.f32 %v4943, 0.0
    %v4951 = vmax.f32 %v4441, 0.0
    %v4952 = vmax.f32 %v4609, 0.0
    %v4953 = vmax.f32 %v4777, 0.0
    %v4954 = vmax.f32 %v4945, 0.0
    %v4955 = vpack.c.bf16 %v4951, %v4947
    %v4956 = vpack.c.bf16 %v4952, %v4948
    %v4957 = vpack.c.bf16 %v4953, %v4949
    %v4958 = vpack.c.bf16 %v4954, %v4950
    %v4959 = vld [vmem:[#allocation13] sm:$0xff]
    %v4960 = vld [vmem:[#allocation13 + $0x8] sm:$0xff]
    %v4961 = vld [vmem:[#allocation13 + $0x10] sm:$0xff]
    %v4962 = vld [vmem:[#allocation13 + $0x18] sm:$0xff]
    %v4963 = vld [vmem:[#allocation13 + $0x20] sm:$0xff]
    %v4964 = vld [vmem:[#allocation13 + $0x28] sm:$0xff]
    %v4965 = vld [vmem:[#allocation13 + $0x30] sm:$0xff]
    %v4966 = vld [vmem:[#allocation13 + $0x38] sm:$0xff]
    %v4967 = vld [vmem:[#allocation13 + $0x40] sm:$0xff]
    %v4968 = vld [vmem:[#allocation13 + $0x48] sm:$0xff]
    %v4969 = vld [vmem:[#allocation13 + $0x50] sm:$0xff]
    %v4970 = vld [vmem:[#allocation13 + $0x58] sm:$0xff]
    %v4971 = vld [vmem:[#allocation13 + $0x60] sm:$0xff]
    %v4972 = vld [vmem:[#allocation13 + $0x68] sm:$0xff]
    %v4973 = vld [vmem:[#allocation13 + $0x70] sm:$0xff]
    %v4974 = vld [vmem:[#allocation13 + $0x78] sm:$0xff]
    %v4975 = vld [vmem:[#allocation13 + $0x80] sm:$0xff]
    %v4976 = vld [vmem:[#allocation13 + $0x88] sm:$0xff]
    %v4977 = vld [vmem:[#allocation13 + $0x90] sm:$0xff]
    %v4978 = vld [vmem:[#allocation13 + $0x98] sm:$0xff]
    %v4979 = vld [vmem:[#allocation13 + $0xa0] sm:$0xff]
    %v4980 = vld [vmem:[#allocation13 + $0xa8] sm:$0xff]
    %v4981 = vld [vmem:[#allocation13 + $0xb0] sm:$0xff]
    %v4982 = vld [vmem:[#allocation13 + $0xb8] sm:$0xff]
    %v4983 = vld [vmem:[#allocation13 + $0xc0] sm:$0xff]
    %v4984 = vld [vmem:[#allocation13 + $0xc8] sm:$0xff]
    %v4985 = vld [vmem:[#allocation13 + $0xd0] sm:$0xff]
    %v4986 = vld [vmem:[#allocation13 + $0xd8] sm:$0xff]
    %v4987 = vld [vmem:[#allocation13 + $0xe0] sm:$0xff]
    %v4988 = vld [vmem:[#allocation13 + $0xe8] sm:$0xff]
    %v4989 = vld [vmem:[#allocation13 + $0xf0] sm:$0xff]
    %v4990 = vld [vmem:[#allocation13 + $0xf8] sm:$0xff]
    %v4991 = vld [vmem:[#allocation13 + $0x100] sm:$0xff]
    %v4992 = vld [vmem:[#allocation13 + $0x108] sm:$0xff]
    %v4993 = vld [vmem:[#allocation13 + $0x110] sm:$0xff]
    %v4994 = vld [vmem:[#allocation13 + $0x118] sm:$0xff]
    %v4995 = vld [vmem:[#allocation13 + $0x120] sm:$0xff]
    %v4996 = vld [vmem:[#allocation13 + $0x128] sm:$0xff]
    %v4997 = vld [vmem:[#allocation13 + $0x130] sm:$0xff]
    %v4998 = vld [vmem:[#allocation13 + $0x138] sm:$0xff]
    %v4999 = vld [vmem:[#allocation13 + $0x140] sm:$0xff]
    %v5000 = vld [vmem:[#allocation13 + $0x148] sm:$0xff]
    %v5001 = vld [vmem:[#allocation13 + $0x150] sm:$0xff]
    %v5002 = vld [vmem:[#allocation13 + $0x158] sm:$0xff]
    %v5003 = vld [vmem:[#allocation13 + $0x160] sm:$0xff]
    %v5004 = vld [vmem:[#allocation13 + $0x168] sm:$0xff]
    %v5005 = vld [vmem:[#allocation13 + $0x170] sm:$0xff]
    %v5006 = vld [vmem:[#allocation13 + $0x178] sm:$0xff]
    %v5007 = vld [vmem:[#allocation13 + $0x180] sm:$0xff]
    %v5008 = vld [vmem:[#allocation13 + $0x188] sm:$0xff]
    %v5009 = vld [vmem:[#allocation13 + $0x190] sm:$0xff]
    %v5010 = vld [vmem:[#allocation13 + $0x198] sm:$0xff]
    %v5011 = vld [vmem:[#allocation13 + $0x1a0] sm:$0xff]
    %v5012 = vld [vmem:[#allocation13 + $0x1a8] sm:$0xff]
    %v5013 = vld [vmem:[#allocation13 + $0x1b0] sm:$0xff]
    %v5014 = vld [vmem:[#allocation13 + $0x1b8] sm:$0xff]
    %v5015 = vld [vmem:[#allocation13 + $0x1c0] sm:$0xff]
    %v5016 = vld [vmem:[#allocation13 + $0x1c8] sm:$0xff]
    %v5017 = vld [vmem:[#allocation13 + $0x1d0] sm:$0xff]
    %v5018 = vld [vmem:[#allocation13 + $0x1d8] sm:$0xff]
    %v5019 = vld [vmem:[#allocation13 + $0x1e0] sm:$0xff]
    %v5020 = vld [vmem:[#allocation13 + $0x1e8] sm:$0xff]
    %v5021 = vld [vmem:[#allocation13 + $0x1f0] sm:$0xff]
    %v5022 = vld [vmem:[#allocation13 + $0x1f8] sm:$0xff]
    %v5023 = vld [vmem:[#allocation14] sm:$0x3]
    %v5025 = vperm.slane %v5023, 0
    %v5026 = vperm.slane %v5023, 1
    %v5093 = vunpack.c.l.b16 %v4959
    %v5094 = vunpack.c.h.b16 %v4959
    %v5095 = vunpack.c.l.b16 %v4960
    %v5096 = vunpack.c.h.b16 %v4960
    %v5097 = vunpack.c.l.b16 %v4961
    %v5098 = vunpack.c.h.b16 %v4961
    %v5099 = vunpack.c.l.b16 %v4962
    %v5100 = vunpack.c.h.b16 %v4962
    %v5101 = vunpack.c.l.b16 %v4963
    %v5102 = vunpack.c.h.b16 %v4963
    %v5103 = vunpack.c.l.b16 %v4964
    %v5104 = vunpack.c.h.b16 %v4964
    %v5105 = vunpack.c.l.b16 %v4965
    %v5106 = vunpack.c.h.b16 %v4965
    %v5107 = vunpack.c.l.b16 %v4966
    %v5108 = vunpack.c.h.b16 %v4966
    %v5109 = vunpack.c.l.b16 %v4967
    %v5110 = vunpack.c.h.b16 %v4967
    %v5111 = vunpack.c.l.b16 %v4968
    %v5112 = vunpack.c.h.b16 %v4968
    %v5113 = vunpack.c.l.b16 %v4969
    %v5114 = vunpack.c.h.b16 %v4969
    %v5115 = vunpack.c.l.b16 %v4970
    %v5116 = vunpack.c.h.b16 %v4970
    %v5117 = vunpack.c.l.b16 %v4971
    %v5118 = vunpack.c.h.b16 %v4971
    %v5119 = vunpack.c.l.b16 %v4972
    %v5120 = vunpack.c.h.b16 %v4972
    %v5121 = vunpack.c.l.b16 %v4973
    %v5122 = vunpack.c.h.b16 %v4973
    %v5123 = vunpack.c.l.b16 %v4974
    %v5124 = vunpack.c.h.b16 %v4974
    %v5125 = vunpack.c.l.b16 %v4975
    %v5126 = vunpack.c.h.b16 %v4975
    %v5127 = vunpack.c.l.b16 %v4976
    %v5128 = vunpack.c.h.b16 %v4976
    %v5129 = vunpack.c.l.b16 %v4977
    %v5130 = vunpack.c.h.b16 %v4977
    %v5131 = vunpack.c.l.b16 %v4978
    %v5132 = vunpack.c.h.b16 %v4978
    %v5133 = vunpack.c.l.b16 %v4979
    %v5134 = vunpack.c.h.b16 %v4979
    %v5135 = vunpack.c.l.b16 %v4980
    %v5136 = vunpack.c.h.b16 %v4980
    %v5137 = vunpack.c.l.b16 %v4981
    %v5138 = vunpack.c.h.b16 %v4981
    %v5139 = vunpack.c.l.b16 %v4982
    %v5140 = vunpack.c.h.b16 %v4982
    %v5141 = vunpack.c.l.b16 %v4983
    %v5142 = vunpack.c.h.b16 %v4983
    %v5143 = vunpack.c.l.b16 %v4984
    %v5144 = vunpack.c.h.b16 %v4984
    %v5145 = vunpack.c.l.b16 %v4985
    %v5146 = vunpack.c.h.b16 %v4985
    %v5147 = vunpack.c.l.b16 %v4986
    %v5148 = vunpack.c.h.b16 %v4986
    %v5149 = vunpack.c.l.b16 %v4987
    %v5150 = vunpack.c.h.b16 %v4987
    %v5151 = vunpack.c.l.b16 %v4988
    %v5152 = vunpack.c.h.b16 %v4988
    %v5153 = vunpack.c.l.b16 %v4989
    %v5154 = vunpack.c.h.b16 %v4989
    %v5155 = vunpack.c.l.b16 %v4990
    %v5156 = vunpack.c.h.b16 %v4990
    %v5157 = vunpack.c.l.b16 %v4991
    %v5158 = vunpack.c.h.b16 %v4991
    %v5159 = vunpack.c.l.b16 %v4992
    %v5160 = vunpack.c.h.b16 %v4992
    %v5161 = vunpack.c.l.b16 %v4993
    %v5162 = vunpack.c.h.b16 %v4993
    %v5163 = vunpack.c.l.b16 %v4994
    %v5164 = vunpack.c.h.b16 %v4994
    %v5165 = vunpack.c.l.b16 %v4995
    %v5166 = vunpack.c.h.b16 %v4995
    %v5167 = vunpack.c.l.b16 %v4996
    %v5168 = vunpack.c.h.b16 %v4996
    %v5169 = vunpack.c.l.b16 %v4997
    %v5170 = vunpack.c.h.b16 %v4997
    %v5171 = vunpack.c.l.b16 %v4998
    %v5172 = vunpack.c.h.b16 %v4998
    %v5173 = vunpack.c.l.b16 %v4999
    %v5174 = vunpack.c.h.b16 %v4999
    %v5175 = vunpack.c.l.b16 %v5000
    %v5176 = vunpack.c.h.b16 %v5000
    %v5177 = vunpack.c.l.b16 %v5001
    %v5178 = vunpack.c.h.b16 %v5001
    %v5179 = vunpack.c.l.b16 %v5002
    %v5180 = vunpack.c.h.b16 %v5002
    %v5181 = vunpack.c.l.b16 %v5003
    %v5182 = vunpack.c.h.b16 %v5003
    %v5183 = vunpack.c.l.b16 %v5004
    %v5184 = vunpack.c.h.b16 %v5004
    %v5185 = vunpack.c.l.b16 %v5005
    %v5186 = vunpack.c.h.b16 %v5005
    %v5187 = vunpack.c.l.b16 %v5006
    %v5188 = vunpack.c.h.b16 %v5006
    %v5189 = vunpack.c.l.b16 %v5007
    %v5190 = vunpack.c.h.b16 %v5007
    %v5191 = vunpack.c.l.b16 %v5008
    %v5192 = vunpack.c.h.b16 %v5008
    %v5193 = vunpack.c.l.b16 %v5009
    %v5194 = vunpack.c.h.b16 %v5009
    %v5195 = vunpack.c.l.b16 %v5010
    %v5196 = vunpack.c.h.b16 %v5010
    %v5197 = vunpack.c.l.b16 %v5011
    %v5198 = vunpack.c.h.b16 %v5011
    %v5199 = vunpack.c.l.b16 %v5012
    %v5200 = vunpack.c.h.b16 %v5012
    %v5201 = vunpack.c.l.b16 %v5013
    %v5202 = vunpack.c.h.b16 %v5013
    %v5203 = vunpack.c.l.b16 %v5014
    %v5204 = vunpack.c.h.b16 %v5014
    %v5205 = vunpack.c.l.b16 %v5015
    %v5206 = vunpack.c.h.b16 %v5015
    %v5207 = vunpack.c.l.b16 %v5016
    %v5208 = vunpack.c.h.b16 %v5016
    %v5209 = vunpack.c.l.b16 %v5017
    %v5210 = vunpack.c.h.b16 %v5017
    %v5211 = vunpack.c.l.b16 %v5018
    %v5212 = vunpack.c.h.b16 %v5018
    %v5213 = vunpack.c.l.b16 %v5019
    %v5214 = vunpack.c.h.b16 %v5019
    %v5215 = vunpack.c.l.b16 %v5020
    %v5216 = vunpack.c.h.b16 %v5020
    %v5217 = vunpack.c.l.b16 %v5021
    %v5218 = vunpack.c.h.b16 %v5021
    %v5219 = vunpack.c.l.b16 %v5022
    %v5220 = vunpack.c.h.b16 %v5022
    %v5221 = vpack.c.b16 %v5095, %v5093
    %v5222 = vpack.c.b16 %v5096, %v5094
    %v5223 = vpack.c.b16 %v5099, %v5097
    %v5224 = vpack.c.b16 %v5100, %v5098
    %v5225 = vpack.c.b16 %v5103, %v5101
    %v5226 = vpack.c.b16 %v5104, %v5102
    %v5227 = vpack.c.b16 %v5107, %v5105
    %v5228 = vpack.c.b16 %v5108, %v5106
    %v5229 = vpack.c.b16 %v5111, %v5109
    %v5230 = vpack.c.b16 %v5112, %v5110
    %v5231 = vpack.c.b16 %v5115, %v5113
    %v5232 = vpack.c.b16 %v5116, %v5114
    %v5233 = vpack.c.b16 %v5119, %v5117
    %v5234 = vpack.c.b16 %v5120, %v5118
    %v5235 = vpack.c.b16 %v5123, %v5121
    %v5236 = vpack.c.b16 %v5124, %v5122
    %v5237 = vpack.c.b16 %v5127, %v5125
    %v5238 = vpack.c.b16 %v5128, %v5126
    %v5239 = vpack.c.b16 %v5131, %v5129
    %v5240 = vpack.c.b16 %v5132, %v5130
    %v5241 = vpack.c.b16 %v5135, %v5133
    %v5242 = vpack.c.b16 %v5136, %v5134
    %v5243 = vpack.c.b16 %v5139, %v5137
    %v5244 = vpack.c.b16 %v5140, %v5138
    %v5245 = vpack.c.b16 %v5143, %v5141
    %v5246 = vpack.c.b16 %v5144, %v5142
    %v5247 = vpack.c.b16 %v5147, %v5145
    %v5248 = vpack.c.b16 %v5148, %v5146
    %v5249 = vpack.c.b16 %v5151, %v5149
    %v5250 = vpack.c.b16 %v5152, %v5150
    %v5251 = vpack.c.b16 %v5155, %v5153
    %v5252 = vpack.c.b16 %v5156, %v5154
    %v5253 = vpack.c.b16 %v5159, %v5157
    %v5254 = vpack.c.b16 %v5160, %v5158
    %v5255 = vpack.c.b16 %v5163, %v5161
    %v5256 = vpack.c.b16 %v5164, %v5162
    %v5257 = vpack.c.b16 %v5167, %v5165
    %v5258 = vpack.c.b16 %v5168, %v5166
    %v5259 = vpack.c.b16 %v5171, %v5169
    %v5260 = vpack.c.b16 %v5172, %v5170
    %v5261 = vpack.c.b16 %v5175, %v5173
    %v5262 = vpack.c.b16 %v5176, %v5174
    %v5263 = vpack.c.b16 %v5179, %v5177
    %v5264 = vpack.c.b16 %v5180, %v5178
    %v5265 = vpack.c.b16 %v5183, %v5181
    %v5266 = vpack.c.b16 %v5184, %v5182
    %v5267 = vpack.c.b16 %v5187, %v5185
    %v5268 = vpack.c.b16 %v5188, %v5186
    %v5269 = vpack.c.b16 %v5191, %v5189
    %v5270 = vpack.c.b16 %v5192, %v5190
    %v5271 = vpack.c.b16 %v5195, %v5193
    %v5272 = vpack.c.b16 %v5196, %v5194
    %v5273 = vpack.c.b16 %v5199, %v5197
    %v5274 = vpack.c.b16 %v5200, %v5198
    %v5275 = vpack.c.b16 %v5203, %v5201
    %v5276 = vpack.c.b16 %v5204, %v5202
    %v5277 = vpack.c.b16 %v5207, %v5205
    %v5278 = vpack.c.b16 %v5208, %v5206
    %v5279 = vpack.c.b16 %v5211, %v5209
    %v5280 = vpack.c.b16 %v5212, %v5210
    %v5281 = vpack.c.b16 %v5215, %v5213
    %v5282 = vpack.c.b16 %v5216, %v5214
    %v5283 = vpack.c.b16 %v5219, %v5217
    %v5284 = vpack.c.b16 %v5220, %v5218
    %5349 = vmatpush.bf16.msra.mxu0 %v5235
    %5350 = vmatpush.bf16.msra.mxu0 %v5233
    %5351 = vmatpush.bf16.msra.mxu0 %v5231
    %5352 = vmatpush.bf16.msra.mxu0 %v5229
    %5353 = vmatpush.bf16.msra.mxu0 %v5227
    %5354 = vmatpush.bf16.msra.mxu0 %v5225
    %5355 = vmatpush.bf16.msra.mxu0 %v5223
    %5356 = vmatpush.bf16.msra.mxu0 %v5221
    %5357 = vmatmul.bf16.gmra.mxu0 %v4955
    %v5358 = vpop.f32.mrf.mxu0
    %v5359 = vadd.f32 %v5025, %v5358
    %v5360 = vpop.f32.mrf.mxu0
    %v5361 = vadd.f32 %v5025, %v5360
    %5362 = vdwg.mxu0
    %5363 = vmatpush.bf16.msra.mxu0 %v5251
    %5364 = vmatpush.bf16.msra.mxu0 %v5249
    %5365 = vmatpush.bf16.msra.mxu0 %v5247
    %5366 = vmatpush.bf16.msra.mxu0 %v5245
    %5367 = vmatpush.bf16.msra.mxu0 %v5243
    %5368 = vmatpush.bf16.msra.mxu0 %v5241
    %5369 = vmatpush.bf16.msra.mxu0 %v5239
    %5370 = vmatpush.bf16.msra.mxu0 %v5237
    %5371 = vmatmul.bf16.gmra.mxu0 %v4956
    %v5372 = vpop.f32.mrf.mxu0
    %v5373 = vadd.f32 %v5359, %v5372
    %v5374 = vpop.f32.mrf.mxu0
    %v5375 = vadd.f32 %v5361, %v5374
    %5376 = vdwg.mxu0
    %5377 = vmatpush.bf16.msra.mxu0 %v5267
    %5378 = vmatpush.bf16.msra.mxu0 %v5265
    %5379 = vmatpush.bf16.msra.mxu0 %v5263
    %5380 = vmatpush.bf16.msra.mxu0 %v5261
    %5381 = vmatpush.bf16.msra.mxu0 %v5259
    %5382 = vmatpush.bf16.msra.mxu0 %v5257
    %5383 = vmatpush.bf16.msra.mxu0 %v5255
    %5384 = vmatpush.bf16.msra.mxu0 %v5253
    %5385 = vmatmul.bf16.gmra.mxu0 %v4957
    %v5386 = vpop.f32.mrf.mxu0
    %v5387 = vadd.f32 %v5373, %v5386
    %v5388 = vpop.f32.mrf.mxu0
    %v5389 = vadd.f32 %v5375, %v5388
    %5390 = vdwg.mxu0
    %5391 = vmatpush.bf16.msra.mxu0 %v5283
    %5392 = vmatpush.bf16.msra.mxu0 %v5281
    %5393 = vmatpush.bf16.msra.mxu0 %v5279
    %5394 = vmatpush.bf16.msra.mxu0 %v5277
    %5395 = vmatpush.bf16.msra.mxu0 %v5275
    %5396 = vmatpush.bf16.msra.mxu0 %v5273
    %5397 = vmatpush.bf16.msra.mxu0 %v5271
    %5398 = vmatpush.bf16.msra.mxu0 %v5269
    %5399 = vmatmul.bf16.gmra.mxu0 %v4958
    %v5400 = vpop.f32.mrf.mxu0
    %v5401 = vadd.f32 %v5387, %v5400
    %v5402 = vpop.f32.mrf.mxu0
    %v5403 = vadd.f32 %v5389, %v5402
    %5404 = vdwg.mxu0
    %5405 = vmatpush.bf16.msra.mxu0 %v5236
    %5406 = vmatpush.bf16.msra.mxu0 %v5234
    %5407 = vmatpush.bf16.msra.mxu0 %v5232
    %5408 = vmatpush.bf16.msra.mxu0 %v5230
    %5409 = vmatpush.bf16.msra.mxu0 %v5228
    %5410 = vmatpush.bf16.msra.mxu0 %v5226
    %5411 = vmatpush.bf16.msra.mxu0 %v5224
    %5412 = vmatpush.bf16.msra.mxu0 %v5222
    %5413 = vmatmul.bf16.gmra.mxu0 %v4955
    %v5414 = vpop.f32.mrf.mxu0
    %v5415 = vadd.f32 %v5026, %v5414
    %v5416 = vpop.f32.mrf.mxu0
    %v5417 = vadd.f32 %v5026, %v5416
    %5418 = vdwg.mxu0
    %5419 = vmatpush.bf16.msra.mxu0 %v5252
    %5420 = vmatpush.bf16.msra.mxu0 %v5250
    %5421 = vmatpush.bf16.msra.mxu0 %v5248
    %5422 = vmatpush.bf16.msra.mxu0 %v5246
    %5423 = vmatpush.bf16.msra.mxu0 %v5244
    %5424 = vmatpush.bf16.msra.mxu0 %v5242
    %5425 = vmatpush.bf16.msra.mxu0 %v5240
    %5426 = vmatpush.bf16.msra.mxu0 %v5238
    %5427 = vmatmul.bf16.gmra.mxu0 %v4956
    %v5428 = vpop.f32.mrf.mxu0
    %v5429 = vadd.f32 %v5415, %v5428
    %v5430 = vpop.f32.mrf.mxu0
    %v5431 = vadd.f32 %v5417, %v5430
    %5432 = vdwg.mxu0
    %5433 = vmatpush.bf16.msra.mxu0 %v5268
    %5434 = vmatpush.bf16.msra.mxu0 %v5266
    %5435 = vmatpush.bf16.msra.mxu0 %v5264
    %5436 = vmatpush.bf16.msra.mxu0 %v5262
    %5437 = vmatpush.bf16.msra.mxu0 %v5260
    %5438 = vmatpush.bf16.msra.mxu0 %v5258
    %5439 = vmatpush.bf16.msra.mxu0 %v5256
    %5440 = vmatpush.bf16.msra.mxu0 %v5254
    %5441 = vmatmul.bf16.gmra.mxu0 %v4957
    %v5442 = vpop.f32.mrf.mxu0
    %v5443 = vadd.f32 %v5429, %v5442
    %v5444 = vpop.f32.mrf.mxu0
    %v5445 = vadd.f32 %v5431, %v5444
    %5446 = vdwg.mxu0
    %5447 = vmatpush.bf16.msra.mxu0 %v5284
    %5448 = vmatpush.bf16.msra.mxu0 %v5282
    %5449 = vmatpush.bf16.msra.mxu0 %v5280
    %5450 = vmatpush.bf16.msra.mxu0 %v5278
    %5451 = vmatpush.bf16.msra.mxu0 %v5276
    %5452 = vmatpush.bf16.msra.mxu0 %v5274
    %5453 = vmatpush.bf16.msra.mxu0 %v5272
    %5454 = vmatpush.bf16.msra.mxu0 %v5270
    %5455 = vmatmul.bf16.gmra.mxu0 %v4958
    %v5456 = vpop.f32.mrf.mxu0
    %v5457 = vadd.f32 %v5443, %v5456
    %v5458 = vpop.f32.mrf.mxu0
    %v5459 = vadd.f32 %v5445, %v5458
    %5460 = vdwg.mxu0
    %v5461 = vmax.f32 %v5401, 0.0
    %v5462 = vmax.f32 %v5457, 0.0
    %v5463 = vmax.f32 %v5403, 0.0
    %v5464 = vmax.f32 %v5459, 0.0
    %v5465 = vpack.c.bf16 %v5463, %v5461
    %v5466 = vpack.c.bf16 %v5464, %v5462
    %v5467 = vld [vmem:[%s12] sm:$0xf]
    %v5468 = vld [vmem:[%s12 + $0x4] sm:$0xf]
    %v5469 = vld [vmem:[%s12 + $0x8] sm:$0xf]
    %v5470 = vld [vmem:[%s12 + $0xc] sm:$0xf]
    %v5471 = vld [vmem:[%s12 + $0x10] sm:$0xf]
    %v5472 = vld [vmem:[%s12 + $0x14] sm:$0xf]
    %v5473 = vld [vmem:[%s12 + $0x18] sm:$0xf]
    %v5474 = vld [vmem:[%s12 + $0x1c] sm:$0xf]
    %v5475 = vld [vmem:[%s12 + $0x20] sm:$0xf]
    %v5476 = vld [vmem:[%s12 + $0x24] sm:$0xf]
    %v5477 = vld [vmem:[%s12 + $0x28] sm:$0xf]
    %v5478 = vld [vmem:[%s12 + $0x2c] sm:$0xf]
    %v5479 = vld [vmem:[%s12 + $0x30] sm:$0xf]
    %v5480 = vld [vmem:[%s12 + $0x34] sm:$0xf]
    %v5481 = vld [vmem:[%s12 + $0x38] sm:$0xf]
    %v5482 = vld [vmem:[%s12 + $0x3c] sm:$0xf]
    %v5483 = vld [vmem:[%s12 + $0x40] sm:$0xf]
    %v5484 = vld [vmem:[%s12 + $0x44] sm:$0xf]
    %v5485 = vld [vmem:[%s12 + $0x48] sm:$0xf]
    %v5486 = vld [vmem:[%s12 + $0x4c] sm:$0xf]
    %v5487 = vld [vmem:[%s12 + $0x50] sm:$0xf]
    %v5488 = vld [vmem:[%s12 + $0x54] sm:$0xf]
    %v5489 = vld [vmem:[%s12 + $0x58] sm:$0xf]
    %v5490 = vld [vmem:[%s12 + $0x5c] sm:$0xf]
    %v5491 = vld [vmem:[%s12 + $0x60] sm:$0xf]
    %v5492 = vld [vmem:[%s12 + $0x64] sm:$0xf]
    %v5493 = vld [vmem:[%s12 + $0x68] sm:$0xf]
    %v5494 = vld [vmem:[%s12 + $0x6c] sm:$0xf]
    %v5495 = vld [vmem:[%s12 + $0x70] sm:$0xf]
    %v5496 = vld [vmem:[%s12 + $0x74] sm:$0xf]
    %v5497 = vld [vmem:[%s12 + $0x78] sm:$0xf]
    %v5498 = vld [vmem:[%s12 + $0x7c] sm:$0xf]
    %v5499 = vld [vmem:[#allocation16] sm:$0x1]
    %v5501 = vperm.slane %v5499, 0
    %v5535 = vunpack.c.l.b16 %v5467
    %v5536 = vunpack.c.l.b16 %v5468
    %v5537 = vunpack.c.l.b16 %v5469
    %v5538 = vunpack.c.l.b16 %v5470
    %v5539 = vunpack.c.l.b16 %v5471
    %v5540 = vunpack.c.l.b16 %v5472
    %v5541 = vunpack.c.l.b16 %v5473
    %v5542 = vunpack.c.l.b16 %v5474
    %v5543 = vunpack.c.l.b16 %v5475
    %v5544 = vunpack.c.l.b16 %v5476
    %v5545 = vunpack.c.l.b16 %v5477
    %v5546 = vunpack.c.l.b16 %v5478
    %v5547 = vunpack.c.l.b16 %v5479
    %v5548 = vunpack.c.l.b16 %v5480
    %v5549 = vunpack.c.l.b16 %v5481
    %v5550 = vunpack.c.l.b16 %v5482
    %v5551 = vunpack.c.l.b16 %v5483
    %v5552 = vunpack.c.l.b16 %v5484
    %v5553 = vunpack.c.l.b16 %v5485
    %v5554 = vunpack.c.l.b16 %v5486
    %v5555 = vunpack.c.l.b16 %v5487
    %v5556 = vunpack.c.l.b16 %v5488
    %v5557 = vunpack.c.l.b16 %v5489
    %v5558 = vunpack.c.l.b16 %v5490
    %v5559 = vunpack.c.l.b16 %v5491
    %v5560 = vunpack.c.l.b16 %v5492
    %v5561 = vunpack.c.l.b16 %v5493
    %v5562 = vunpack.c.l.b16 %v5494
    %v5563 = vunpack.c.l.b16 %v5495
    %v5564 = vunpack.c.l.b16 %v5496
    %v5565 = vunpack.c.l.b16 %v5497
    %v5566 = vunpack.c.l.b16 %v5498
    %v5567 = vpack.c.b16 %v5536, %v5535
    %v5568 = vpack.c.b16 %v5538, %v5537
    %v5569 = vpack.c.b16 %v5540, %v5539
    %v5570 = vpack.c.b16 %v5542, %v5541
    %v5571 = vpack.c.b16 %v5544, %v5543
    %v5572 = vpack.c.b16 %v5546, %v5545
    %v5573 = vpack.c.b16 %v5548, %v5547
    %v5574 = vpack.c.b16 %v5550, %v5549
    %v5575 = vpack.c.b16 %v5552, %v5551
    %v5576 = vpack.c.b16 %v5554, %v5553
    %v5577 = vpack.c.b16 %v5556, %v5555
    %v5578 = vpack.c.b16 %v5558, %v5557
    %v5579 = vpack.c.b16 %v5560, %v5559
    %v5580 = vpack.c.b16 %v5562, %v5561
    %v5581 = vpack.c.b16 %v5564, %v5563
    %v5582 = vpack.c.b16 %v5566, %v5565
    %5599 = vmatpush.bf16.msra.mxu0 %v5574
    %5600 = vmatpush.bf16.msra.mxu0 %v5573
    %5601 = vmatpush.bf16.msra.mxu0 %v5572
    %5602 = vmatpush.bf16.msra.mxu0 %v5571
    %5603 = vmatpush.bf16.msra.mxu0 %v5570
    %5604 = vmatpush.bf16.msra.mxu0 %v5569
    %5605 = vmatpush.bf16.msra.mxu0 %v5568
    %5606 = vmatpush.bf16.msra.mxu0 %v5567
    %5607 = vmatmul.bf16.gmra.mxu0 %v5465
    %v5608 = vpop.f32.mrf.mxu0
    %v5609 = vadd.f32 %v5501, %v5608
    %v5610 = vpop.f32.mrf.mxu0
    %v5611 = vadd.f32 %v5501, %v5610
    %5612 = vdwg.mxu0
    %5613 = vmatpush.bf16.msra.mxu0 %v5582
    %5614 = vmatpush.bf16.msra.mxu0 %v5581
    %5615 = vmatpush.bf16.msra.mxu0 %v5580
    %5616 = vmatpush.bf16.msra.mxu0 %v5579
    %5617 = vmatpush.bf16.msra.mxu0 %v5578
    %5618 = vmatpush.bf16.msra.mxu0 %v5577
    %5619 = vmatpush.bf16.msra.mxu0 %v5576
    %5620 = vmatpush.bf16.msra.mxu0 %v5575
    %5621 = vmatmul.bf16.gmra.mxu0 %v5466
    %v5622 = vpop.f32.mrf.mxu0
    %v5623 = vadd.f32 %v5609, %v5622
    %v5624 = vpop.f32.mrf.mxu0
    %v5625 = vadd.f32 %v5611, %v5624
    %5626 = vdwg.mxu0
    %v5627 = vmax.f32 %v5623, 0.0
    %v5628 = vmax.f32 %v5625, 0.0
    %v5629 = vld [vmem:[%s14] sm:$0xff]
    %v5630 = vld [vmem:[%s14 + $0x8] sm:$0xff]
    %v5631 = vld [vmem:[%s14 + $0x10] sm:$0xff]
    %v5632 = vld [vmem:[%s14 + $0x18] sm:$0xff]
    %v5633 = vld [vmem:[%s14 + $0x20] sm:$0xff]
    %v5634 = vld [vmem:[%s14 + $0x28] sm:$0xff]
    %v5635 = vld [vmem:[%s14 + $0x30] sm:$0xff]
    %v5636 = vld [vmem:[%s14 + $0x38] sm:$0xff]
    %v5637 = vld [vmem:[#allocation17] sm:$0x1]
    %v5639 = vperm.slane %v5637, 0
    %vm5641 = vcmask 523264
    %v5643 = vsel %vm5641, %v5627, 0
    %v5646 = vsel %vm5641, %v5628, 0
    %5648 = vmatpush.msra.mxu0 0.0
    %5649 = vmatpush.msra.mxu0 0.0
    %5650 = vmatpush.msra.mxu0 0.0
    %5651 = vmatpush.msra.mxu0 0.0
    %5652 = vmatpush.msra.mxu0 0.0
    %5653 = vmatpush.msra.mxu0 0.0
    %5654 = vmatpush.msra.mxu0 0.0
    %5655 = vmatpush.msra.mxu0 0.0
    %5656 = vmatpush.msra.mxu0 %v5636
    %5657 = vmatpush.msra.mxu0 %v5635
    %5658 = vmatpush.msra.mxu0 %v5634
    %5659 = vmatpush.msra.mxu0 %v5633
    %5660 = vmatpush.msra.mxu0 %v5632
    %5661 = vmatpush.msra.mxu0 %v5631
    %5662 = vmatpush.msra.mxu0 %v5630
    %5663 = vmatpush.msra.mxu0 %v5629
    %5664 = vmatmul.f32.gmra.mxu0 %v5643
    %v5665 = vpop.f32.mrf.mxu0
    %v5666 = vadd.f32 %v5639, %v5665
    %5667 = vmatmul.f32.gmra.mxu0 %v5646
    %v5668 = vpop.f32.mrf.mxu0
    %v5669 = vadd.f32 %v5639, %v5668
    %5670 = vdwg.mxu0
    %v5671 = vmax.f32 %v5666, 0.0
    %v5672 = vmax.f32 %v5669, 0.0
    %v5673 = vld [vmem:[#allocation19] sm:$0x3]
    %v5674 = vld [vmem:[%s4] sm:$0xff]
    %v5675 = vld [vmem:[%s4 + $0x8] sm:$0xff]
    %v5676 = vld [vmem:[#allocation20] sm:$0xf]
    %vm5677 = vcmask 31744
    %v5679 = vsel %vm5677, %v5674, 0
    %v5682 = vsel %vm5677, %v5675, 0
    %vm5684 = vcmask 1043456
    %v5686 = vsel %vm5684, %v5676, 0
    %5688 = vmatpush.msra.mxu0 0.0
    %5689 = vmatpush.msra.mxu0 0.0
    %5690 = vmatpush.msra.mxu0 0.0
    %5691 = vmatpush.msra.mxu0 0.0
    %5692 = vmatpush.msra.mxu0 0.0
    %5693 = vmatpush.msra.mxu0 0.0
    %5694 = vmatpush.msra.mxu0 0.0
    %5695 = vmatpush.msra.mxu0 0.0
    %5696 = vmatpush.msra.mxu0 0.0
    %5697 = vmatpush.msra.mxu0 0.0
    %5698 = vmatpush.msra.mxu0 0.0
    %5699 = vmatpush.msra.mxu0 0.0
    %5700 = vmatpush.msra.mxu0 0.0
    %5701 = vmatpush.msra.mxu0 0.0
    %5702 = vmatpush.msra.mxu0 0.0
    %5703 = vmatpush.msra.mxu0 %v5686
    %5704 = vmatmul.f32.gmra.mxu0 %v5679
    %v5705 = vpop.f32.mrf.mxu0
    %v5706 = vadd.f32 0.0, %v5705
    %5707 = vmatmul.f32.gmra.mxu0 %v5682
    %v5708 = vpop.f32.mrf.mxu0
    %v5709 = vadd.f32 0.0, %v5708
    %5710 = vdwg.mxu0
    %vm5711 = vcmask 15360
    %v5713 = vsel %vm5711, %v5671, 0
    %v5716 = vsel %vm5711, %v5672, 0
    %vm5718 = vcmask 1041408
    %v5720 = vsel %vm5718, %v5673, 0
    %5722 = vmatpush.msra.mxu0 0.0
    %5723 = vmatpush.msra.mxu0 0.0
    %5724 = vmatpush.msra.mxu0 0.0
    %5725 = vmatpush.msra.mxu0 0.0
    %5726 = vmatpush.msra.mxu0 0.0
    %5727 = vmatpush.msra.mxu0 0.0
    %5728 = vmatpush.msra.mxu0 0.0
    %5729 = vmatpush.msra.mxu0 0.0
    %5730 = vmatpush.msra.mxu0 0.0
    %5731 = vmatpush.msra.mxu0 0.0
    %5732 = vmatpush.msra.mxu0 0.0
    %5733 = vmatpush.msra.mxu0 0.0
    %5734 = vmatpush.msra.mxu0 0.0
    %5735 = vmatpush.msra.mxu0 0.0
    %5736 = vmatpush.msra.mxu0 0.0
    %5737 = vmatpush.msra.mxu0 %v5720
    %5738 = vmatmul.f32.gmra.mxu0 %v5713
    %v5739 = vpop.f32.mrf.mxu0
    %v5740 = vadd.f32 %v5706, %v5739
    %5741 = vmatmul.f32.gmra.mxu0 %v5716
    %v5742 = vpop.f32.mrf.mxu0
    %v5743 = vadd.f32 %v5709, %v5742
    %5744 = vdwg.mxu0
    %v5745 = vld [vmem:[#allocation22] sm:$0x1]
    %v5747 = vperm.slane %v5745, 0
    %v5749 = vadd.f32 %v5740, %v5747
    %v5750 = vadd.f32 %v5743, %v5747
    %vm5751 = vcmask 23552
    %5752 = vst.msk [vmem:[%s19] sm:$0xff] %vm5751, %v5749
    %5753 = vst.msk [vmem:[%s19 + $0x8] sm:$0xff] %vm5751, %v5750
    // Predicated region
    $region126: #{beamsnet_v1_forward.1} parent=1 // pred_check
      _
    $region127: #{beamsnet_v1_forward.1} parent=1 // pred_check_branch
      %5755 = sbr.rel (0) target = $region129
    $region128: #{beamsnet_v1_forward.1} parent=1 // pred_region
      _
    $region129: #{beamsnet_v1_forward.1} parent=1 // pred_fallthru
      _
    // Predicated region
    $region130: #{beamsnet_v1_forward.1} parent=1 // pred_check
      _
    $region131: #{beamsnet_v1_forward.1} parent=1 // pred_check_branch
      %5757 = sbr.rel (0) target = $region133
    $region132: #{beamsnet_v1_forward.1} parent=1 // pred_region
      _
    $region133: #{beamsnet_v1_forward.1} parent=1 // pred_fallthru
      _
    %5758 = vsyncpa [#allocation4], 1
    %5759 = vsyncpa [#allocation12], 1
    %5760 = vsyncpa [#allocation15], 1
    %5761 = vsyncpa [#allocation18], 1
    %5762 = vsyncpa [#allocation21], 1
    %5763 = vsyncpa [#allocation5], 1
    %5764 = vsyncpa [#allocation6], 1
    %5765 = vsyncpa [#allocation8], 1

</llo_original>
